<compile_context>
chip_gen: v5e
topology: v5e:2x2
jax: 0.10.0
libtpu: 0.0.40
codegen_flags: <defaults>
</compile_context>

<pallas_src>
import math
import functools

import jax
import jax.numpy as jnp
from jax.experimental import pallas as pl
from jax.experimental.pallas import tpu as pltpu

ACT_DTYPE = jnp.bfloat16   # activations / weights for MXU; math in f32


# ----------------------------------------------------------------------------
# small helpers
# ----------------------------------------------------------------------------

def _round_up(n, m):
    return ((n + m - 1) // m) * m


def _seq_tile(S, max_tile=256):
    """Largest multiple of 8 that divides S and is <= max_tile (fallback: S)."""
    best = None
    t = 8
    while t <= min(S, max_tile):
        if S % t == 0:
            best = t
        t += 8
    return best if best is not None else S


# ----------------------------------------------------------------------------
# Pallas kernels
# ----------------------------------------------------------------------------

def gates_kernel(st_ref, bef_ref, aft_ref, vec_ref, dh_ref, dc_ref,
                 wx_ref, whb_ref, wha_ref, wi_ref, wd_ref, b_ref, out_ref):
    """Fused per-token gate computation on a (tS, *) row tile of one batch.

    st / bef / aft are fused [cc | ch] tiles of width 2H.  The six gates
    (f1..f4, i, o) are computed with one MXU pass per input stream against
    pre-concatenated (., 6H) bf16 weights; dh's contribution is a single
    (1,6H) row broadcast (e_dh is never materialized).
    """
    f32 = jnp.float32
    H = vec_ref.shape[-1]

    st = st_ref[0]            # (tS, 2H) bf16 : [:, :H]=cc, [:, H:]=ch
    bef = bef_ref[0]
    aft = aft_ref[0]
    vec = vec_ref[0]          # (tS, H)  bf16

    pre = (jnp.dot(st[:, H:], wx_ref[...], preferred_element_type=f32)
           + jnp.dot(bef[:, H:], whb_ref[...], preferred_element_type=f32)
           + jnp.dot(aft[:, H:], wha_ref[...], preferred_element_type=f32)
           + jnp.dot(vec, wi_ref[...], preferred_element_type=f32)
           + jnp.dot(dh_ref[0], wd_ref[...], preferred_element_type=f32)  # (1,6H)
           + b_ref[...])                                                  # (1,6H) f32
    g = jax.nn.sigmoid(pre)                                               # (tS, 6H)

    # softmax across (f1,f2,f3,f4,i): sigmoid outputs are in (0,1) so exp is
    # safe without the max shift (softmax is shift-invariant).
    e = jnp.exp(g[:, :5 * H])
    e1 = e[:, 0 * H:1 * H]
    e2 = e[:, 1 * H:2 * H]
    e3 = e[:, 2 * H:3 * H]
    e4 = e[:, 3 * H:4 * H]
    e5 = e[:, 4 * H:5 * H]
    ot = g[:, 5 * H:6 * H]
    inv = pl.reciprocal(e1 + e2 + e3 + e4 + e5, approx=True)

    ncc = ((e1 * bef[:, :H].astype(f32)
            + e2 * aft[:, :H].astype(f32)
            + e3 * vec.astype(f32)
            + e4 * dc_ref[0].astype(f32)          # (1,H) broadcast (e_dc)
            + e5 * st[:, :H].astype(f32)) * inv)
    nch = ot * jnp.tanh(ncc)

    out_ref[0] = jnp.concatenate([ncc, nch], axis=-1).astype(out_ref.dtype)


def doc_kernel(dh_ref, dc_ref, cch_ref, st_ref,
               wgdtx_ref, bgdtx_ref, wgotx_ref, bgotx_ref,
               wgoth_ref, bgoth_ref, wgftx_ref, bgftx_ref, wgfth_ref, bgfth_ref,
               ndc_ref, ndh_ref, esum_ref, ecc_ref, *, seq_len):
    """Document-level gate path, tiled over the sequence axis.

    Accumulates sum_s exp(gft) and sum_s exp(gft)*cc in f32 VMEM scratch
    (the softmax over the S+1 axis is applied at the last grid step).
    """
    f32 = jnp.float32
    H = dh_ref.shape[-1]
    B, tS = st_ref.shape[0], st_ref.shape[1]
    s = pl.program_id(0)

    @pl.when(s == 0)
    def _():
        esum_ref[...] = jnp.zeros_like(esum_ref)
        ecc_ref[...] = jnp.zeros_like(ecc_ref)

    dh = dh_ref[...]                              # (B, H) bf16
    st = st_ref[...]                              # (B, tS, 2H) bf16
    ch = st[:, :, H:]
    cc = st[:, :, :H].astype(f32)

    dhx = (jnp.dot(dh, wgftx_ref[...], preferred_element_type=f32)
           + bgftx_ref[...])                                            # (B, H)
    chh = (jnp.dot(ch.reshape(B * tS, H), wgfth_ref[...],
                   preferred_element_type=f32).reshape(B, tS, H)
           + bgfth_ref[...])                                            # (B, tS, H)
    egft = jnp.exp(jax.nn.sigmoid(dhx[:, None, :] + chh))               # (B, tS, H)

    esum_ref[...] += jnp.sum(egft, axis=1)
    ecc_ref[...] += jnp.sum(egft * cc, axis=1)

    @pl.when(s == pl.num_programs(0) - 1)
    def _():
        dc = dc_ref[...].astype(f32)
        cch = cch_ref[...]
        # NOTE: gdtx (and its bias) applied to both dh and c_ch — reproduces
        # the original module.
        gdt = jax.nn.sigmoid(
            jnp.dot(dh, wgdtx_ref[...], preferred_element_type=f32) + bgdtx_ref[...]
            + jnp.dot(cch, wgdtx_ref[...], preferred_element_type=f32) + bgdtx_ref[...])
        got = jax.nn.sigmoid(
            jnp.dot(dh, wgotx_ref[...], preferred_element_type=f32) + bgotx_ref[...]
            + jnp.dot(cch, wgoth_ref[...], preferred_element_type=f32) + bgoth_ref[...])
        egdt = jnp.exp(gdt)
        inv = pl.reciprocal(esum_ref[...] + egdt, approx=True)
        ndc_ref[...] = ((ecc_ref[...] * (1.0 / seq_len) + egdt * dc) * inv
                        ).astype(ndc_ref.dtype)
        ndh_ref[...] = (got * jnp.tanh(dc)).astype(ndh_ref.dtype)       # OLD dc (as in ref)


def ff_kernel(x_ref, w1_ref, b1_ref, w2_ref, b2_ref, o_ref):
    """Final feed-forward on a row tile: Linear(H,2H) -> tanh -> Linear(2H,H)."""
    f32 = jnp.float32
    h = jnp.tanh(jnp.dot(x_ref[...], w1_ref[...], preferred_element_type=f32)
                 + b1_ref[...])
    o_ref[...] = (jnp.dot(h.astype(w2_ref.dtype), w2_ref[...],
                          preferred_element_type=f32) + b2_ref[...]).astype(o_ref.dtype)


# ----------------------------------------------------------------------------
# Kernel wrappers
# ----------------------------------------------------------------------------

def gates_call(st, bef, aft, vec, dh, dc, gp, tS):
    B, S, H = vec.shape
    grid = (B, S // tS)
    seq2 = pl.BlockSpec((1, tS, 2 * H), lambda b, s: (b, s, 0))
    seq1 = pl.BlockSpec((1, tS, H), lambda b, s: (b, s, 0))
    bvec = pl.BlockSpec((1, 1, H), lambda b, s: (b, 0, 0))
    wspec = lambda a: pl.BlockSpec(a.shape, lambda b, s: (0,) * a.ndim)
    # NOTE: for large H, weights (5*H*6H bf16, double buffered) dominate VMEM —
    # raise vmem_limit_bytes / add a gate-axis grid if H >= ~512.
    return pl.pallas_call(
        gates_kernel,
        out_shape=jax.ShapeDtypeStruct((B, S, 2 * H), ACT_DTYPE),
        grid=grid,
        in_specs=[seq2, seq2, seq2, seq1, bvec, bvec,
                  wspec(gp['wx']), wspec(gp['whb']), wspec(gp['wha']),
                  wspec(gp['wi']), wspec(gp['wd']), wspec(gp['b'])],
        out_specs=seq2,
        compiler_params=pltpu.CompilerParams(
            dimension_semantics=("parallel", "parallel")),
    )(st, bef, aft, vec, dh[:, None, :], dc[:, None, :],
      gp['wx'], gp['whb'], gp['wha'], gp['wi'], gp['wd'], gp['b'])


def doc_call(dh, dc, cch, st, dp, tS):
    B, H = dh.shape
    S = st.shape[1]
    grid = (S // tS,)
    full = lambda a: pl.BlockSpec(a.shape, lambda s: (0,) * a.ndim)
    seq = pl.BlockSpec((B, tS, 2 * H), lambda s: (0, s, 0))
    outspec = pl.BlockSpec((B, H), lambda s: (0, 0))
    return pl.pallas_call(
        functools.partial(doc_kernel, seq_len=S),
        out_shape=(jax.ShapeDtypeStruct((B, H), ACT_DTYPE),
                   jax.ShapeDtypeStruct((B, H), ACT_DTYPE)),
        grid=grid,
        in_specs=[full(dh), full(dc), full(cch), seq,
                  full(dp['wgdtx']), full(dp['bgdtx']),
                  full(dp['wgotx']), full(dp['bgotx']),
                  full(dp['wgoth']), full(dp['bgoth']),
                  full(dp['wgftx']), full(dp['bgftx']),
                  full(dp['wgfth']), full(dp['bgfth'])],
        out_specs=(outspec, outspec),
        scratch_shapes=[pltpu.VMEM((B, H), jnp.float32),
                        pltpu.VMEM((B, H), jnp.float32)],
        compiler_params=pltpu.CompilerParams(dimension_semantics=("arbitrary",)),
    )(dh, dc, cch, st,
      dp['wgdtx'], dp['bgdtx'], dp['wgotx'], dp['bgotx'],
      dp['wgoth'], dp['bgoth'], dp['wgftx'], dp['bgftx'],
      dp['wgfth'], dp['bgfth'])


def ff_call(x, fp, max_rows=256):
    M, H = x.shape
    tM = max_rows if M >= max_rows else _round_up(M, 8)
    Mp = _round_up(M, tM)
    if Mp != M:
        x = jnp.pad(x, ((0, Mp - M), (0, 0)))
    wspec = lambda a: pl.BlockSpec(a.shape, lambda i: (0,) * a.ndim)
    y = pl.pallas_call(
        ff_kernel,
        out_shape=jax.ShapeDtypeStruct((Mp, H), jnp.float32),
        grid=(Mp // tM,),
        in_specs=[pl.BlockSpec((tM, H), lambda i: (i, 0)),
                  wspec(fp['w1']), wspec(fp['b1']),
                  wspec(fp['w2']), wspec(fp['b2'])],
        out_specs=pl.BlockSpec((tM, H), lambda i: (i, 0)),
        compiler_params=pltpu.CompilerParams(dimension_semantics=("parallel",)),
    )(x, fp['w1'], fp['b1'], fp['w2'], fp['b2'])
    return y[:M]


# ----------------------------------------------------------------------------
# Model glue (plain JAX)
# ----------------------------------------------------------------------------

def _ctx_before(v, ctx_win):
    out = jnp.zeros_like(v)
    for step in range(1, ctx_win + 1):
        out = out + jnp.pad(v[:, :-step, :], ((0, 0), (step, 0), (0, 0)))
    return out


def _ctx_after(v, ctx_win):
    out = jnp.zeros_like(v)
    for step in range(1, ctx_win + 1):
        out = out + jnp.pad(v[:, step:, :], ((0, 0), (0, step), (0, 0)))
    return out


def layer_forward(p, vec, st, dc, dh, ctx_win=2):
    B, S, H = vec.shape
    tS = _seq_tile(S)

    # document-level path (uses the OLD per-token states)
    c_ch = jnp.mean(st[..., H:].astype(jnp.float32), axis=1).astype(ACT_DTYPE)
    n_dc, n_dh = doc_call(dh, dc, c_ch, st, p['doc'], tS)

    # fused before/after context windows ([cc|ch] shifted sums)
    bef = _ctx_before(st, ctx_win)
    aft = _ctx_after(st, ctx_win)

    n_st = gates_call(st, bef, aft, vec, dh, dc, p['gates'], tS)
    return n_st, n_dc, n_dh


def sslstm_forward(params, source, ctx_win=2):
    vec = params['emb'][source]                              # (B, S, H) bf16
    H = vec.shape[-1]
    st = jnp.concatenate([vec, vec], axis=-1)                # [cc | ch]
    d0 = jnp.mean(vec.astype(jnp.float32), axis=1).astype(ACT_DTYPE)
    dc, dh = d0, d0
    for lp in params['layers']:
        st, dc, dh = layer_forward(lp, vec, st, dc, dh, ctx_win=ctx_win)
    ch = st[..., H:]
    cc = st[..., :H]
    x = jnp.concatenate([ch, cc, dh[:, None, :]], axis=1)    # (B, 2S+1, H)
    # dropout -> identity (eval)
    B, T, _ = x.shape
    y = ff_call(x.reshape(B * T, H), params['ff']).reshape(B, T, H)
    return jnp.mean(y, axis=1), None


# ----------------------------------------------------------------------------
# Deterministic parameter initialization
# ----------------------------------------------------------------------------

def _init_linear_t(key, in_dim, out_dim):
    kw, kb = jax.random.split(key)
    bound = 1.0 / math.sqrt(in_dim)
    w = jax.random.uniform(kw, (out_dim, in_dim), jnp.float32, -bound, bound)
    b = jax.random.uniform(kb, (out_dim,), jnp.float32, -bound, bound)
    return w.T, b                                   # [in, out], [out]


def init_layer_params(key, H):
    keys = iter(jax.random.split(key, 64))
    lin = lambda in_dim: _init_linear_t(next(keys), in_dim, H)
    bf = lambda w: w.astype(ACT_DTYPE)

    wgdtx, bgdtx = lin(H)
    _ = lin(H)                                      # gdth: defined but unused
    wgotx, bgotx = lin(H)
    wgoth, bgoth = lin(H)
    wgftx, bgftx = lin(H)
    wgfth, bgfth = lin(H)
    doc = dict(wgdtx=bf(wgdtx), bgdtx=bgdtx[None, :],
               wgotx=bf(wgotx), bgotx=bgotx[None, :],
               wgoth=bf(wgoth), bgoth=bgoth[None, :],
               wgftx=bf(wgftx), bgftx=bgftx[None, :],
               wgfth=bf(wgfth), bgfth=bgfth[None, :])

    wx_l, whb_l, wha_l, wi_l, wd_l, b_l = [], [], [], [], [], []
    for _gate in range(6):                          # f1, f2, f3, f4, i, o
        wx, bx = lin(H)
        wh, bh = lin(2 * H)                         # (2H, H) -> split into halves
        wi, bi = lin(H)
        wd, bd = lin(H)
        wx_l.append(wx); whb_l.append(wh[:H]); wha_l.append(wh[H:])
        wi_l.append(wi); wd_l.append(wd)
        b_l.append(bx + bh + bi + bd)
    gates = dict(wx=bf(jnp.concatenate(wx_l, axis=1)),
                 whb=bf(jnp.concatenate(whb_l, axis=1)),
                 wha=bf(jnp.concatenate(wha_l, axis=1)),
                 wi=bf(jnp.concatenate(wi_l, axis=1)),
                 wd=bf(jnp.concatenate(wd_l, axis=1)),
                 b=jnp.concatenate(b_l)[None, :])   # (1, 6H) f32
    return dict(doc=doc, gates=gates)


def init_params(key, vocab, H, nlayer):
    keys = jax.random.split(key, nlayer + 3)
    emb = (jax.random.normal(keys[0], (vocab, H), jnp.float32) * 0.1).astype(ACT_DTYPE)
    layers = [init_layer_params(keys[1 + i], H) for i in range(nlayer)]
    w1, b1 = _init_linear_t(keys[nlayer + 1], H, 2 * H)
    w2, b2 = _init_linear_t(keys[nlayer + 2], 2 * H, H)
    ff = dict(w1=w1.astype(ACT_DTYPE), b1=b1[None, :],
              w2=w2.astype(ACT_DTYPE), b2=b2[None, :])
    return dict(emb=emb, layers=layers, ff=ff)


# ----------------------------------------------------------------------------

if __name__ == "__main__":
    B, S, H = 2, 8, 32
    VOCAB, NLAYER = 16, 2

    key = jax.random.PRNGKey(0)
    k_param, k_src = jax.random.split(key)
    params = init_params(k_param, VOCAB, H, NLAYER)
    source = jax.random.randint(k_src, (B, S), 0, VOCAB)

    out, _ = jax.jit(functools.partial(sslstm_forward, ctx_win=2))(params, source)
    out = jax.block_until_ready(out)
    assert out.shape == (B, H)
    assert bool(jnp.all(jnp.isfinite(out)))
    print("KERNEL_OK")
</pallas_src>

<mosaic_0001>
module attributes {stable_mosaic.version = 11 : i64} {
  func.func @doc_kernel(%arg0: i32, %arg1: memref<2x32xbf16, #tpu.memory_space<vmem>>, %arg2: memref<2x32xbf16, #tpu.memory_space<vmem>>, %arg3: memref<2x32xbf16, #tpu.memory_space<vmem>>, %arg4: memref<2x8x64xbf16, #tpu.memory_space<vmem>>, %arg5: memref<32x32xbf16, #tpu.memory_space<vmem>>, %arg6: memref<1x32xf32, #tpu.memory_space<vmem>>, %arg7: memref<32x32xbf16, #tpu.memory_space<vmem>>, %arg8: memref<1x32xf32, #tpu.memory_space<vmem>>, %arg9: memref<32x32xbf16, #tpu.memory_space<vmem>>, %arg10: memref<1x32xf32, #tpu.memory_space<vmem>>, %arg11: memref<32x32xbf16, #tpu.memory_space<vmem>>, %arg12: memref<1x32xf32, #tpu.memory_space<vmem>>, %arg13: memref<32x32xbf16, #tpu.memory_space<vmem>>, %arg14: memref<1x32xf32, #tpu.memory_space<vmem>>, %arg15: memref<2x32xbf16, #tpu.memory_space<vmem>>, %arg16: memref<2x32xbf16, #tpu.memory_space<vmem>>, %arg17: memref<2x32xf32, #tpu.memory_space<vmem>>, %arg18: memref<2x32xf32, #tpu.memory_space<vmem>>) attributes {dimension_semantics = [#tpu.dimension_semantics<arbitrary>], iteration_bounds = array<i64: 1>, scalar_prefetch = 0 : i64, scratch_operands = 2 : i64, tpu.core_type = #tpu.core_type<tc>, window_params = [{pipeline_mode = #tpu.pipeline_mode<synchronous>, transform_indices = @transform_0, window_bounds = array<i64: 2, 32>}, {pipeline_mode = #tpu.pipeline_mode<synchronous>, transform_indices = @transform_1, window_bounds = array<i64: 2, 32>}, {pipeline_mode = #tpu.pipeline_mode<synchronous>, transform_indices = @transform_2, window_bounds = array<i64: 2, 32>}, {transform_indices = @transform_3, window_bounds = array<i64: 2, 8, 64>}, {pipeline_mode = #tpu.pipeline_mode<synchronous>, transform_indices = @transform_4, window_bounds = array<i64: 32, 32>}, {pipeline_mode = #tpu.pipeline_mode<synchronous>, transform_indices = @transform_5, window_bounds = array<i64: 1, 32>}, {pipeline_mode = #tpu.pipeline_mode<synchronous>, transform_indices = @transform_6, window_bounds = array<i64: 32, 32>}, {pipeline_mode = #tpu.pipeline_mode<synchronous>, transform_indices = @transform_7, window_bounds = array<i64: 1, 32>}, {pipeline_mode = #tpu.pipeline_mode<synchronous>, transform_indices = @transform_8, window_bounds = array<i64: 32, 32>}, {pipeline_mode = #tpu.pipeline_mode<synchronous>, transform_indices = @transform_9, window_bounds = array<i64: 1, 32>}, {pipeline_mode = #tpu.pipeline_mode<synchronous>, transform_indices = @transform_10, window_bounds = array<i64: 32, 32>}, {pipeline_mode = #tpu.pipeline_mode<synchronous>, transform_indices = @transform_11, window_bounds = array<i64: 1, 32>}, {pipeline_mode = #tpu.pipeline_mode<synchronous>, transform_indices = @transform_12, window_bounds = array<i64: 32, 32>}, {pipeline_mode = #tpu.pipeline_mode<synchronous>, transform_indices = @transform_13, window_bounds = array<i64: 1, 32>}, {pipeline_mode = #tpu.pipeline_mode<synchronous>, transform_indices = @transform_14, window_bounds = array<i64: 2, 32>}, {pipeline_mode = #tpu.pipeline_mode<synchronous>, transform_indices = @transform_15, window_bounds = array<i64: 2, 32>}]} {
    %c0_i32 = arith.constant 0 : i32
    %0 = arith.cmpi eq, %arg0, %c0_i32 : i32
    %1 = arith.extui %0 : i1 to i32
    %c0_i32_0 = arith.constant 0 : i32
    %2 = arith.cmpi ne, %1, %c0_i32_0 : i32
    scf.if %2 {
      %cst_27 = arith.constant 0.000000e+00 : f32
      %42 = vector.broadcast %cst_27 : f32 to vector<2x32xf32>
      %c0_28 = arith.constant 0 : index
      %c0_29 = arith.constant 0 : index
      %43 = vector.load %arg17[%c0_28, %c0_29] : memref<2x32xf32, #tpu.memory_space<vmem>>, vector<2x32xf32>
      tpu.vector_store %arg17[%c0_28, %c0_29], %42 {strides = array<i32>} : memref<2x32xf32, #tpu.memory_space<vmem>>, vector<2x32xf32>,
      %cst_30 = arith.constant 0.000000e+00 : f32
      %44 = vector.broadcast %cst_30 : f32 to vector<2x32xf32>
      %c0_31 = arith.constant 0 : index
      %c0_32 = arith.constant 0 : index
      %45 = vector.load %arg18[%c0_31, %c0_32] : memref<2x32xf32, #tpu.memory_space<vmem>>, vector<2x32xf32>
      tpu.vector_store %arg18[%c0_31, %c0_32], %44 {strides = array<i32>} : memref<2x32xf32, #tpu.memory_space<vmem>>, vector<2x32xf32>,
    } else {
    }
    %c0 = arith.constant 0 : index
    %c0_1 = arith.constant 0 : index
    %3 = vector.load %arg1[%c0, %c0_1] : memref<2x32xbf16, #tpu.memory_space<vmem>>, vector<2x32xbf16>
    %c0_2 = arith.constant 0 : index
    %c0_3 = arith.constant 0 : index
    %c0_4 = arith.constant 0 : index
    %4 = vector.load %arg4[%c0_2, %c0_3, %c0_4] : memref<2x8x64xbf16, #tpu.memory_space<vmem>>, vector<2x8x64xbf16>
    %5 = vector.extract_strided_slice %4 {offsets = [0, 0, 32], sizes = [2, 8, 32], strides = [1, 1, 1]} : vector<2x8x64xbf16> to vector<2x8x32xbf16>
    %6 = vector.extract_strided_slice %4 {offsets = [0, 0, 0], sizes = [2, 8, 32], strides = [1, 1, 1]} : vector<2x8x64xbf16> to vector<2x8x32xbf16>
    %7 = arith.extf %6 : vector<2x8x32xbf16> to vector<2x8x32xf32>
    %c0_5 = arith.constant 0 : index
    %c0_6 = arith.constant 0 : index
    %8 = vector.load %arg11[%c0_5, %c0_6] : memref<32x32xbf16, #tpu.memory_space<vmem>>, vector<32x32xbf16>
    %cst = arith.constant dense<0.000000e+00> : vector<2x32xf32>
    %9 = tpu.matmul %3, %8, %cst {dimension_numbers = #tpu.dot_dimension_numbers<[1], [0], [0], [1], [0, 0, 1, 1], [], []>} : vector<2x32xbf16>, vector<32x32xbf16>, vector<2x32xf32> -> vector<2x32xf32>
    %c0_7 = arith.constant 0 : index
    %c0_8 = arith.constant 0 : index
    %10 = vector.load %arg12[%c0_7, %c0_8] : memref<1x32xf32, #tpu.memory_space<vmem>>, vector<1x32xf32>
    %11 = vector.broadcast %10 : vector<1x32xf32> to vector<2x32xf32>
    %12 = arith.addf %9, %11 : vector<2x32xf32>
    %13 = vector.shape_cast %5 : vector<2x8x32xbf16> to vector<16x32xbf16>
    %c0_9 = arith.constant 0 : index
    %c0_10 = arith.constant 0 : index
    %14 = vector.load %arg13[%c0_9, %c0_10] : memref<32x32xbf16, #tpu.memory_space<vmem>>, vector<32x32xbf16>
    %cst_11 = arith.constant dense<0.000000e+00> : vector<16x32xf32>
    %15 = tpu.matmul %13, %14, %cst_11 {dimension_numbers = #tpu.dot_dimension_numbers<[1], [0], [0], [1], [0, 0, 1, 1], [], []>} : vector<16x32xbf16>, vector<32x32xbf16>, vector<16x32xf32> -> vector<16x32xf32>
    %16 = vector.shape_cast %15 : vector<16x32xf32> to vector<2x8x32xf32>
    %c0_12 = arith.constant 0 : index
    %c0_13 = arith.constant 0 : index
    %17 = vector.load %arg14[%c0_12, %c0_13] : memref<1x32xf32, #tpu.memory_space<vmem>>, vector<1x32xf32>
    %18 = vector.shape_cast %17 : vector<1x32xf32> to vector<1x1x32xf32>
    %19 = vector.broadcast %18 : vector<1x1x32xf32> to vector<2x8x32xf32>
    %20 = arith.addf %16, %19 : vector<2x8x32xf32>
    %21 = vector.shape_cast %12 : vector<2x32xf32> to vector<2x1x32xf32>
    %22 = vector.broadcast %21 : vector<2x1x32xf32> to vector<2x8x32xf32>
    %23 = arith.addf %22, %20 : vector<2x8x32xf32>
    %24 = arith.negf %23 : vector<2x8x32xf32>
    %25 = math.exp %24 : vector<2x8x32xf32>
    %cst_14 = arith.constant 1.000000e+00 : f32
    %26 = vector.broadcast %cst_14 : f32 to vector<2x8x32xf32>
    %27 = arith.addf %26, %25 : vector<2x8x32xf32>
    %28 = arith.divf %26, %27 : vector<2x8x32xf32>
    %29 = math.exp %28 : vector<2x8x32xf32>
    %c0_15 = arith.constant 0 : index
    %c0_16 = arith.constant 0 : index
    %30 = vector.load %arg17[%c0_15, %c0_16] : memref<2x32xf32, #tpu.memory_space<vmem>>, vector<2x32xf32>
    %cst_17 = arith.constant dense<0.000000e+00> : vector<2x32xf32>
    %31 = vector.multi_reduction <add>, %29, %cst_17 [1] : vector<2x8x32xf32> to vector<2x32xf32>
    %32 = arith.addf %30, %31 : vector<2x32xf32>
    %c0_18 = arith.constant 0 : index
    %c0_19 = arith.constant 0 : index
    %33 = vector.load %arg17[%c0_18, %c0_19] : memref<2x32xf32, #tpu.memory_space<vmem>>, vector<2x32xf32>
    tpu.vector_store %arg17[%c0_18, %c0_19], %32 {strides = array<i32>} : memref<2x32xf32, #tpu.memory_space<vmem>>, vector<2x32xf32>,
    %c0_20 = arith.constant 0 : index
    %c0_21 = arith.constant 0 : index
    %34 = vector.load %arg18[%c0_20, %c0_21] : memref<2x32xf32, #tpu.memory_space<vmem>>, vector<2x32xf32>
    %35 = arith.mulf %29, %7 : vector<2x8x32xf32>
    %cst_22 = arith.constant dense<0.000000e+00> : vector<2x32xf32>
    %36 = vector.multi_reduction <add>, %35, %cst_22 [1] : vector<2x8x32xf32> to vector<2x32xf32>
    %37 = arith.addf %34, %36 : vector<2x32xf32>
    %c0_23 = arith.constant 0 : index
    %c0_24 = arith.constant 0 : index
    %38 = vector.load %arg18[%c0_23, %c0_24] : memref<2x32xf32, #tpu.memory_space<vmem>>, vector<2x32xf32>
    tpu.vector_store %arg18[%c0_23, %c0_24], %37 {strides = array<i32>} : memref<2x32xf32, #tpu.memory_space<vmem>>, vector<2x32xf32>,
    %c0_i32_25 = arith.constant 0 : i32
    %39 = arith.cmpi eq, %arg0, %c0_i32_25 : i32
    %40 = arith.extui %39 : i1 to i32
    %c0_i32_26 = arith.constant 0 : i32
    %41 = arith.cmpi ne, %40, %c0_i32_26 : i32
    scf.if %41 {
      %c0_27 = arith.constant 0 : index
      %c0_28 = arith.constant 0 : index
      %42 = vector.load %arg2[%c0_27, %c0_28] : memref<2x32xbf16, #tpu.memory_space<vmem>>, vector<2x32xbf16>
      %43 = arith.extf %42 : vector<2x32xbf16> to vector<2x32xf32>
      %c0_29 = arith.constant 0 : index
      %c0_30 = arith.constant 0 : index
      %44 = vector.load %arg3[%c0_29, %c0_30] : memref<2x32xbf16, #tpu.memory_space<vmem>>, vector<2x32xbf16>
      %c0_31 = arith.constant 0 : index
      %c0_32 = arith.constant 0 : index
      %45 = vector.load %arg5[%c0_31, %c0_32] : memref<32x32xbf16, #tpu.memory_space<vmem>>, vector<32x32xbf16>
      %cst_33 = arith.constant dense<0.000000e+00> : vector<2x32xf32>
      %46 = tpu.matmul %3, %45, %cst_33 {dimension_numbers = #tpu.dot_dimension_numbers<[1], [0], [0], [1], [0, 0, 1, 1], [], []>} : vector<2x32xbf16>, vector<32x32xbf16>, vector<2x32xf32> -> vector<2x32xf32>
      %c0_34 = arith.constant 0 : index
      %c0_35 = arith.constant 0 : index
      %47 = vector.load %arg6[%c0_34, %c0_35] : memref<1x32xf32, #tpu.memory_space<vmem>>, vector<1x32xf32>
      %48 = vector.broadcast %47 : vector<1x32xf32> to vector<2x32xf32>
      %49 = arith.addf %46, %48 : vector<2x32xf32>
      %c0_36 = arith.constant 0 : index
      %c0_37 = arith.constant 0 : index
      %50 = vector.load %arg5[%c0_36, %c0_37] : memref<32x32xbf16, #tpu.memory_space<vmem>>, vector<32x32xbf16>
      %cst_38 = arith.constant dense<0.000000e+00> : vector<2x32xf32>
      %51 = tpu.matmul %44, %50, %cst_38 {dimension_numbers = #tpu.dot_dimension_numbers<[1], [0], [0], [1], [0, 0, 1, 1], [], []>} : vector<2x32xbf16>, vector<32x32xbf16>, vector<2x32xf32> -> vector<2x32xf32>
      %52 = arith.addf %49, %51 : vector<2x32xf32>
      %c0_39 = arith.constant 0 : index
      %c0_40 = arith.constant 0 : index
      %53 = vector.load %arg6[%c0_39, %c0_40] : memref<1x32xf32, #tpu.memory_space<vmem>>, vector<1x32xf32>
      %54 = vector.broadcast %53 : vector<1x32xf32> to vector<2x32xf32>
      %55 = arith.addf %52, %54 : vector<2x32xf32>
      %56 = arith.negf %55 : vector<2x32xf32>
      %57 = math.exp %56 : vector<2x32xf32>
      %cst_41 = arith.constant 1.000000e+00 : f32
      %58 = vector.broadcast %cst_41 : f32 to vector<2x32xf32>
      %59 = arith.addf %58, %57 : vector<2x32xf32>
      %60 = arith.divf %58, %59 : vector<2x32xf32>
      %c0_42 = arith.constant 0 : index
      %c0_43 = arith.constant 0 : index
      %61 = vector.load %arg7[%c0_42, %c0_43] : memref<32x32xbf16, #tpu.memory_space<vmem>>, vector<32x32xbf16>
      %cst_44 = arith.constant dense<0.000000e+00> : vector<2x32xf32>
      %62 = tpu.matmul %3, %61, %cst_44 {dimension_numbers = #tpu.dot_dimension_numbers<[1], [0], [0], [1], [0, 0, 1, 1], [], []>} : vector<2x32xbf16>, vector<32x32xbf16>, vector<2x32xf32> -> vector<2x32xf32>
      %c0_45 = arith.constant 0 : index
      %c0_46 = arith.constant 0 : index
      %63 = vector.load %arg8[%c0_45, %c0_46] : memref<1x32xf32, #tpu.memory_space<vmem>>, vector<1x32xf32>
      %64 = vector.broadcast %63 : vector<1x32xf32> to vector<2x32xf32>
      %65 = arith.addf %62, %64 : vector<2x32xf32>
      %c0_47 = arith.constant 0 : index
      %c0_48 = arith.constant 0 : index
      %66 = vector.load %arg9[%c0_47, %c0_48] : memref<32x32xbf16, #tpu.memory_space<vmem>>, vector<32x32xbf16>
      %cst_49 = arith.constant dense<0.000000e+00> : vector<2x32xf32>
      %67 = tpu.matmul %44, %66, %cst_49 {dimension_numbers = #tpu.dot_dimension_numbers<[1], [0], [0], [1], [0, 0, 1, 1], [], []>} : vector<2x32xbf16>, vector<32x32xbf16>, vector<2x32xf32> -> vector<2x32xf32>
      %68 = arith.addf %65, %67 : vector<2x32xf32>
      %c0_50 = arith.constant 0 : index
      %c0_51 = arith.constant 0 : index
      %69 = vector.load %arg10[%c0_50, %c0_51] : memref<1x32xf32, #tpu.memory_space<vmem>>, vector<1x32xf32>
      %70 = vector.broadcast %69 : vector<1x32xf32> to vector<2x32xf32>
      %71 = arith.addf %68, %70 : vector<2x32xf32>
      %72 = arith.negf %71 : vector<2x32xf32>
      %73 = math.exp %72 : vector<2x32xf32>
      %cst_52 = arith.constant 1.000000e+00 : f32
      %74 = vector.broadcast %cst_52 : f32 to vector<2x32xf32>
      %75 = arith.addf %74, %73 : vector<2x32xf32>
      %76 = arith.divf %74, %75 : vector<2x32xf32>
      %77 = math.exp %60 : vector<2x32xf32>
      %c0_53 = arith.constant 0 : index
      %c0_54 = arith.constant 0 : index
      %78 = vector.load %arg17[%c0_53, %c0_54] : memref<2x32xf32, #tpu.memory_space<vmem>>, vector<2x32xf32>
      %79 = arith.addf %78, %77 : vector<2x32xf32>
      %80 = tpu.reciprocal %79 {approx = true} : vector<2x32xf32> -> vector<2x32xf32>
      %c0_55 = arith.constant 0 : index
      %c0_56 = arith.constant 0 : index
      %81 = vector.load %arg18[%c0_55, %c0_56] : memref<2x32xf32, #tpu.memory_space<vmem>>, vector<2x32xf32>
      %cst_57 = arith.constant 1.250000e-01 : f32
      %82 = vector.broadcast %cst_57 : f32 to vector<2x32xf32>
      %83 = arith.mulf %81, %82 : vector<2x32xf32>
      %84 = arith.mulf %77, %43 : vector<2x32xf32>
      %85 = arith.addf %83, %84 : vector<2x32xf32>
      %86 = arith.mulf %85, %80 : vector<2x32xf32>
      %87 = arith.truncf %86 : vector<2x32xf32> to vector<2x32xbf16>
      %c0_58 = arith.constant 0 : index
      %c0_59 = arith.constant 0 : index
      %88 = vector.load %arg15[%c0_58, %c0_59] : memref<2x32xbf16, #tpu.memory_space<vmem>>, vector<2x32xbf16>
      tpu.vector_store %arg15[%c0_58, %c0_59], %87 {strides = array<i32>} : memref<2x32xbf16, #tpu.memory_space<vmem>>, vector<2x32xbf16>,
      %89 = math.tanh %43 : vector<2x32xf32>
      %90 = arith.mulf %76, %89 : vector<2x32xf32>
      %91 = arith.truncf %90 : vector<2x32xf32> to vector<2x32xbf16>
      %c0_60 = arith.constant 0 : index
      %c0_61 = arith.constant 0 : index
      %92 = vector.load %arg16[%c0_60, %c0_61] : memref<2x32xbf16, #tpu.memory_space<vmem>>, vector<2x32xbf16>
      tpu.vector_store %arg16[%c0_60, %c0_61], %91 {strides = array<i32>} : memref<2x32xbf16, #tpu.memory_space<vmem>>, vector<2x32xbf16>,
    } else {
    }
    return
  }
  func.func @transform_0(%arg0: i32) -> (i32, i32) {
    %c0_i32 = arith.constant 0 : i32
    %c0_i32_0 = arith.constant 0 : i32
    %c0_i32_1 = arith.constant 0 : i32
    return %c0_i32, %c0_i32_0 : i32, i32
  }
  func.func @transform_1(%arg0: i32) -> (i32, i32) {
    %c0_i32 = arith.constant 0 : i32
    %c0_i32_0 = arith.constant 0 : i32
    %c0_i32_1 = arith.constant 0 : i32
    return %c0_i32, %c0_i32_0 : i32, i32
  }
  func.func @transform_2(%arg0: i32) -> (i32, i32) {
    %c0_i32 = arith.constant 0 : i32
    %c0_i32_0 = arith.constant 0 : i32
    %c0_i32_1 = arith.constant 0 : i32
    return %c0_i32, %c0_i32_0 : i32, i32
  }
  func.func @transform_3(%arg0: i32) -> (i32, i32, i32) {
    %c0_i32 = arith.constant 0 : i32
    %c0_i32_0 = arith.constant 0 : i32
    %c0_i32_1 = arith.constant 0 : i32
    return %c0_i32, %arg0, %c0_i32_0 : i32, i32, i32
  }
  func.func @transform_4(%arg0: i32) -> (i32, i32) {
    %c0_i32 = arith.constant 0 : i32
    %c0_i32_0 = arith.constant 0 : i32
    %c0_i32_1 = arith.constant 0 : i32
    return %c0_i32, %c0_i32_0 : i32, i32
  }
  func.func @transform_5(%arg0: i32) -> (i32, i32) {
    %c0_i32 = arith.constant 0 : i32
    %c0_i32_0 = arith.constant 0 : i32
    %c0_i32_1 = arith.constant 0 : i32
    return %c0_i32, %c0_i32_0 : i32, i32
  }
  func.func @transform_6(%arg0: i32) -> (i32, i32) {
    %c0_i32 = arith.constant 0 : i32
    %c0_i32_0 = arith.constant 0 : i32
    %c0_i32_1 = arith.constant 0 : i32
    return %c0_i32, %c0_i32_0 : i32, i32
  }
  func.func @transform_7(%arg0: i32) -> (i32, i32) {
    %c0_i32 = arith.constant 0 : i32
    %c0_i32_0 = arith.constant 0 : i32
    %c0_i32_1 = arith.constant 0 : i32
    return %c0_i32, %c0_i32_0 : i32, i32
  }
  func.func @transform_8(%arg0: i32) -> (i32, i32) {
    %c0_i32 = arith.constant 0 : i32
    %c0_i32_0 = arith.constant 0 : i32
    %c0_i32_1 = arith.constant 0 : i32
    return %c0_i32, %c0_i32_0 : i32, i32
  }
  func.func @transform_9(%arg0: i32) -> (i32, i32) {
    %c0_i32 = arith.constant 0 : i32
    %c0_i32_0 = arith.constant 0 : i32
    %c0_i32_1 = arith.constant 0 : i32
    return %c0_i32, %c0_i32_0 : i32, i32
  }
  func.func @transform_10(%arg0: i32) -> (i32, i32) {
    %c0_i32 = arith.constant 0 : i32
    %c0_i32_0 = arith.constant 0 : i32
    %c0_i32_1 = arith.constant 0 : i32
    return %c0_i32, %c0_i32_0 : i32, i32
  }
  func.func @transform_11(%arg0: i32) -> (i32, i32) {
    %c0_i32 = arith.constant 0 : i32
    %c0_i32_0 = arith.constant 0 : i32
    %c0_i32_1 = arith.constant 0 : i32
    return %c0_i32, %c0_i32_0 : i32, i32
  }
  func.func @transform_12(%arg0: i32) -> (i32, i32) {
    %c0_i32 = arith.constant 0 : i32
    %c0_i32_0 = arith.constant 0 : i32
    %c0_i32_1 = arith.constant 0 : i32
    return %c0_i32, %c0_i32_0 : i32, i32
  }
  func.func @transform_13(%arg0: i32) -> (i32, i32) {
    %c0_i32 = arith.constant 0 : i32
    %c0_i32_0 = arith.constant 0 : i32
    %c0_i32_1 = arith.constant 0 : i32
    return %c0_i32, %c0_i32_0 : i32, i32
  }
  func.func @transform_14(%arg0: i32) -> (i32, i32) {
    %c0_i32 = arith.constant 0 : i32
    %c0_i32_0 = arith.constant 0 : i32
    %c0_i32_1 = arith.constant 0 : i32
    return %c0_i32, %c0_i32_0 : i32, i32
  }
  func.func @transform_15(%arg0: i32) -> (i32, i32) {
    %c0_i32 = arith.constant 0 : i32
    %c0_i32_0 = arith.constant 0 : i32
    %c0_i32_1 = arith.constant 0 : i32
    return %c0_i32, %c0_i32_0 : i32, i32
  }
}

module attributes {stable_mosaic.version = 11 : i64} {
  func.func @gates_kernel(%arg0: i32, %arg1: i32, %arg2: memref<1x8x64xbf16, #tpu.memory_space<vmem>>, %arg3: memref<1x8x64xbf16, #tpu.memory_space<vmem>>, %arg4: memref<1x8x64xbf16, #tpu.memory_space<vmem>>, %arg5: memref<1x8x32xbf16, #tpu.memory_space<vmem>>, %arg6: memref<1x1x32xbf16, #tpu.memory_space<vmem>>, %arg7: memref<1x1x32xbf16, #tpu.memory_space<vmem>>, %arg8: memref<32x192xbf16, #tpu.memory_space<vmem>>, %arg9: memref<32x192xbf16, #tpu.memory_space<vmem>>, %arg10: memref<32x192xbf16, #tpu.memory_space<vmem>>, %arg11: memref<32x192xbf16, #tpu.memory_space<vmem>>, %arg12: memref<32x192xbf16, #tpu.memory_space<vmem>>, %arg13: memref<1x192xf32, #tpu.memory_space<vmem>>, %arg14: memref<1x8x64xbf16, #tpu.memory_space<vmem>>) attributes {dimension_semantics = [#tpu.dimension_semantics<parallel>, #tpu.dimension_semantics<parallel>], iteration_bounds = array<i64: 2, 1>, scalar_prefetch = 0 : i64, scratch_operands = 0 : i64, tpu.core_type = #tpu.core_type<tc>, window_params = [{transform_indices = @transform_0, window_bounds = array<i64: 1, 8, 64>}, {transform_indices = @transform_1, window_bounds = array<i64: 1, 8, 64>}, {transform_indices = @transform_2, window_bounds = array<i64: 1, 8, 64>}, {transform_indices = @transform_3, window_bounds = array<i64: 1, 8, 32>}, {transform_indices = @transform_4, window_bounds = array<i64: 1, 1, 32>}, {transform_indices = @transform_5, window_bounds = array<i64: 1, 1, 32>}, {pipeline_mode = #tpu.pipeline_mode<synchronous>, transform_indices = @transform_6, window_bounds = array<i64: 32, 192>}, {pipeline_mode = #tpu.pipeline_mode<synchronous>, transform_indices = @transform_7, window_bounds = array<i64: 32, 192>}, {pipeline_mode = #tpu.pipeline_mode<synchronous>, transform_indices = @transform_8, window_bounds = array<i64: 32, 192>}, {pipeline_mode = #tpu.pipeline_mode<synchronous>, transform_indices = @transform_9, window_bounds = array<i64: 32, 192>}, {pipeline_mode = #tpu.pipeline_mode<synchronous>, transform_indices = @transform_10, window_bounds = array<i64: 32, 192>}, {pipeline_mode = #tpu.pipeline_mode<synchronous>, transform_indices = @transform_11, window_bounds = array<i64: 1, 192>}, {transform_indices = @transform_12, window_bounds = array<i64: 1, 8, 64>}]} {
    %c0 = arith.constant 0 : index
    %c0_0 = arith.constant 0 : index
    %c0_1 = arith.constant 0 : index
    %0 = vector.load %arg2[%c0, %c0_0, %c0_1] : memref<1x8x64xbf16, #tpu.memory_space<vmem>>, vector<1x8x64xbf16>
    %1 = vector.shape_cast %0 : vector<1x8x64xbf16> to vector<8x64xbf16>
    %c0_2 = arith.constant 0 : index
    %c0_3 = arith.constant 0 : index
    %c0_4 = arith.constant 0 : index
    %2 = vector.load %arg3[%c0_2, %c0_3, %c0_4] : memref<1x8x64xbf16, #tpu.memory_space<vmem>>, vector<1x8x64xbf16>
    %3 = vector.shape_cast %2 : vector<1x8x64xbf16> to vector<8x64xbf16>
    %c0_5 = arith.constant 0 : index
    %c0_6 = arith.constant 0 : index
    %c0_7 = arith.constant 0 : index
    %4 = vector.load %arg4[%c0_5, %c0_6, %c0_7] : memref<1x8x64xbf16, #tpu.memory_space<vmem>>, vector<1x8x64xbf16>
    %5 = vector.shape_cast %4 : vector<1x8x64xbf16> to vector<8x64xbf16>
    %c0_8 = arith.constant 0 : index
    %c0_9 = arith.constant 0 : index
    %c0_10 = arith.constant 0 : index
    %6 = vector.load %arg5[%c0_8, %c0_9, %c0_10] : memref<1x8x32xbf16, #tpu.memory_space<vmem>>, vector<1x8x32xbf16>
    %7 = vector.shape_cast %6 : vector<1x8x32xbf16> to vector<8x32xbf16>
    %8 = vector.extract_strided_slice %1 {offsets = [0, 32], sizes = [8, 32], strides = [1, 1]} : vector<8x64xbf16> to vector<8x32xbf16>
    %c0_11 = arith.constant 0 : index
    %c0_12 = arith.constant 0 : index
    %9 = vector.load %arg8[%c0_11, %c0_12] : memref<32x192xbf16, #tpu.memory_space<vmem>>, vector<32x192xbf16>
    %cst = arith.constant dense<0.000000e+00> : vector<8x192xf32>
    %10 = tpu.matmul %8, %9, %cst {dimension_numbers = #tpu.dot_dimension_numbers<[1], [0], [0], [1], [0, 0, 1, 1], [], []>} : vector<8x32xbf16>, vector<32x192xbf16>, vector<8x192xf32> -> vector<8x192xf32>
    %11 = vector.extract_strided_slice %3 {offsets = [0, 32], sizes = [8, 32], strides = [1, 1]} : vector<8x64xbf16> to vector<8x32xbf16>
    %c0_13 = arith.constant 0 : index
    %c0_14 = arith.constant 0 : index
    %12 = vector.load %arg9[%c0_13, %c0_14] : memref<32x192xbf16, #tpu.memory_space<vmem>>, vector<32x192xbf16>
    %cst_15 = arith.constant dense<0.000000e+00> : vector<8x192xf32>
    %13 = tpu.matmul %11, %12, %cst_15 {dimension_numbers = #tpu.dot_dimension_numbers<[1], [0], [0], [1], [0, 0, 1, 1], [], []>} : vector<8x32xbf16>, vector<32x192xbf16>, vector<8x192xf32> -> vector<8x192xf32>
    %14 = arith.addf %10, %13 : vector<8x192xf32>
    %15 = vector.extract_strided_slice %5 {offsets = [0, 32], sizes = [8, 32], strides = [1, 1]} : vector<8x64xbf16> to vector<8x32xbf16>
    %c0_16 = arith.constant 0 : index
    %c0_17 = arith.constant 0 : index
    %16 = vector.load %arg10[%c0_16, %c0_17] : memref<32x192xbf16, #tpu.memory_space<vmem>>, vector<32x192xbf16>
    %cst_18 = arith.constant dense<0.000000e+00> : vector<8x192xf32>
    %17 = tpu.matmul %15, %16, %cst_18 {dimension_numbers = #tpu.dot_dimension_numbers<[1], [0], [0], [1], [0, 0, 1, 1], [], []>} : vector<8x32xbf16>, vector<32x192xbf16>, vector<8x192xf32> -> vector<8x192xf32>
    %18 = arith.addf %14, %17 : vector<8x192xf32>
    %c0_19 = arith.constant 0 : index
    %c0_20 = arith.constant 0 : index
    %19 = vector.load %arg11[%c0_19, %c0_20] : memref<32x192xbf16, #tpu.memory_space<vmem>>, vector<32x192xbf16>
    %cst_21 = arith.constant dense<0.000000e+00> : vector<8x192xf32>
    %20 = tpu.matmul %7, %19, %cst_21 {dimension_numbers = #tpu.dot_dimension_numbers<[1], [0], [0], [1], [0, 0, 1, 1], [], []>} : vector<8x32xbf16>, vector<32x192xbf16>, vector<8x192xf32> -> vector<8x192xf32>
    %21 = arith.addf %18, %20 : vector<8x192xf32>
    %c0_22 = arith.constant 0 : index
    %c0_23 = arith.constant 0 : index
    %c0_24 = arith.constant 0 : index
    %22 = vector.load %arg6[%c0_22, %c0_23, %c0_24] : memref<1x1x32xbf16, #tpu.memory_space<vmem>>, vector<1x1x32xbf16>
    %23 = vector.shape_cast %22 : vector<1x1x32xbf16> to vector<1x32xbf16>
    %c0_25 = arith.constant 0 : index
    %c0_26 = arith.constant 0 : index
    %24 = vector.load %arg12[%c0_25, %c0_26] : memref<32x192xbf16, #tpu.memory_space<vmem>>, vector<32x192xbf16>
    %cst_27 = arith.constant dense<0.000000e+00> : vector<1x192xf32>
    %25 = tpu.matmul %23, %24, %cst_27 {dimension_numbers = #tpu.dot_dimension_numbers<[1], [0], [0], [1], [0, 0, 1, 1], [], []>} : vector<1x32xbf16>, vector<32x192xbf16>, vector<1x192xf32> -> vector<1x192xf32>
    %26 = vector.broadcast %25 : vector<1x192xf32> to vector<8x192xf32>
    %27 = arith.addf %21, %26 : vector<8x192xf32>
    %c0_28 = arith.constant 0 : index
    %c0_29 = arith.constant 0 : index
    %28 = vector.load %arg13[%c0_28, %c0_29] : memref<1x192xf32, #tpu.memory_space<vmem>>, vector<1x192xf32>
    %29 = vector.broadcast %28 : vector<1x192xf32> to vector<8x192xf32>
    %30 = arith.addf %27, %29 : vector<8x192xf32>
    %31 = arith.negf %30 : vector<8x192xf32>
    %32 = math.exp %31 : vector<8x192xf32>
    %cst_30 = arith.constant 1.000000e+00 : f32
    %33 = vector.broadcast %cst_30 : f32 to vector<8x192xf32>
    %34 = arith.addf %33, %32 : vector<8x192xf32>
    %35 = arith.divf %33, %34 : vector<8x192xf32>
    %36 = vector.extract_strided_slice %35 {offsets = [0, 0], sizes = [8, 160], strides = [1, 1]} : vector<8x192xf32> to vector<8x160xf32>
    %37 = math.exp %36 : vector<8x160xf32>
    %38 = vector.extract_strided_slice %37 {offsets = [0, 0], sizes = [8, 32], strides = [1, 1]} : vector<8x160xf32> to vector<8x32xf32>
    %39 = vector.extract_strided_slice %37 {offsets = [0, 32], sizes = [8, 32], strides = [1, 1]} : vector<8x160xf32> to vector<8x32xf32>
    %40 = vector.extract_strided_slice %37 {offsets = [0, 64], sizes = [8, 32], strides = [1, 1]} : vector<8x160xf32> to vector<8x32xf32>
    %41 = vector.extract_strided_slice %37 {offsets = [0, 96], sizes = [8, 32], strides = [1, 1]} : vector<8x160xf32> to vector<8x32xf32>
    %42 = vector.extract_strided_slice %37 {offsets = [0, 128], sizes = [8, 32], strides = [1, 1]} : vector<8x160xf32> to vector<8x32xf32>
    %43 = vector.extract_strided_slice %35 {offsets = [0, 160], sizes = [8, 32], strides = [1, 1]} : vector<8x192xf32> to vector<8x32xf32>
    %44 = arith.addf %38, %39 : vector<8x32xf32>
    %45 = arith.addf %44, %40 : vector<8x32xf32>
    %46 = arith.addf %45, %41 : vector<8x32xf32>
    %47 = arith.addf %46, %42 : vector<8x32xf32>
    %48 = tpu.reciprocal %47 {approx = true} : vector<8x32xf32> -> vector<8x32xf32>
    %49 = vector.extract_strided_slice %3 {offsets = [0, 0], sizes = [8, 32], strides = [1, 1]} : vector<8x64xbf16> to vector<8x32xbf16>
    %50 = arith.extf %49 : vector<8x32xbf16> to vector<8x32xf32>
    %51 = arith.mulf %38, %50 : vector<8x32xf32>
    %52 = vector.extract_strided_slice %5 {offsets = [0, 0], sizes = [8, 32], strides = [1, 1]} : vector<8x64xbf16> to vector<8x32xbf16>
    %53 = arith.extf %52 : vector<8x32xbf16> to vector<8x32xf32>
    %54 = arith.mulf %39, %53 : vector<8x32xf32>
    %55 = arith.addf %51, %54 : vector<8x32xf32>
    %56 = arith.extf %7 : vector<8x32xbf16> to vector<8x32xf32>
    %57 = arith.mulf %40, %56 : vector<8x32xf32>
    %58 = arith.addf %55, %57 : vector<8x32xf32>
    %c0_31 = arith.constant 0 : index
    %c0_32 = arith.constant 0 : index
    %c0_33 = arith.constant 0 : index
    %59 = vector.load %arg7[%c0_31, %c0_32, %c0_33] : memref<1x1x32xbf16, #tpu.memory_space<vmem>>, vector<1x1x32xbf16>
    %60 = vector.shape_cast %59 : vector<1x1x32xbf16> to vector<1x32xbf16>
    %61 = arith.extf %60 : vector<1x32xbf16> to vector<1x32xf32>
    %62 = vector.broadcast %61 : vector<1x32xf32> to vector<8x32xf32>
    %63 = arith.mulf %41, %62 : vector<8x32xf32>
    %64 = arith.addf %58, %63 : vector<8x32xf32>
    %65 = vector.extract_strided_slice %1 {offsets = [0, 0], sizes = [8, 32], strides = [1, 1]} : vector<8x64xbf16> to vector<8x32xbf16>
    %66 = arith.extf %65 : vector<8x32xbf16> to vector<8x32xf32>
    %67 = arith.mulf %42, %66 : vector<8x32xf32>
    %68 = arith.addf %64, %67 : vector<8x32xf32>
    %69 = arith.mulf %68, %48 : vector<8x32xf32>
    %70 = math.tanh %69 : vector<8x32xf32>
    %71 = arith.mulf %43, %70 : vector<8x32xf32>
    %72 = tpu.concatenate %69, %71 in 1 : vector<8x32xf32>, vector<8x32xf32> -> vector<8x64xf32>
    %73 = arith.truncf %72 : vector<8x64xf32> to vector<8x64xbf16>
    %c0_34 = arith.constant 0 : index
    %c0_35 = arith.constant 0 : index
    %c0_36 = arith.constant 0 : index
    %74 = vector.load %arg14[%c0_34, %c0_35, %c0_36] : memref<1x8x64xbf16, #tpu.memory_space<vmem>>, vector<1x8x64xbf16>
    %75 = vector.shape_cast %74 : vector<1x8x64xbf16> to vector<8x64xbf16>
    %76 = vector.shape_cast %73 : vector<8x64xbf16> to vector<1x8x64xbf16>
    tpu.vector_store %arg14[%c0_34, %c0_35, %c0_36], %76 {strides = array<i32>} : memref<1x8x64xbf16, #tpu.memory_space<vmem>>, vector<1x8x64xbf16>,
    return
  }
  func.func @transform_0(%arg0: i32, %arg1: i32) -> (i32, i32, i32) {
    %c0_i32 = arith.constant 0 : i32
    %c0_i32_0 = arith.constant 0 : i32
    return %arg0, %arg1, %c0_i32 : i32, i32, i32
  }
  func.func @transform_1(%arg0: i32, %arg1: i32) -> (i32, i32, i32) {
    %c0_i32 = arith.constant 0 : i32
    %c0_i32_0 = arith.constant 0 : i32
    return %arg0, %arg1, %c0_i32 : i32, i32, i32
  }
  func.func @transform_2(%arg0: i32, %arg1: i32) -> (i32, i32, i32) {
    %c0_i32 = arith.constant 0 : i32
    %c0_i32_0 = arith.constant 0 : i32
    return %arg0, %arg1, %c0_i32 : i32, i32, i32
  }
  func.func @transform_3(%arg0: i32, %arg1: i32) -> (i32, i32, i32) {
    %c0_i32 = arith.constant 0 : i32
    %c0_i32_0 = arith.constant 0 : i32
    return %arg0, %arg1, %c0_i32 : i32, i32, i32
  }
  func.func @transform_4(%arg0: i32, %arg1: i32) -> (i32, i32, i32) {
    %c0_i32 = arith.constant 0 : i32
    %c0_i32_0 = arith.constant 0 : i32
    %c0_i32_1 = arith.constant 0 : i32
    return %arg0, %c0_i32, %c0_i32_0 : i32, i32, i32
  }
  func.func @transform_5(%arg0: i32, %arg1: i32) -> (i32, i32, i32) {
    %c0_i32 = arith.constant 0 : i32
    %c0_i32_0 = arith.constant 0 : i32
    %c0_i32_1 = arith.constant 0 : i32
    return %arg0, %c0_i32, %c0_i32_0 : i32, i32, i32
  }
  func.func @transform_6(%arg0: i32, %arg1: i32) -> (i32, i32) {
    %c0_i32 = arith.constant 0 : i32
    %c0_i32_0 = arith.constant 0 : i32
    %c0_i32_1 = arith.constant 0 : i32
    return %c0_i32, %c0_i32_0 : i32, i32
  }
  func.func @transform_7(%arg0: i32, %arg1: i32) -> (i32, i32) {
    %c0_i32 = arith.constant 0 : i32
    %c0_i32_0 = arith.constant 0 : i32
    %c0_i32_1 = arith.constant 0 : i32
    return %c0_i32, %c0_i32_0 : i32, i32
  }
  func.func @transform_8(%arg0: i32, %arg1: i32) -> (i32, i32) {
    %c0_i32 = arith.constant 0 : i32
    %c0_i32_0 = arith.constant 0 : i32
    %c0_i32_1 = arith.constant 0 : i32
    return %c0_i32, %c0_i32_0 : i32, i32
  }
  func.func @transform_9(%arg0: i32, %arg1: i32) -> (i32, i32) {
    %c0_i32 = arith.constant 0 : i32
    %c0_i32_0 = arith.constant 0 : i32
    %c0_i32_1 = arith.constant 0 : i32
    return %c0_i32, %c0_i32_0 : i32, i32
  }
  func.func @transform_10(%arg0: i32, %arg1: i32) -> (i32, i32) {
    %c0_i32 = arith.constant 0 : i32
    %c0_i32_0 = arith.constant 0 : i32
    %c0_i32_1 = arith.constant 0 : i32
    return %c0_i32, %c0_i32_0 : i32, i32
  }
  func.func @transform_11(%arg0: i32, %arg1: i32) -> (i32, i32) {
    %c0_i32 = arith.constant 0 : i32
    %c0_i32_0 = arith.constant 0 : i32
    %c0_i32_1 = arith.constant 0 : i32
    return %c0_i32, %c0_i32_0 : i32, i32
  }
  func.func @transform_12(%arg0: i32, %arg1: i32) -> (i32, i32, i32) {
    %c0_i32 = arith.constant 0 : i32
    %c0_i32_0 = arith.constant 0 : i32
    return %arg0, %arg1, %c0_i32 : i32, i32, i32
  }
}

module attributes {stable_mosaic.version = 11 : i64} {
  func.func @doc_kernel(%arg0: i32, %arg1: memref<2x32xbf16, #tpu.memory_space<vmem>>, %arg2: memref<2x32xbf16, #tpu.memory_space<vmem>>, %arg3: memref<2x32xbf16, #tpu.memory_space<vmem>>, %arg4: memref<2x8x64xbf16, #tpu.memory_space<vmem>>, %arg5: memref<32x32xbf16, #tpu.memory_space<vmem>>, %arg6: memref<1x32xf32, #tpu.memory_space<vmem>>, %arg7: memref<32x32xbf16, #tpu.memory_space<vmem>>, %arg8: memref<1x32xf32, #tpu.memory_space<vmem>>, %arg9: memref<32x32xbf16, #tpu.memory_space<vmem>>, %arg10: memref<1x32xf32, #tpu.memory_space<vmem>>, %arg11: memref<32x32xbf16, #tpu.memory_space<vmem>>, %arg12: memref<1x32xf32, #tpu.memory_space<vmem>>, %arg13: memref<32x32xbf16, #tpu.memory_space<vmem>>, %arg14: memref<1x32xf32, #tpu.memory_space<vmem>>, %arg15: memref<2x32xbf16, #tpu.memory_space<vmem>>, %arg16: memref<2x32xbf16, #tpu.memory_space<vmem>>, %arg17: memref<2x32xf32, #tpu.memory_space<vmem>>, %arg18: memref<2x32xf32, #tpu.memory_space<vmem>>) attributes {dimension_semantics = [#tpu.dimension_semantics<arbitrary>], iteration_bounds = array<i64: 1>, scalar_prefetch = 0 : i64, scratch_operands = 2 : i64, tpu.core_type = #tpu.core_type<tc>, window_params = [{pipeline_mode = #tpu.pipeline_mode<synchronous>, transform_indices = @transform_0, window_bounds = array<i64: 2, 32>}, {pipeline_mode = #tpu.pipeline_mode<synchronous>, transform_indices = @transform_1, window_bounds = array<i64: 2, 32>}, {pipeline_mode = #tpu.pipeline_mode<synchronous>, transform_indices = @transform_2, window_bounds = array<i64: 2, 32>}, {transform_indices = @transform_3, window_bounds = array<i64: 2, 8, 64>}, {pipeline_mode = #tpu.pipeline_mode<synchronous>, transform_indices = @transform_4, window_bounds = array<i64: 32, 32>}, {pipeline_mode = #tpu.pipeline_mode<synchronous>, transform_indices = @transform_5, window_bounds = array<i64: 1, 32>}, {pipeline_mode = #tpu.pipeline_mode<synchronous>, transform_indices = @transform_6, window_bounds = array<i64: 32, 32>}, {pipeline_mode = #tpu.pipeline_mode<synchronous>, transform_indices = @transform_7, window_bounds = array<i64: 1, 32>}, {pipeline_mode = #tpu.pipeline_mode<synchronous>, transform_indices = @transform_8, window_bounds = array<i64: 32, 32>}, {pipeline_mode = #tpu.pipeline_mode<synchronous>, transform_indices = @transform_9, window_bounds = array<i64: 1, 32>}, {pipeline_mode = #tpu.pipeline_mode<synchronous>, transform_indices = @transform_10, window_bounds = array<i64: 32, 32>}, {pipeline_mode = #tpu.pipeline_mode<synchronous>, transform_indices = @transform_11, window_bounds = array<i64: 1, 32>}, {pipeline_mode = #tpu.pipeline_mode<synchronous>, transform_indices = @transform_12, window_bounds = array<i64: 32, 32>}, {pipeline_mode = #tpu.pipeline_mode<synchronous>, transform_indices = @transform_13, window_bounds = array<i64: 1, 32>}, {pipeline_mode = #tpu.pipeline_mode<synchronous>, transform_indices = @transform_14, window_bounds = array<i64: 2, 32>}, {pipeline_mode = #tpu.pipeline_mode<synchronous>, transform_indices = @transform_15, window_bounds = array<i64: 2, 32>}]} {
    %c0_i32 = arith.constant 0 : i32
    %0 = arith.cmpi eq, %arg0, %c0_i32 : i32
    %1 = arith.extui %0 : i1 to i32
    %c0_i32_0 = arith.constant 0 : i32
    %2 = arith.cmpi ne, %1, %c0_i32_0 : i32
    scf.if %2 {
      %cst_27 = arith.constant 0.000000e+00 : f32
      %42 = vector.broadcast %cst_27 : f32 to vector<2x32xf32>
      %c0_28 = arith.constant 0 : index
      %c0_29 = arith.constant 0 : index
      %43 = vector.load %arg17[%c0_28, %c0_29] : memref<2x32xf32, #tpu.memory_space<vmem>>, vector<2x32xf32>
      tpu.vector_store %arg17[%c0_28, %c0_29], %42 {strides = array<i32>} : memref<2x32xf32, #tpu.memory_space<vmem>>, vector<2x32xf32>,
      %cst_30 = arith.constant 0.000000e+00 : f32
      %44 = vector.broadcast %cst_30 : f32 to vector<2x32xf32>
      %c0_31 = arith.constant 0 : index
      %c0_32 = arith.constant 0 : index
      %45 = vector.load %arg18[%c0_31, %c0_32] : memref<2x32xf32, #tpu.memory_space<vmem>>, vector<2x32xf32>
      tpu.vector_store %arg18[%c0_31, %c0_32], %44 {strides = array<i32>} : memref<2x32xf32, #tpu.memory_space<vmem>>, vector<2x32xf32>,
    } else {
    }
    %c0 = arith.constant 0 : index
    %c0_1 = arith.constant 0 : index
    %3 = vector.load %arg1[%c0, %c0_1] : memref<2x32xbf16, #tpu.memory_space<vmem>>, vector<2x32xbf16>
    %c0_2 = arith.constant 0 : index
    %c0_3 = arith.constant 0 : index
    %c0_4 = arith.constant 0 : index
    %4 = vector.load %arg4[%c0_2, %c0_3, %c0_4] : memref<2x8x64xbf16, #tpu.memory_space<vmem>>, vector<2x8x64xbf16>
    %5 = vector.extract_strided_slice %4 {offsets = [0, 0, 32], sizes = [2, 8, 32], strides = [1, 1, 1]} : vector<2x8x64xbf16> to vector<2x8x32xbf16>
    %6 = vector.extract_strided_slice %4 {offsets = [0, 0, 0], sizes = [2, 8, 32], strides = [1, 1, 1]} : vector<2x8x64xbf16> to vector<2x8x32xbf16>
    %7 = arith.extf %6 : vector<2x8x32xbf16> to vector<2x8x32xf32>
    %c0_5 = arith.constant 0 : index
    %c0_6 = arith.constant 0 : index
    %8 = vector.load %arg11[%c0_5, %c0_6] : memref<32x32xbf16, #tpu.memory_space<vmem>>, vector<32x32xbf16>
    %cst = arith.constant dense<0.000000e+00> : vector<2x32xf32>
    %9 = tpu.matmul %3, %8, %cst {dimension_numbers = #tpu.dot_dimension_numbers<[1], [0], [0], [1], [0, 0, 1, 1], [], []>} : vector<2x32xbf16>, vector<32x32xbf16>, vector<2x32xf32> -> vector<2x32xf32>
    %c0_7 = arith.constant 0 : index
    %c0_8 = arith.constant 0 : index
    %10 = vector.load %arg12[%c0_7, %c0_8] : memref<1x32xf32, #tpu.memory_space<vmem>>, vector<1x32xf32>
    %11 = vector.broadcast %10 : vector<1x32xf32> to vector<2x32xf32>
    %12 = arith.addf %9, %11 : vector<2x32xf32>
    %13 = vector.shape_cast %5 : vector<2x8x32xbf16> to vector<16x32xbf16>
    %c0_9 = arith.constant 0 : index
    %c0_10 = arith.constant 0 : index
    %14 = vector.load %arg13[%c0_9, %c0_10] : memref<32x32xbf16, #tpu.memory_space<vmem>>, vector<32x32xbf16>
    %cst_11 = arith.constant dense<0.000000e+00> : vector<16x32xf32>
    %15 = tpu.matmul %13, %14, %cst_11 {dimension_numbers = #tpu.dot_dimension_numbers<[1], [0], [0], [1], [0, 0, 1, 1], [], []>} : vector<16x32xbf16>, vector<32x32xbf16>, vector<16x32xf32> -> vector<16x32xf32>
    %16 = vector.shape_cast %15 : vector<16x32xf32> to vector<2x8x32xf32>
    %c0_12 = arith.constant 0 : index
    %c0_13 = arith.constant 0 : index
    %17 = vector.load %arg14[%c0_12, %c0_13] : memref<1x32xf32, #tpu.memory_space<vmem>>, vector<1x32xf32>
    %18 = vector.shape_cast %17 : vector<1x32xf32> to vector<1x1x32xf32>
    %19 = vector.broadcast %18 : vector<1x1x32xf32> to vector<2x8x32xf32>
    %20 = arith.addf %16, %19 : vector<2x8x32xf32>
    %21 = vector.shape_cast %12 : vector<2x32xf32> to vector<2x1x32xf32>
    %22 = vector.broadcast %21 : vector<2x1x32xf32> to vector<2x8x32xf32>
    %23 = arith.addf %22, %20 : vector<2x8x32xf32>
    %24 = arith.negf %23 : vector<2x8x32xf32>
    %25 = math.exp %24 : vector<2x8x32xf32>
    %cst_14 = arith.constant 1.000000e+00 : f32
    %26 = vector.broadcast %cst_14 : f32 to vector<2x8x32xf32>
    %27 = arith.addf %26, %25 : vector<2x8x32xf32>
    %28 = arith.divf %26, %27 : vector<2x8x32xf32>
    %29 = math.exp %28 : vector<2x8x32xf32>
    %c0_15 = arith.constant 0 : index
    %c0_16 = arith.constant 0 : index
    %30 = vector.load %arg17[%c0_15, %c0_16] : memref<2x32xf32, #tpu.memory_space<vmem>>, vector<2x32xf32>
    %cst_17 = arith.constant dense<0.000000e+00> : vector<2x32xf32>
    %31 = vector.multi_reduction <add>, %29, %cst_17 [1] : vector<2x8x32xf32> to vector<2x32xf32>
    %32 = arith.addf %30, %31 : vector<2x32xf32>
    %c0_18 = arith.constant 0 : index
    %c0_19 = arith.constant 0 : index
    %33 = vector.load %arg17[%c0_18, %c0_19] : memref<2x32xf32, #tpu.memory_space<vmem>>, vector<2x32xf32>
    tpu.vector_store %arg17[%c0_18, %c0_19], %32 {strides = array<i32>} : memref<2x32xf32, #tpu.memory_space<vmem>>, vector<2x32xf32>,
    %c0_20 = arith.constant 0 : index
    %c0_21 = arith.constant 0 : index
    %34 = vector.load %arg18[%c0_20, %c0_21] : memref<2x32xf32, #tpu.memory_space<vmem>>, vector<2x32xf32>
    %35 = arith.mulf %29, %7 : vector<2x8x32xf32>
    %cst_22 = arith.constant dense<0.000000e+00> : vector<2x32xf32>
    %36 = vector.multi_reduction <add>, %35, %cst_22 [1] : vector<2x8x32xf32> to vector<2x32xf32>
    %37 = arith.addf %34, %36 : vector<2x32xf32>
    %c0_23 = arith.constant 0 : index
    %c0_24 = arith.constant 0 : index
    %38 = vector.load %arg18[%c0_23, %c0_24] : memref<2x32xf32, #tpu.memory_space<vmem>>, vector<2x32xf32>
    tpu.vector_store %arg18[%c0_23, %c0_24], %37 {strides = array<i32>} : memref<2x32xf32, #tpu.memory_space<vmem>>, vector<2x32xf32>,
    %c0_i32_25 = arith.constant 0 : i32
    %39 = arith.cmpi eq, %arg0, %c0_i32_25 : i32
    %40 = arith.extui %39 : i1 to i32
    %c0_i32_26 = arith.constant 0 : i32
    %41 = arith.cmpi ne, %40, %c0_i32_26 : i32
    scf.if %41 {
      %c0_27 = arith.constant 0 : index
      %c0_28 = arith.constant 0 : index
      %42 = vector.load %arg2[%c0_27, %c0_28] : memref<2x32xbf16, #tpu.memory_space<vmem>>, vector<2x32xbf16>
      %43 = arith.extf %42 : vector<2x32xbf16> to vector<2x32xf32>
      %c0_29 = arith.constant 0 : index
      %c0_30 = arith.constant 0 : index
      %44 = vector.load %arg3[%c0_29, %c0_30] : memref<2x32xbf16, #tpu.memory_space<vmem>>, vector<2x32xbf16>
      %c0_31 = arith.constant 0 : index
      %c0_32 = arith.constant 0 : index
      %45 = vector.load %arg5[%c0_31, %c0_32] : memref<32x32xbf16, #tpu.memory_space<vmem>>, vector<32x32xbf16>
      %cst_33 = arith.constant dense<0.000000e+00> : vector<2x32xf32>
      %46 = tpu.matmul %3, %45, %cst_33 {dimension_numbers = #tpu.dot_dimension_numbers<[1], [0], [0], [1], [0, 0, 1, 1], [], []>} : vector<2x32xbf16>, vector<32x32xbf16>, vector<2x32xf32> -> vector<2x32xf32>
      %c0_34 = arith.constant 0 : index
      %c0_35 = arith.constant 0 : index
      %47 = vector.load %arg6[%c0_34, %c0_35] : memref<1x32xf32, #tpu.memory_space<vmem>>, vector<1x32xf32>
      %48 = vector.broadcast %47 : vector<1x32xf32> to vector<2x32xf32>
      %49 = arith.addf %46, %48 : vector<2x32xf32>
      %c0_36 = arith.constant 0 : index
      %c0_37 = arith.constant 0 : index
      %50 = vector.load %arg5[%c0_36, %c0_37] : memref<32x32xbf16, #tpu.memory_space<vmem>>, vector<32x32xbf16>
      %cst_38 = arith.constant dense<0.000000e+00> : vector<2x32xf32>
      %51 = tpu.matmul %44, %50, %cst_38 {dimension_numbers = #tpu.dot_dimension_numbers<[1], [0], [0], [1], [0, 0, 1, 1], [], []>} : vector<2x32xbf16>, vector<32x32xbf16>, vector<2x32xf32> -> vector<2x32xf32>
      %52 = arith.addf %49, %51 : vector<2x32xf32>
      %c0_39 = arith.constant 0 : index
      %c0_40 = arith.constant 0 : index
      %53 = vector.load %arg6[%c0_39, %c0_40] : memref<1x32xf32, #tpu.memory_space<vmem>>, vector<1x32xf32>
      %54 = vector.broadcast %53 : vector<1x32xf32> to vector<2x32xf32>
      %55 = arith.addf %52, %54 : vector<2x32xf32>
      %56 = arith.negf %55 : vector<2x32xf32>
      %57 = math.exp %56 : vector<2x32xf32>
      %cst_41 = arith.constant 1.000000e+00 : f32
      %58 = vector.broadcast %cst_41 : f32 to vector<2x32xf32>
      %59 = arith.addf %58, %57 : vector<2x32xf32>
      %60 = arith.divf %58, %59 : vector<2x32xf32>
      %c0_42 = arith.constant 0 : index
      %c0_43 = arith.constant 0 : index
      %61 = vector.load %arg7[%c0_42, %c0_43] : memref<32x32xbf16, #tpu.memory_space<vmem>>, vector<32x32xbf16>
      %cst_44 = arith.constant dense<0.000000e+00> : vector<2x32xf32>
      %62 = tpu.matmul %3, %61, %cst_44 {dimension_numbers = #tpu.dot_dimension_numbers<[1], [0], [0], [1], [0, 0, 1, 1], [], []>} : vector<2x32xbf16>, vector<32x32xbf16>, vector<2x32xf32> -> vector<2x32xf32>
      %c0_45 = arith.constant 0 : index
      %c0_46 = arith.constant 0 : index
      %63 = vector.load %arg8[%c0_45, %c0_46] : memref<1x32xf32, #tpu.memory_space<vmem>>, vector<1x32xf32>
      %64 = vector.broadcast %63 : vector<1x32xf32> to vector<2x32xf32>
      %65 = arith.addf %62, %64 : vector<2x32xf32>
      %c0_47 = arith.constant 0 : index
      %c0_48 = arith.constant 0 : index
      %66 = vector.load %arg9[%c0_47, %c0_48] : memref<32x32xbf16, #tpu.memory_space<vmem>>, vector<32x32xbf16>
      %cst_49 = arith.constant dense<0.000000e+00> : vector<2x32xf32>
      %67 = tpu.matmul %44, %66, %cst_49 {dimension_numbers = #tpu.dot_dimension_numbers<[1], [0], [0], [1], [0, 0, 1, 1], [], []>} : vector<2x32xbf16>, vector<32x32xbf16>, vector<2x32xf32> -> vector<2x32xf32>
      %68 = arith.addf %65, %67 : vector<2x32xf32>
      %c0_50 = arith.constant 0 : index
      %c0_51 = arith.constant 0 : index
      %69 = vector.load %arg10[%c0_50, %c0_51] : memref<1x32xf32, #tpu.memory_space<vmem>>, vector<1x32xf32>
      %70 = vector.broadcast %69 : vector<1x32xf32> to vector<2x32xf32>
      %71 = arith.addf %68, %70 : vector<2x32xf32>
      %72 = arith.negf %71 : vector<2x32xf32>
      %73 = math.exp %72 : vector<2x32xf32>
      %cst_52 = arith.constant 1.000000e+00 : f32
      %74 = vector.broadcast %cst_52 : f32 to vector<2x32xf32>
      %75 = arith.addf %74, %73 : vector<2x32xf32>
      %76 = arith.divf %74, %75 : vector<2x32xf32>
      %77 = math.exp %60 : vector<2x32xf32>
      %c0_53 = arith.constant 0 : index
      %c0_54 = arith.constant 0 : index
      %78 = vector.load %arg17[%c0_53, %c0_54] : memref<2x32xf32, #tpu.memory_space<vmem>>, vector<2x32xf32>
      %79 = arith.addf %78, %77 : vector<2x32xf32>
      %80 = tpu.reciprocal %79 {approx = true} : vector<2x32xf32> -> vector<2x32xf32>
      %c0_55 = arith.constant 0 : index
      %c0_56 = arith.constant 0 : index
      %81 = vector.load %arg18[%c0_55, %c0_56] : memref<2x32xf32, #tpu.memory_space<vmem>>, vector<2x32xf32>
      %cst_57 = arith.constant 1.250000e-01 : f32
      %82 = vector.broadcast %cst_57 : f32 to vector<2x32xf32>
      %83 = arith.mulf %81, %82 : vector<2x32xf32>
      %84 = arith.mulf %77, %43 : vector<2x32xf32>
      %85 = arith.addf %83, %84 : vector<2x32xf32>
      %86 = arith.mulf %85, %80 : vector<2x32xf32>
      %87 = arith.truncf %86 : vector<2x32xf32> to vector<2x32xbf16>
      %c0_58 = arith.constant 0 : index
      %c0_59 = arith.constant 0 : index
      %88 = vector.load %arg15[%c0_58, %c0_59] : memref<2x32xbf16, #tpu.memory_space<vmem>>, vector<2x32xbf16>
      tpu.vector_store %arg15[%c0_58, %c0_59], %87 {strides = array<i32>} : memref<2x32xbf16, #tpu.memory_space<vmem>>, vector<2x32xbf16>,
      %89 = math.tanh %43 : vector<2x32xf32>
      %90 = arith.mulf %76, %89 : vector<2x32xf32>
      %91 = arith.truncf %90 : vector<2x32xf32> to vector<2x32xbf16>
      %c0_60 = arith.constant 0 : index
      %c0_61 = arith.constant 0 : index
      %92 = vector.load %arg16[%c0_60, %c0_61] : memref<2x32xbf16, #tpu.memory_space<vmem>>, vector<2x32xbf16>
      tpu.vector_store %arg16[%c0_60, %c0_61], %91 {strides = array<i32>} : memref<2x32xbf16, #tpu.memory_space<vmem>>, vector<2x32xbf16>,
    } else {
    }
    return
  }
  func.func @transform_0(%arg0: i32) -> (i32, i32) {
    %c0_i32 = arith.constant 0 : i32
    %c0_i32_0 = arith.constant 0 : i32
    %c0_i32_1 = arith.constant 0 : i32
    return %c0_i32, %c0_i32_0 : i32, i32
  }
  func.func @transform_1(%arg0: i32) -> (i32, i32) {
    %c0_i32 = arith.constant 0 : i32
    %c0_i32_0 = arith.constant 0 : i32
    %c0_i32_1 = arith.constant 0 : i32
    return %c0_i32, %c0_i32_0 : i32, i32
  }
  func.func @transform_2(%arg0: i32) -> (i32, i32) {
    %c0_i32 = arith.constant 0 : i32
    %c0_i32_0 = arith.constant 0 : i32
    %c0_i32_1 = arith.constant 0 : i32
    return %c0_i32, %c0_i32_0 : i32, i32
  }
  func.func @transform_3(%arg0: i32) -> (i32, i32, i32) {
    %c0_i32 = arith.constant 0 : i32
    %c0_i32_0 = arith.constant 0 : i32
    %c0_i32_1 = arith.constant 0 : i32
    return %c0_i32, %arg0, %c0_i32_0 : i32, i32, i32
  }
  func.func @transform_4(%arg0: i32) -> (i32, i32) {
    %c0_i32 = arith.constant 0 : i32
    %c0_i32_0 = arith.constant 0 : i32
    %c0_i32_1 = arith.constant 0 : i32
    return %c0_i32, %c0_i32_0 : i32, i32
  }
  func.func @transform_5(%arg0: i32) -> (i32, i32) {
    %c0_i32 = arith.constant 0 : i32
    %c0_i32_0 = arith.constant 0 : i32
    %c0_i32_1 = arith.constant 0 : i32
    return %c0_i32, %c0_i32_0 : i32, i32
  }
  func.func @transform_6(%arg0: i32) -> (i32, i32) {
    %c0_i32 = arith.constant 0 : i32
    %c0_i32_0 = arith.constant 0 : i32
    %c0_i32_1 = arith.constant 0 : i32
    return %c0_i32, %c0_i32_0 : i32, i32
  }
  func.func @transform_7(%arg0: i32) -> (i32, i32) {
    %c0_i32 = arith.constant 0 : i32
    %c0_i32_0 = arith.constant 0 : i32
    %c0_i32_1 = arith.constant 0 : i32
    return %c0_i32, %c0_i32_0 : i32, i32
  }
  func.func @transform_8(%arg0: i32) -> (i32, i32) {
    %c0_i32 = arith.constant 0 : i32
    %c0_i32_0 = arith.constant 0 : i32
    %c0_i32_1 = arith.constant 0 : i32
    return %c0_i32, %c0_i32_0 : i32, i32
  }
  func.func @transform_9(%arg0: i32) -> (i32, i32) {
    %c0_i32 = arith.constant 0 : i32
    %c0_i32_0 = arith.constant 0 : i32
    %c0_i32_1 = arith.constant 0 : i32
    return %c0_i32, %c0_i32_0 : i32, i32
  }
  func.func @transform_10(%arg0: i32) -> (i32, i32) {
    %c0_i32 = arith.constant 0 : i32
    %c0_i32_0 = arith.constant 0 : i32
    %c0_i32_1 = arith.constant 0 : i32
    return %c0_i32, %c0_i32_0 : i32, i32
  }
  func.func @transform_11(%arg0: i32) -> (i32, i32) {
    %c0_i32 = arith.constant 0 : i32
    %c0_i32_0 = arith.constant 0 : i32
    %c0_i32_1 = arith.constant 0 : i32
    return %c0_i32, %c0_i32_0 : i32, i32
  }
  func.func @transform_12(%arg0: i32) -> (i32, i32) {
    %c0_i32 = arith.constant 0 : i32
    %c0_i32_0 = arith.constant 0 : i32
    %c0_i32_1 = arith.constant 0 : i32
    return %c0_i32, %c0_i32_0 : i32, i32
  }
  func.func @transform_13(%arg0: i32) -> (i32, i32) {
    %c0_i32 = arith.constant 0 : i32
    %c0_i32_0 = arith.constant 0 : i32
    %c0_i32_1 = arith.constant 0 : i32
    return %c0_i32, %c0_i32_0 : i32, i32
  }
  func.func @transform_14(%arg0: i32) -> (i32, i32) {
    %c0_i32 = arith.constant 0 : i32
    %c0_i32_0 = arith.constant 0 : i32
    %c0_i32_1 = arith.constant 0 : i32
    return %c0_i32, %c0_i32_0 : i32, i32
  }
  func.func @transform_15(%arg0: i32) -> (i32, i32) {
    %c0_i32 = arith.constant 0 : i32
    %c0_i32_0 = arith.constant 0 : i32
    %c0_i32_1 = arith.constant 0 : i32
    return %c0_i32, %c0_i32_0 : i32, i32
  }
}

module attributes {stable_mosaic.version = 11 : i64} {
  func.func @ff_kernel(%arg0: i32, %arg1: memref<40x32xbf16, #tpu.memory_space<vmem>>, %arg2: memref<32x64xbf16, #tpu.memory_space<vmem>>, %arg3: memref<1x64xf32, #tpu.memory_space<vmem>>, %arg4: memref<64x32xbf16, #tpu.memory_space<vmem>>, %arg5: memref<1x32xf32, #tpu.memory_space<vmem>>, %arg6: memref<40x32xf32, #tpu.memory_space<vmem>>) attributes {dimension_semantics = [#tpu.dimension_semantics<parallel>], iteration_bounds = array<i64: 1>, scalar_prefetch = 0 : i64, scratch_operands = 0 : i64, tpu.core_type = #tpu.core_type<tc>, window_params = [{transform_indices = @transform_0, window_bounds = array<i64: 40, 32>}, {pipeline_mode = #tpu.pipeline_mode<synchronous>, transform_indices = @transform_1, window_bounds = array<i64: 32, 64>}, {pipeline_mode = #tpu.pipeline_mode<synchronous>, transform_indices = @transform_2, window_bounds = array<i64: 1, 64>}, {pipeline_mode = #tpu.pipeline_mode<synchronous>, transform_indices = @transform_3, window_bounds = array<i64: 64, 32>}, {pipeline_mode = #tpu.pipeline_mode<synchronous>, transform_indices = @transform_4, window_bounds = array<i64: 1, 32>}, {transform_indices = @transform_5, window_bounds = array<i64: 40, 32>}]} {
    %c0 = arith.constant 0 : index
    %c0_0 = arith.constant 0 : index
    %0 = vector.load %arg1[%c0, %c0_0] : memref<40x32xbf16, #tpu.memory_space<vmem>>, vector<40x32xbf16>
    %c0_1 = arith.constant 0 : index
    %c0_2 = arith.constant 0 : index
    %1 = vector.load %arg2[%c0_1, %c0_2] : memref<32x64xbf16, #tpu.memory_space<vmem>>, vector<32x64xbf16>
    %cst = arith.constant dense<0.000000e+00> : vector<40x64xf32>
    %2 = tpu.matmul %0, %1, %cst {dimension_numbers = #tpu.dot_dimension_numbers<[1], [0], [0], [1], [0, 0, 1, 1], [], []>} : vector<40x32xbf16>, vector<32x64xbf16>, vector<40x64xf32> -> vector<40x64xf32>
    %c0_3 = arith.constant 0 : index
    %c0_4 = arith.constant 0 : index
    %3 = vector.load %arg3[%c0_3, %c0_4] : memref<1x64xf32, #tpu.memory_space<vmem>>, vector<1x64xf32>
    %4 = vector.broadcast %3 : vector<1x64xf32> to vector<40x64xf32>
    %5 = arith.addf %2, %4 : vector<40x64xf32>
    %6 = math.tanh %5 : vector<40x64xf32>
    %7 = arith.truncf %6 : vector<40x64xf32> to vector<40x64xbf16>
    %c0_5 = arith.constant 0 : index
    %c0_6 = arith.constant 0 : index
    %8 = vector.load %arg4[%c0_5, %c0_6] : memref<64x32xbf16, #tpu.memory_space<vmem>>, vector<64x32xbf16>
    %cst_7 = arith.constant dense<0.000000e+00> : vector<40x32xf32>
    %9 = tpu.matmul %7, %8, %cst_7 {dimension_numbers = #tpu.dot_dimension_numbers<[1], [0], [0], [1], [0, 0, 1, 1], [], []>} : vector<40x64xbf16>, vector<64x32xbf16>, vector<40x32xf32> -> vector<40x32xf32>
    %c0_8 = arith.constant 0 : index
    %c0_9 = arith.constant 0 : index
    %10 = vector.load %arg5[%c0_8, %c0_9] : memref<1x32xf32, #tpu.memory_space<vmem>>, vector<1x32xf32>
    %11 = vector.broadcast %10 : vector<1x32xf32> to vector<40x32xf32>
    %12 = arith.addf %9, %11 : vector<40x32xf32>
    %c0_10 = arith.constant 0 : index
    %c0_11 = arith.constant 0 : index
    %13 = vector.load %arg6[%c0_10, %c0_11] : memref<40x32xf32, #tpu.memory_space<vmem>>, vector<40x32xf32>
    tpu.vector_store %arg6[%c0_10, %c0_11], %12 {strides = array<i32>} : memref<40x32xf32, #tpu.memory_space<vmem>>, vector<40x32xf32>,
    return
  }
  func.func @transform_0(%arg0: i32) -> (i32, i32) {
    %c0_i32 = arith.constant 0 : i32
    %c0_i32_0 = arith.constant 0 : i32
    return %arg0, %c0_i32 : i32, i32
  }
  func.func @transform_1(%arg0: i32) -> (i32, i32) {
    %c0_i32 = arith.constant 0 : i32
    %c0_i32_0 = arith.constant 0 : i32
    %c0_i32_1 = arith.constant 0 : i32
    return %c0_i32, %c0_i32_0 : i32, i32
  }
  func.func @transform_2(%arg0: i32) -> (i32, i32) {
    %c0_i32 = arith.constant 0 : i32
    %c0_i32_0 = arith.constant 0 : i32
    %c0_i32_1 = arith.constant 0 : i32
    return %c0_i32, %c0_i32_0 : i32, i32
  }
  func.func @transform_3(%arg0: i32) -> (i32, i32) {
    %c0_i32 = arith.constant 0 : i32
    %c0_i32_0 = arith.constant 0 : i32
    %c0_i32_1 = arith.constant 0 : i32
    return %c0_i32, %c0_i32_0 : i32, i32
  }
  func.func @transform_4(%arg0: i32) -> (i32, i32) {
    %c0_i32 = arith.constant 0 : i32
    %c0_i32_0 = arith.constant 0 : i32
    %c0_i32_1 = arith.constant 0 : i32
    return %c0_i32, %c0_i32_0 : i32, i32
  }
  func.func @transform_5(%arg0: i32) -> (i32, i32) {
    %c0_i32 = arith.constant 0 : i32
    %c0_i32_0 = arith.constant 0 : i32
    return %arg0, %c0_i32 : i32, i32
  }
}

</mosaic_0001>

<llo_original>
// kernel: sslstm_forward.5
$region0: #{sslstm_forward.5}
  #allocation0 [shape = 'u32[]', space=smem, size = 0x4, offset = 0x4, fixed_abs, tag = 'smem constant byte address 0x4 - core index']
  #allocation1 [shape = 'u32[72,128]{1,0:T(1,128)}', space=vmem, size = 0x9000, scoped, tag = 'internal scratch']
  #allocation2 [shape = 'f32[2,32]{1,0:T(2,128)}', space=vmem, size = 0x400, scoped, tag = 'scratch operand']
  #allocation3 [shape = 'f32[2,32]{1,0:T(2,128)}', space=vmem, size = 0x400, scoped, tag = 'scratch operand']
  %s0 = inlined_call_operand.vmem [shape: bf16[2,32], index: 0, kind: input, shape index: {}, may-alias: {0,1,2}]
  %s1 = inlined_call_operand.vmem [shape: bf16[2,32], index: 1, kind: input, shape index: {}, may-alias: {0,1,2}]
  %s2 = inlined_call_operand.vmem [shape: bf16[2,32], index: 2, kind: input, shape index: {}, may-alias: {0,1,2}]
  %s3 = inlined_call_operand.vmem [shape: bf16[2,8,64], index: 3, kind: input, shape index: {}]
  %s4 = inlined_call_operand.vmem [shape: bf16[32,32], index: 4, kind: input, shape index: {}]
  %s5 = inlined_call_operand.vmem [shape: f32[1,32], index: 5, kind: input, shape index: {}]
  %s6 = inlined_call_operand.vmem [shape: bf16[32,32], index: 6, kind: input, shape index: {}]
  %s7 = inlined_call_operand.vmem [shape: f32[1,32], index: 7, kind: input, shape index: {}]
  %s8 = inlined_call_operand.hbm [shape: bf16[32,32], index: 8, kind: input, shape index: {}]
  %s9 = inlined_call_operand.vmem [shape: f32[1,32], index: 9, kind: input, shape index: {}]
  %s10 = inlined_call_operand.hbm [shape: bf16[32,32], index: 10, kind: input, shape index: {}]
  %s11 = inlined_call_operand.vmem [shape: f32[1,32], index: 11, kind: input, shape index: {}]
  %s12 = inlined_call_operand.hbm [shape: bf16[32,32], index: 12, kind: input, shape index: {}]
  %s13 = inlined_call_operand.vmem [shape: f32[1,32], index: 13, kind: input, shape index: {}]
  %s14 = inlined_call_operand.vmem [shape: bf16[2,32], index: 14, kind: output, shape index: {0}]
  %s15 = inlined_call_operand.vmem [shape: bf16[2,32], index: 15, kind: output, shape index: {1}]
  %16 = xla_tuple %s14, %s15
  %s17 = sld [smem:[#allocation0]]
  $region94: #{sslstm_forward.5} parent=0
    _
  %s19 = ssub.s32 1, %s17
  %s20 = scalar_select 0, %s19, %s17
  $region1: #{sslstm_forward.5} parent=0
    #allocation4 [shape = 'u8[8192]{0}', space=vmem, size = 0x2000, scoped, tag = 'input window, operand 8, single buffered']
    #allocation5 [shape = 's32[1]{0}', space=sflag, size = 0x4, scoped, tag = 'scoped memory for sslstm_forward.5']
    #allocation6 [shape = 'u8[8192]{0}', space=vmem, size = 0x2000, scoped, tag = 'input window, operand 10, single buffered']
    #allocation7 [shape = 's32[1]{0}', space=sflag, size = 0x4, scoped, tag = 'scoped memory for sslstm_forward.5']
    #allocation8 [shape = 'u8[8192]{0}', space=vmem, size = 0x2000, scoped, tag = 'input window, operand 12, single buffered']
    %21 = vsyncpa [#allocation5], 0
    %22 = vsyncpa [#allocation7], 0
    // Predicated region
    $region2: #{sslstm_forward.5} parent=1 // pred_check
      _
    $region3: #{sslstm_forward.5} parent=1 // pred_check_branch
      %24 = sbr.rel (0) target = $region5
    $region4: #{sslstm_forward.5} parent=1 // pred_region
      _
    $region5: #{sslstm_forward.5} parent=1 // pred_fallthru
      _
    // Predicated region
    $region6: #{sslstm_forward.5} parent=1 // pred_check
      _
    $region7: #{sslstm_forward.5} parent=1 // pred_check_branch
      %26 = sbr.rel (0) target = $region9
    $region8: #{sslstm_forward.5} parent=1 // pred_region
      _
    $region9: #{sslstm_forward.5} parent=1 // pred_fallthru
      _
    // Predicated region
    $region10: #{sslstm_forward.5} parent=1 // pred_check
      _
    $region11: #{sslstm_forward.5} parent=1 // pred_check_branch
      %28 = sbr.rel (0) target = $region13
    $region12: #{sslstm_forward.5} parent=1 // pred_region
      _
    $region13: #{sslstm_forward.5} parent=1 // pred_fallthru
      _
    // Predicated region
    $region14: #{sslstm_forward.5} parent=1 // pred_check
      _
    $region15: #{sslstm_forward.5} parent=1 // pred_check_branch
      %30 = sbr.rel (0) target = $region17
    $region16: #{sslstm_forward.5} parent=1 // pred_region
      _
    $region17: #{sslstm_forward.5} parent=1 // pred_fallthru
      _
    // Predicated region
    $region18: #{sslstm_forward.5} parent=1 // pred_check
      _
    $region19: #{sslstm_forward.5} parent=1 // pred_check_branch
      %32 = sbr.rel (0) target = $region21
    $region20: #{sslstm_forward.5} parent=1 // pred_region
      _
    $region21: #{sslstm_forward.5} parent=1 // pred_fallthru
      _
    // Predicated region
    $region22: #{sslstm_forward.5} parent=1 // pred_check
      _
    $region23: #{sslstm_forward.5} parent=1 // pred_check_branch
      %34 = sbr.rel (0) target = $region25
    $region24: #{sslstm_forward.5} parent=1 // pred_region
      _
    $region25: #{sslstm_forward.5} parent=1 // pred_fallthru
      _
    // Predicated region
    $region26: #{sslstm_forward.5} parent=1 // pred_check
      _
    $region27: #{sslstm_forward.5} parent=1 // pred_check_branch
      %36 = sbr.rel (0) target = $region29
    $region28: #{sslstm_forward.5} parent=1 // pred_region
      _
    $region29: #{sslstm_forward.5} parent=1 // pred_fallthru
      _
    // Predicated region
    $region30: #{sslstm_forward.5} parent=1 // pred_check
      _
    $region31: #{sslstm_forward.5} parent=1 // pred_check_branch
      %38 = sbr.rel (0) target = $region33
    $region32: #{sslstm_forward.5} parent=1 // pred_region
      _
    $region33: #{sslstm_forward.5} parent=1 // pred_fallthru
      _
    // Predicated region
    $region34: #{sslstm_forward.5} parent=1 // pred_check
      _
    $region35: #{sslstm_forward.5} parent=1 // pred_check_branch
      %40 = sbr.rel (0) target = $region37
    $region36: #{sslstm_forward.5} parent=1 // pred_region
      %42 = vsyncadd [#allocation5], 0
      %s43 = sshll.u32 %s8, 4
      %s44 = int_to_ptr.hbm [resolvable:$true] %s43
      %s45 = sshll.u32 [#allocation4], 4
      %s46 = int_to_ptr.vmem [resolvable:$true] %s45
      %51 = dma.hbm_to_vmem [thread:$0]  %s44, 256, %s46, [#allocation5], 64, 64, 4
    $region37: #{sslstm_forward.5} parent=1 // pred_fallthru
      _
    // Predicated region
    $region38: #{sslstm_forward.5} parent=1 // pred_check
      _
    $region39: #{sslstm_forward.5} parent=1 // pred_check_branch
      %53 = sbr.rel (0) target = $region41
    $region40: #{sslstm_forward.5} parent=1 // pred_region
      _
    $region41: #{sslstm_forward.5} parent=1 // pred_fallthru
      _
    // Predicated region
    $region42: #{sslstm_forward.5} parent=1 // pred_check
      _
    $region43: #{sslstm_forward.5} parent=1 // pred_check_branch
      %55 = sbr.rel (0) target = $region45
    $region44: #{sslstm_forward.5} parent=1 // pred_region
      %57 = vsyncadd [#allocation7], 0
      %s58 = sshll.u32 %s10, 4
      %s59 = int_to_ptr.hbm [resolvable:$true] %s58
      %s60 = sshll.u32 [#allocation6], 4
      %s61 = int_to_ptr.vmem [resolvable:$true] %s60
      %66 = dma.hbm_to_vmem [thread:$0]  %s59, 256, %s61, [#allocation7], 64, 64, 4
    $region45: #{sslstm_forward.5} parent=1 // pred_fallthru
      _
    // Predicated region
    $region46: #{sslstm_forward.5} parent=1 // pred_check
      _
    $region47: #{sslstm_forward.5} parent=1 // pred_check_branch
      %68 = sbr.rel (0) target = $region49
    $region48: #{sslstm_forward.5} parent=1 // pred_region
      _
    $region49: #{sslstm_forward.5} parent=1 // pred_fallthru
      _
    // Predicated region
    $region50: #{sslstm_forward.5} parent=1 // pred_check
      _
    $region51: #{sslstm_forward.5} parent=1 // pred_check_branch
      %70 = sbr.rel (0) target = $region53
    $region52: #{sslstm_forward.5} parent=1 // pred_region
      %72 = vsyncadd [#allocation7], 0
      %s73 = sshll.u32 %s12, 4
      %s74 = int_to_ptr.hbm [resolvable:$true] %s73
      %s75 = sshll.u32 [#allocation8], 4
      %s76 = int_to_ptr.vmem [resolvable:$true] %s75
      %81 = dma.hbm_to_vmem [thread:$0]  %s74, 256, %s76, [#allocation7], 64, 64, 4
    $region53: #{sslstm_forward.5} parent=1 // pred_fallthru
      _
    // Predicated region
    $region54: #{sslstm_forward.5} parent=1 // pred_check
      _
    $region55: #{sslstm_forward.5} parent=1 // pred_check_branch
      %83 = sbr.rel (0) target = $region57
    $region56: #{sslstm_forward.5} parent=1 // pred_region
      _
    $region57: #{sslstm_forward.5} parent=1 // pred_fallthru
      _
    // Predicated region
    $region58: #{sslstm_forward.5} parent=1 // pred_check
      _
    $region59: #{sslstm_forward.5} parent=1 // pred_check_branch
      %85 = sbr.rel (0) target = $region61
    $region60: #{sslstm_forward.5} parent=1 // pred_region
      %87 = dma.done [#allocation5], 256
    $region61: #{sslstm_forward.5} parent=1 // pred_fallthru
      _
    // Predicated region
    $region62: #{sslstm_forward.5} parent=1 // pred_check
      _
    $region63: #{sslstm_forward.5} parent=1 // pred_check_branch
      %89 = sbr.rel (0) target = $region65
    $region64: #{sslstm_forward.5} parent=1 // pred_region
      %91 = dma.done [#allocation7], 256
    $region65: #{sslstm_forward.5} parent=1 // pred_fallthru
      _
    // Predicated region
    $region66: #{sslstm_forward.5} parent=1 // pred_check
      _
    $region67: #{sslstm_forward.5} parent=1 // pred_check_branch
      %93 = sbr.rel (0) target = $region69
    $region68: #{sslstm_forward.5} parent=1 // pred_region
      %95 = dma.done [#allocation7], 256
    $region69: #{sslstm_forward.5} parent=1 // pred_fallthru
      _
    %p97 = scmp.eq.s32.totalorder 0, 0
    // Predicated region
    $region70: #{sslstm_forward.5} parent=1 // pred_check
      %p98 = pneg %p97
    $region71: #{sslstm_forward.5} parent=1 // pred_check_branch
      %100 = sbr.rel (%p98) target = $region73
    $region72: #{sslstm_forward.5} parent=1 // pred_region
      %vm101 = vcmask 254976
      %102 = vst.msk [vmem:[#allocation2] sm:$0x3] %vm101, 0.0
      %103 = vst.msk [vmem:[#allocation3] sm:$0x3] %vm101, 0.0
    $region73: #{sslstm_forward.5} parent=1 // pred_fallthru
      _
    %v104 = vld [vmem:[%s0] sm:$0x1]
    %v105 = vld [vmem:[%s3] sm:$0xf]
    %v106 = vld [vmem:[%s3 + $0x4] sm:$0xf]
    %v107 = vunpack.c.l.bf16 %v105
    %v108 = vunpack.c.l.bf16 %v106
    %v109 = vld [vmem:[#allocation6] sm:$0xf]
    %v110 = vld [vmem:[#allocation6 + $0x4] sm:$0xf]
    %v111 = vld [vmem:[#allocation6 + $0x8] sm:$0xf]
    %v112 = vld [vmem:[#allocation6 + $0xc] sm:$0xf]
    %v113 = vld [vmem:[%s11] sm:$0x1]
    %v115 = vperm.slane %v113, 0
    %v121 = vunpack.c.l.b16 %v109
    %v122 = vunpack.c.l.b16 %v110
    %v123 = vunpack.c.l.b16 %v111
    %v124 = vunpack.c.l.b16 %v112
    %v125 = vpack.c.b16 %v122, %v121
    %v126 = vpack.c.b16 %v124, %v123
    %vm129 = vcmask 261120
    %v131 = vsel %vm129, %v104, 0
    %133 = vmatpush.bf16.msra.mxu0 0
    %134 = vmatpush.bf16.msra.mxu0 0
    %135 = vmatpush.bf16.msra.mxu0 0
    %136 = vmatpush.bf16.msra.mxu0 0
    %137 = vmatpush.bf16.msra.mxu0 0
    %138 = vmatpush.bf16.msra.mxu0 0
    %139 = vmatpush.bf16.msra.mxu0 %v126
    %140 = vmatpush.bf16.msra.mxu0 %v125
    %141 = vmatmul.bf16.gmra.mxu0 %v131
    %v142 = vpop.f32.mrf.mxu0
    %v143 = vadd.f32 %v115, %v142
    %v144 = vpop.f32.mrf.mxu0
    %145 = vdwg.mxu0
    %v146 = vld [vmem:[#allocation8] sm:$0xf]
    %v147 = vld [vmem:[#allocation8 + $0x4] sm:$0xf]
    %v148 = vld [vmem:[#allocation8 + $0x8] sm:$0xf]
    %v149 = vld [vmem:[#allocation8 + $0xc] sm:$0xf]
    %v152 = vunpack.c.l.b16 %v105
    %v153 = vunpack.c.l.b16 %v106
    %v154 = vpack.c.b16 %v153, %v152
    %155 = vrot.lane.b32.xlu0 %v154, 96
    %v156 = vpop.permute.xlu0 %155
    %v161 = vunpack.c.l.b16 %v146
    %v162 = vunpack.c.l.b16 %v147
    %v163 = vunpack.c.l.b16 %v148
    %v164 = vunpack.c.l.b16 %v149
    %v165 = vpack.c.b16 %v162, %v161
    %v166 = vpack.c.b16 %v164, %v163
    %v170 = vsel %vm129, %v156, 0
    %172 = vmatpush.bf16.msra.mxu0 0
    %173 = vmatpush.bf16.msra.mxu0 0
    %174 = vmatpush.bf16.msra.mxu0 0
    %175 = vmatpush.bf16.msra.mxu0 0
    %176 = vmatpush.bf16.msra.mxu0 0
    %177 = vmatpush.bf16.msra.mxu0 0
    %178 = vmatpush.bf16.msra.mxu0 %v166
    %179 = vmatpush.bf16.msra.mxu0 %v165
    %180 = vmatmul.bf16.gmra.mxu0 %v170
    %v181 = vpop.f32.mrf.mxu0
    %v182 = vadd.f32 0.0, %v181
    %v183 = vpop.f32.mrf.mxu0
    %v184 = vadd.f32 0.0, %v183
    %185 = vdwg.mxu0
    %v186 = vld [vmem:[%s13] sm:$0x1]
    %v188 = vperm.slane %v186, 0
    %v190 = vadd.f32 %v182, %v188
    %v191 = vadd.f32 %v184, %v188
    %v193 = vrot.slane %v143, 1
    %v194 = vperm.slane %v143, 0
    %v195 = vperm.slane %v193, 0
    %v198 = vadd.f32 %v194, %v190
    %v199 = vadd.f32 %v195, %v191
    %v200 = vxor.u32 %v198, 2147483648
    %v201 = vxor.u32 %v199, 2147483648
    %v202 = vmul.f32 %v200, 1.442695
    %v203 = vpow.pop %v202
    %v204 = vmul.f32 %v201, 1.442695
    %v205 = vpow.pop %v204
    %v206 = vadd.f32 %v203, 1.0
    %v207 = vadd.f32 %v205, 1.0
    %v208 = vrcp.pop %v206
    %v209 = vmul.f32 %v206, %v208
    %v210 = vsub.f32 1.0, %v209
    %v211 = vmul.f32 %v208, %v210
    %v212 = vadd.f32 %v208, %v211
    %vm213 = vweird.f32 %v206
    %vm214 = vweird.f32 %v208
    %vm215 = vmor %vm213, %vm214
    %v216 = vsel %vm215, %v208, %v212
    %v217 = vand.u32 2147483647, %v206
    %vm218 = vcmp.eq.f32.partialorder %v217, 8.507059e+37
    %v219 = vand.u32 %v206, 2147483648
    %v220 = vor.u32 1.1754944e-38, %v219
    %v221 = vsel %vm218, %v220, %v216
    %v222 = vmul.f32 1.0, %v221
    %v223 = vrcp.pop %v207
    %v224 = vmul.f32 %v207, %v223
    %v225 = vsub.f32 1.0, %v224
    %v226 = vmul.f32 %v223, %v225
    %v227 = vadd.f32 %v223, %v226
    %vm228 = vweird.f32 %v207
    %vm229 = vweird.f32 %v223
    %vm230 = vmor %vm228, %vm229
    %v231 = vsel %vm230, %v223, %v227
    %v232 = vand.u32 2147483647, %v207
    %vm233 = vcmp.eq.f32.partialorder %v232, 8.507059e+37
    %v234 = vand.u32 %v207, 2147483648
    %v235 = vor.u32 1.1754944e-38, %v234
    %v236 = vsel %vm233, %v235, %v231
    %v237 = vmul.f32 1.0, %v236
    %v238 = vmul.f32 %v222, 1.442695
    %v239 = vpow.pop %v238
    %v240 = vmul.f32 %v237, 1.442695
    %v241 = vpow.pop %v240
    %v242 = vld [vmem:[#allocation2] sm:$0x3]
    %v243 = vsel %vm129, %v239, 0.0
    %v244 = vrot.slane %v243, 4
    %v245 = vadd.f32 %v243, %v244
    %v246 = vrot.slane %v245, 2
    %v247 = vadd.f32 %v245, %v246
    %v248 = vrot.slane %v247, 1
    %v249 = vadd.f32 %v247, %v248
    %v250 = vsel %vm129, %v241, 0.0
    %v251 = vrot.slane %v250, 4
    %v252 = vadd.f32 %v250, %v251
    %v253 = vrot.slane %v252, 2
    %v254 = vadd.f32 %v252, %v253
    %v255 = vrot.slane %v254, 1
    %v256 = vadd.f32 %v254, %v255
    %vm259 = vcmask 1041409
    %v260 = vsel %vm259, %v256, %v249
    %v262 = vadd.f32 %v242, %v260
    %vm263 = vcmask 254976
    %264 = vst.msk [vmem:[#allocation2] sm:$0x3] %vm263, %v262
    %v265 = vld [vmem:[#allocation3] sm:$0x3]
    %v266 = vmul.f32 %v239, %v107
    %v267 = vmul.f32 %v241, %v108
    %v268 = vsel %vm129, %v266, 0.0
    %v269 = vrot.slane %v268, 4
    %v270 = vadd.f32 %v268, %v269
    %v271 = vrot.slane %v270, 2
    %v272 = vadd.f32 %v270, %v271
    %v273 = vrot.slane %v272, 1
    %v274 = vadd.f32 %v272, %v273
    %v275 = vsel %vm129, %v267, 0.0
    %v276 = vrot.slane %v275, 4
    %v277 = vadd.f32 %v275, %v276
    %v278 = vrot.slane %v277, 2
    %v279 = vadd.f32 %v277, %v278
    %v280 = vrot.slane %v279, 1
    %v281 = vadd.f32 %v279, %v280
    %v284 = vsel %vm259, %v281, %v274
    %v286 = vadd.f32 %v265, %v284
    %287 = vst.msk [vmem:[#allocation3] sm:$0x3] %vm263, %v286
    // Predicated region
    $region74: #{sslstm_forward.5} parent=1 // pred_check
      %p288 = pneg %p97
    $region75: #{sslstm_forward.5} parent=1 // pred_check_branch
      %290 = sbr.rel (%p288) target = $region77
    $region76: #{sslstm_forward.5} parent=1 // pred_region
      %v291 = vld [vmem:[%s1] sm:$0x1]
      %v292 = vunpack.c.l.bf16 %v291
      %v293 = vld [vmem:[%s2] sm:$0x1]
      %v294 = vld [vmem:[%s4] sm:$0xf]
      %v295 = vld [vmem:[%s4 + $0x4] sm:$0xf]
      %v296 = vld [vmem:[%s4 + $0x8] sm:$0xf]
      %v297 = vld [vmem:[%s4 + $0xc] sm:$0xf]
      %v298 = vld [vmem:[%s5] sm:$0x1]
      %v300 = vperm.slane %v298, 0
      %v306 = vunpack.c.l.b16 %v294
      %v307 = vunpack.c.l.b16 %v295
      %v308 = vunpack.c.l.b16 %v296
      %v309 = vunpack.c.l.b16 %v297
      %v310 = vpack.c.b16 %v307, %v306
      %v311 = vpack.c.b16 %v309, %v308
      %314 = vmatpush.bf16.msra.mxu0 0
      %315 = vmatpush.bf16.msra.mxu0 0
      %316 = vmatpush.bf16.msra.mxu0 0
      %317 = vmatpush.bf16.msra.mxu0 0
      %318 = vmatpush.bf16.msra.mxu0 0
      %319 = vmatpush.bf16.msra.mxu0 0
      %320 = vmatpush.bf16.msra.mxu0 %v311
      %321 = vmatpush.bf16.msra.mxu0 %v310
      %322 = vmatmul.bf16.gmra.mxu0 %v131
      %v323 = vpop.f32.mrf.mxu0
      %v324 = vadd.f32 %v300, %v323
      %v325 = vpop.f32.mrf.mxu0
      %326 = vdwg.mxu0
      %v328 = vsel %vm129, %v293, 0
      %330 = vmatpush.bf16.msra.mxu0 0
      %331 = vmatpush.bf16.msra.mxu0 0
      %332 = vmatpush.bf16.msra.mxu0 0
      %333 = vmatpush.bf16.msra.mxu0 0
      %334 = vmatpush.bf16.msra.mxu0 0
      %335 = vmatpush.bf16.msra.mxu0 0
      %336 = vmatpush.bf16.msra.mxu0 %v311
      %337 = vmatpush.bf16.msra.mxu0 %v310
      %338 = vmatmul.bf16.gmra.mxu0 %v328
      %v339 = vpop.f32.mrf.mxu0
      %v340 = vadd.f32 0.0, %v339
      %v341 = vpop.f32.mrf.mxu0
      %342 = vdwg.mxu0
      %v343 = vadd.f32 %v324, %v340
      %v344 = vadd.f32 %v343, %v300
      %v345 = vxor.u32 %v344, 2147483648
      %v346 = vmul.f32 %v345, 1.442695
      %v347 = vpow.pop %v346
      %v348 = vadd.f32 %v347, 1.0
      %v349 = vrcp.pop %v348
      %v350 = vmul.f32 %v348, %v349
      %v351 = vsub.f32 1.0, %v350
      %v352 = vmul.f32 %v349, %v351
      %v353 = vadd.f32 %v349, %v352
      %vm354 = vweird.f32 %v348
      %vm355 = vweird.f32 %v349
      %vm356 = vmor %vm354, %vm355
      %v357 = vsel %vm356, %v349, %v353
      %v358 = vand.u32 2147483647, %v348
      %vm359 = vcmp.eq.f32.partialorder %v358, 8.507059e+37
      %v360 = vand.u32 %v348, 2147483648
      %v361 = vor.u32 1.1754944e-38, %v360
      %v362 = vsel %vm359, %v361, %v357
      %v363 = vmul.f32 1.0, %v362
      %v364 = vld [vmem:[%s6] sm:$0xf]
      %v365 = vld [vmem:[%s6 + $0x4] sm:$0xf]
      %v366 = vld [vmem:[%s6 + $0x8] sm:$0xf]
      %v367 = vld [vmem:[%s6 + $0xc] sm:$0xf]
      %v368 = vld [vmem:[%s7] sm:$0x1]
      %v370 = vperm.slane %v368, 0
      %v376 = vunpack.c.l.b16 %v364
      %v377 = vunpack.c.l.b16 %v365
      %v378 = vunpack.c.l.b16 %v366
      %v379 = vunpack.c.l.b16 %v367
      %v380 = vpack.c.b16 %v377, %v376
      %v381 = vpack.c.b16 %v379, %v378
      %384 = vmatpush.bf16.msra.mxu0 0
      %385 = vmatpush.bf16.msra.mxu0 0
      %386 = vmatpush.bf16.msra.mxu0 0
      %387 = vmatpush.bf16.msra.mxu0 0
      %388 = vmatpush.bf16.msra.mxu0 0
      %389 = vmatpush.bf16.msra.mxu0 0
      %390 = vmatpush.bf16.msra.mxu0 %v381
      %391 = vmatpush.bf16.msra.mxu0 %v380
      %392 = vmatmul.bf16.gmra.mxu0 %v131
      %v393 = vpop.f32.mrf.mxu0
      %v394 = vadd.f32 %v370, %v393
      %v395 = vpop.f32.mrf.mxu0
      %396 = vdwg.mxu0
      %v397 = vld [vmem:[#allocation4] sm:$0xf]
      %v398 = vld [vmem:[#allocation4 + $0x4] sm:$0xf]
      %v399 = vld [vmem:[#allocation4 + $0x8] sm:$0xf]
      %v400 = vld [vmem:[#allocation4 + $0xc] sm:$0xf]
      %v405 = vunpack.c.l.b16 %v397
      %v406 = vunpack.c.l.b16 %v398
      %v407 = vunpack.c.l.b16 %v399
      %v408 = vunpack.c.l.b16 %v400
      %v409 = vpack.c.b16 %v406, %v405
      %v410 = vpack.c.b16 %v408, %v407
      %413 = vmatpush.bf16.msra.mxu0 0
      %414 = vmatpush.bf16.msra.mxu0 0
      %415 = vmatpush.bf16.msra.mxu0 0
      %416 = vmatpush.bf16.msra.mxu0 0
      %417 = vmatpush.bf16.msra.mxu0 0
      %418 = vmatpush.bf16.msra.mxu0 0
      %419 = vmatpush.bf16.msra.mxu0 %v410
      %420 = vmatpush.bf16.msra.mxu0 %v409
      %421 = vmatmul.bf16.gmra.mxu0 %v328
      %v422 = vpop.f32.mrf.mxu0
      %v423 = vadd.f32 0.0, %v422
      %v424 = vpop.f32.mrf.mxu0
      %425 = vdwg.mxu0
      %v426 = vadd.f32 %v394, %v423
      %v427 = vld [vmem:[%s9] sm:$0x1]
      %v429 = vperm.slane %v427, 0
      %v431 = vadd.f32 %v426, %v429
      %v432 = vxor.u32 %v431, 2147483648
      %v433 = vmul.f32 %v432, 1.442695
      %v434 = vpow.pop %v433
      %v435 = vadd.f32 %v434, 1.0
      %v436 = vrcp.pop %v435
      %v437 = vmul.f32 %v435, %v436
      %v438 = vsub.f32 1.0, %v437
      %v439 = vmul.f32 %v436, %v438
      %v440 = vadd.f32 %v436, %v439
      %vm441 = vweird.f32 %v435
      %vm442 = vweird.f32 %v436
      %vm443 = vmor %vm441, %vm442
      %v444 = vsel %vm443, %v436, %v440
      %v445 = vand.u32 2147483647, %v435
      %vm446 = vcmp.eq.f32.partialorder %v445, 8.507059e+37
      %v447 = vand.u32 %v435, 2147483648
      %v448 = vor.u32 1.1754944e-38, %v447
      %v449 = vsel %vm446, %v448, %v444
      %v450 = vmul.f32 1.0, %v449
      %v451 = vmul.f32 %v363, 1.442695
      %v452 = vpow.pop %v451
      %v453 = vld [vmem:[#allocation2] sm:$0x3]
      %v454 = vadd.f32 %v453, %v452
      %v455 = vrcp.pop %v454
      %v456 = vld [vmem:[#allocation3] sm:$0x3]
      %v457 = vmul.f32 %v456, 0.125
      %v458 = vmul.f32 %v452, %v292
      %v459 = vadd.f32 %v457, %v458
      %v460 = vmul.f32 %v459, %v455
      %v461 = vpack.c.bf16 %v460, %v460
      %vm462 = vcmask 253952
      %463 = vst.msk [vmem:[%s14] sm:$0x1] %vm462, %v461
      %v464 = vtanh.pop %v292
      %v465 = vmul.f32 %v450, %v464
      %v466 = vpack.c.bf16 %v465, %v465
      %467 = vst.msk [vmem:[%s15] sm:$0x1] %vm462, %v466
    $region77: #{sslstm_forward.5} parent=1 // pred_fallthru
      _
    // Predicated region
    $region78: #{sslstm_forward.5} parent=1 // pred_check
      _
    $region79: #{sslstm_forward.5} parent=1 // pred_check_branch
      %469 = sbr.rel (0) target = $region81
    $region80: #{sslstm_forward.5} parent=1 // pred_region
      _
    $region81: #{sslstm_forward.5} parent=1 // pred_fallthru
      _
    // Predicated region
    $region82: #{sslstm_forward.5} parent=1 // pred_check
      _
    $region83: #{sslstm_forward.5} parent=1 // pred_check_branch
      %471 = sbr.rel (0) target = $region85
    $region84: #{sslstm_forward.5} parent=1 // pred_region
      _
    $region85: #{sslstm_forward.5} parent=1 // pred_fallthru
      _
    // Predicated region
    $region86: #{sslstm_forward.5} parent=1 // pred_check
      _
    $region87: #{sslstm_forward.5} parent=1 // pred_check_branch
      %473 = sbr.rel (0) target = $region89
    $region88: #{sslstm_forward.5} parent=1 // pred_region
      _
    $region89: #{sslstm_forward.5} parent=1 // pred_fallthru
      _
    // Predicated region
    $region90: #{sslstm_forward.5} parent=1 // pred_check
      _
    $region91: #{sslstm_forward.5} parent=1 // pred_check_branch
      %475 = sbr.rel (0) target = $region93
    $region92: #{sslstm_forward.5} parent=1 // pred_region
      _
    $region93: #{sslstm_forward.5} parent=1 // pred_fallthru
      _
    %476 = vsyncpa [#allocation5], 1
    %477 = vsyncpa [#allocation7], 1

// kernel: sslstm_forward.7
$region0: #{sslstm_forward.7}
  #allocation0 [shape = 'u32[]', space=smem, size = 0x4, offset = 0x4, fixed_abs, tag = 'smem constant byte address 0x4 - core index']
  #allocation1 [shape = 'u32[72,128]{1,0:T(1,128)}', space=vmem, size = 0x9000, scoped, tag = 'internal scratch']
  #allocation2 [shape = 'f32[2,32]{1,0:T(2,128)}', space=vmem, size = 0x400, scoped, tag = 'scratch operand']
  #allocation3 [shape = 'f32[2,32]{1,0:T(2,128)}', space=vmem, size = 0x400, scoped, tag = 'scratch operand']
  %s0 = inlined_call_operand.vmem [shape: bf16[2,32], index: 0, kind: input, shape index: {}]
  %s1 = inlined_call_operand.vmem [shape: bf16[2,32], index: 1, kind: input, shape index: {}]
  %s2 = inlined_call_operand.vmem [shape: bf16[2,32], index: 2, kind: input, shape index: {}]
  %s3 = inlined_call_operand.vmem [shape: bf16[2,8,64], index: 3, kind: input, shape index: {}]
  %s4 = inlined_call_operand.vmem [shape: bf16[32,32], index: 4, kind: input, shape index: {}]
  %s5 = inlined_call_operand.vmem [shape: f32[1,32], index: 5, kind: input, shape index: {}]
  %s6 = inlined_call_operand.hbm [shape: bf16[32,32], index: 6, kind: input, shape index: {}]
  %s7 = inlined_call_operand.vmem [shape: f32[1,32], index: 7, kind: input, shape index: {}]
  %s8 = inlined_call_operand.hbm [shape: bf16[32,32], index: 8, kind: input, shape index: {}]
  %s9 = inlined_call_operand.vmem [shape: f32[1,32], index: 9, kind: input, shape index: {}]
  %s10 = inlined_call_operand.hbm [shape: bf16[32,32], index: 10, kind: input, shape index: {}]
  %s11 = inlined_call_operand.vmem [shape: f32[1,32], index: 11, kind: input, shape index: {}]
  %s12 = inlined_call_operand.hbm [shape: bf16[32,32], index: 12, kind: input, shape index: {}]
  %s13 = inlined_call_operand.vmem [shape: f32[1,32], index: 13, kind: input, shape index: {}]
  %s14 = inlined_call_operand.hbm [shape: bf16[2,32], index: 14, kind: output, shape index: {0}]
  %s15 = inlined_call_operand.vmem [shape: bf16[2,32], index: 15, kind: output, shape index: {1}]
  %16 = xla_tuple %s14, %s15
  %s17 = sld [smem:[#allocation0]]
  $region98: #{sslstm_forward.7} parent=0
    _
  %s19 = ssub.s32 1, %s17
  %s20 = scalar_select 0, %s19, %s17
  $region1: #{sslstm_forward.7} parent=0
    #allocation4 [shape = 'u8[8192]{0}', space=vmem, size = 0x2000, scoped, tag = 'input window, operand 6, single buffered']
    #allocation5 [shape = 's32[1]{0}', space=sflag, size = 0x4, scoped, tag = 'scoped memory for sslstm_forward.7']
    #allocation6 [shape = 's32[1]{0}', space=sflag, size = 0x4, scoped, tag = 'scoped memory for sslstm_forward.7']
    #allocation7 [shape = 'u8[8192]{0}', space=vmem, size = 0x2000, scoped, tag = 'input window, operand 8, single buffered']
    #allocation8 [shape = 's32[1]{0}', space=sflag, size = 0x4, scoped, tag = 'scoped memory for sslstm_forward.7']
    #allocation9 [shape = 'u8[8192]{0}', space=vmem, size = 0x2000, scoped, tag = 'input window, operand 10, single buffered']
    #allocation10 [shape = 'u8[8192]{0}', space=vmem, size = 0x2000, scoped, tag = 'input window, operand 12, single buffered']
    #allocation11 [shape = 's32[1]{0}', space=sflag, size = 0x4, scoped, tag = 'scoped memory for sslstm_forward.7']
    #allocation12 [shape = 'u8[512]{0}', space=vmem, size = 0x400, scoped, tag = 'output window, operand 0, single buffered']
    %21 = vsyncpa [#allocation5], 0
    %22 = vsyncpa [#allocation8], 0
    %23 = vsyncpa [#allocation11], 0
    %24 = vsyncpa [#allocation6], 0
    // Predicated region
    $region2: #{sslstm_forward.7} parent=1 // pred_check
      _
    $region3: #{sslstm_forward.7} parent=1 // pred_check_branch
      %26 = sbr.rel (0) target = $region5
    $region4: #{sslstm_forward.7} parent=1 // pred_region
      _
    $region5: #{sslstm_forward.7} parent=1 // pred_fallthru
      _
    // Predicated region
    $region6: #{sslstm_forward.7} parent=1 // pred_check
      _
    $region7: #{sslstm_forward.7} parent=1 // pred_check_branch
      %28 = sbr.rel (0) target = $region9
    $region8: #{sslstm_forward.7} parent=1 // pred_region
      _
    $region9: #{sslstm_forward.7} parent=1 // pred_fallthru
      _
    // Predicated region
    $region10: #{sslstm_forward.7} parent=1 // pred_check
      _
    $region11: #{sslstm_forward.7} parent=1 // pred_check_branch
      %30 = sbr.rel (0) target = $region13
    $region12: #{sslstm_forward.7} parent=1 // pred_region
      _
    $region13: #{sslstm_forward.7} parent=1 // pred_fallthru
      _
    // Predicated region
    $region14: #{sslstm_forward.7} parent=1 // pred_check
      _
    $region15: #{sslstm_forward.7} parent=1 // pred_check_branch
      %32 = sbr.rel (0) target = $region17
    $region16: #{sslstm_forward.7} parent=1 // pred_region
      _
    $region17: #{sslstm_forward.7} parent=1 // pred_fallthru
      _
    // Predicated region
    $region18: #{sslstm_forward.7} parent=1 // pred_check
      _
    $region19: #{sslstm_forward.7} parent=1 // pred_check_branch
      %34 = sbr.rel (0) target = $region21
    $region20: #{sslstm_forward.7} parent=1 // pred_region
      _
    $region21: #{sslstm_forward.7} parent=1 // pred_fallthru
      _
    // Predicated region
    $region22: #{sslstm_forward.7} parent=1 // pred_check
      _
    $region23: #{sslstm_forward.7} parent=1 // pred_check_branch
      %36 = sbr.rel (0) target = $region25
    $region24: #{sslstm_forward.7} parent=1 // pred_region
      _
    $region25: #{sslstm_forward.7} parent=1 // pred_fallthru
      _
    // Predicated region
    $region26: #{sslstm_forward.7} parent=1 // pred_check
      _
    $region27: #{sslstm_forward.7} parent=1 // pred_check_branch
      %38 = sbr.rel (0) target = $region29
    $region28: #{sslstm_forward.7} parent=1 // pred_region
      %40 = vsyncadd [#allocation5], 0
      %s41 = sshll.u32 %s6, 4
      %s42 = int_to_ptr.hbm [resolvable:$true] %s41
      %s43 = sshll.u32 [#allocation4], 4
      %s44 = int_to_ptr.vmem [resolvable:$true] %s43
      %49 = dma.hbm_to_vmem [thread:$0]  %s42, 256, %s44, [#allocation5], 64, 64, 4
    $region29: #{sslstm_forward.7} parent=1 // pred_fallthru
      _
    // Predicated region
    $region30: #{sslstm_forward.7} parent=1 // pred_check
      _
    $region31: #{sslstm_forward.7} parent=1 // pred_check_branch
      %51 = sbr.rel (0) target = $region33
    $region32: #{sslstm_forward.7} parent=1 // pred_region
      _
    $region33: #{sslstm_forward.7} parent=1 // pred_fallthru
      _
    // Predicated region
    $region34: #{sslstm_forward.7} parent=1 // pred_check
      _
    $region35: #{sslstm_forward.7} parent=1 // pred_check_branch
      %53 = sbr.rel (0) target = $region37
    $region36: #{sslstm_forward.7} parent=1 // pred_region
      %55 = vsyncadd [#allocation8], 0
      %s56 = sshll.u32 %s8, 4
      %s57 = int_to_ptr.hbm [resolvable:$true] %s56
      %s58 = sshll.u32 [#allocation7], 4
      %s59 = int_to_ptr.vmem [resolvable:$true] %s58
      %64 = dma.hbm_to_vmem [thread:$0]  %s57, 256, %s59, [#allocation8], 64, 64, 4
    $region37: #{sslstm_forward.7} parent=1 // pred_fallthru
      _
    // Predicated region
    $region38: #{sslstm_forward.7} parent=1 // pred_check
      _
    $region39: #{sslstm_forward.7} parent=1 // pred_check_branch
      %66 = sbr.rel (0) target = $region41
    $region40: #{sslstm_forward.7} parent=1 // pred_region
      _
    $region41: #{sslstm_forward.7} parent=1 // pred_fallthru
      _
    // Predicated region
    $region42: #{sslstm_forward.7} parent=1 // pred_check
      _
    $region43: #{sslstm_forward.7} parent=1 // pred_check_branch
      %68 = sbr.rel (0) target = $region45
    $region44: #{sslstm_forward.7} parent=1 // pred_region
      %70 = vsyncadd [#allocation8], 0
      %s71 = sshll.u32 %s10, 4
      %s72 = int_to_ptr.hbm [resolvable:$true] %s71
      %s73 = sshll.u32 [#allocation9], 4
      %s74 = int_to_ptr.vmem [resolvable:$true] %s73
      %79 = dma.hbm_to_vmem [thread:$0]  %s72, 256, %s74, [#allocation8], 64, 64, 4
    $region45: #{sslstm_forward.7} parent=1 // pred_fallthru
      _
    // Predicated region
    $region46: #{sslstm_forward.7} parent=1 // pred_check
      _
    $region47: #{sslstm_forward.7} parent=1 // pred_check_branch
      %81 = sbr.rel (0) target = $region49
    $region48: #{sslstm_forward.7} parent=1 // pred_region
      _
    $region49: #{sslstm_forward.7} parent=1 // pred_fallthru
      _
    // Predicated region
    $region50: #{sslstm_forward.7} parent=1 // pred_check
      _
    $region51: #{sslstm_forward.7} parent=1 // pred_check_branch
      %83 = sbr.rel (0) target = $region53
    $region52: #{sslstm_forward.7} parent=1 // pred_region
      %85 = vsyncadd [#allocation11], 0
      %s86 = sshll.u32 %s12, 4
      %s87 = int_to_ptr.hbm [resolvable:$true] %s86
      %s88 = sshll.u32 [#allocation10], 4
      %s89 = int_to_ptr.vmem [resolvable:$true] %s88
      %94 = dma.hbm_to_vmem [thread:$0]  %s87, 256, %s89, [#allocation11], 64, 64, 4
    $region53: #{sslstm_forward.7} parent=1 // pred_fallthru
      _
    // Predicated region
    $region54: #{sslstm_forward.7} parent=1 // pred_check
      _
    $region55: #{sslstm_forward.7} parent=1 // pred_check_branch
      %96 = sbr.rel (0) target = $region57
    $region56: #{sslstm_forward.7} parent=1 // pred_region
      _
    $region57: #{sslstm_forward.7} parent=1 // pred_fallthru
      _
    // Predicated region
    $region58: #{sslstm_forward.7} parent=1 // pred_check
      _
    $region59: #{sslstm_forward.7} parent=1 // pred_check_branch
      %98 = sbr.rel (0) target = $region61
    $region60: #{sslstm_forward.7} parent=1 // pred_region
      %100 = dma.done [#allocation5], 256
    $region61: #{sslstm_forward.7} parent=1 // pred_fallthru
      _
    // Predicated region
    $region62: #{sslstm_forward.7} parent=1 // pred_check
      _
    $region63: #{sslstm_forward.7} parent=1 // pred_check_branch
      %102 = sbr.rel (0) target = $region65
    $region64: #{sslstm_forward.7} parent=1 // pred_region
      %104 = dma.done [#allocation8], 256
    $region65: #{sslstm_forward.7} parent=1 // pred_fallthru
      _
    // Predicated region
    $region66: #{sslstm_forward.7} parent=1 // pred_check
      _
    $region67: #{sslstm_forward.7} parent=1 // pred_check_branch
      %106 = sbr.rel (0) target = $region69
    $region68: #{sslstm_forward.7} parent=1 // pred_region
      %108 = dma.done [#allocation8], 256
    $region69: #{sslstm_forward.7} parent=1 // pred_fallthru
      _
    // Predicated region
    $region70: #{sslstm_forward.7} parent=1 // pred_check
      _
    $region71: #{sslstm_forward.7} parent=1 // pred_check_branch
      %110 = sbr.rel (0) target = $region73
    $region72: #{sslstm_forward.7} parent=1 // pred_region
      %112 = dma.done [#allocation11], 256
    $region73: #{sslstm_forward.7} parent=1 // pred_fallthru
      _
    %p114 = scmp.eq.s32.totalorder 0, 0
    // Predicated region
    $region74: #{sslstm_forward.7} parent=1 // pred_check
      %p115 = pneg %p114
    $region75: #{sslstm_forward.7} parent=1 // pred_check_branch
      %117 = sbr.rel (%p115) target = $region77
    $region76: #{sslstm_forward.7} parent=1 // pred_region
      %vm118 = vcmask 254976
      %119 = vst.msk [vmem:[#allocation2] sm:$0x3] %vm118, 0.0
      %120 = vst.msk [vmem:[#allocation3] sm:$0x3] %vm118, 0.0
    $region77: #{sslstm_forward.7} parent=1 // pred_fallthru
      _
    %v121 = vld [vmem:[%s0] sm:$0x1]
    %v122 = vld [vmem:[%s3] sm:$0xf]
    %v123 = vld [vmem:[%s3 + $0x4] sm:$0xf]
    %v124 = vunpack.c.l.bf16 %v122
    %v125 = vunpack.c.l.bf16 %v123
    %v126 = vld [vmem:[#allocation9] sm:$0xf]
    %v127 = vld [vmem:[#allocation9 + $0x4] sm:$0xf]
    %v128 = vld [vmem:[#allocation9 + $0x8] sm:$0xf]
    %v129 = vld [vmem:[#allocation9 + $0xc] sm:$0xf]
    %v130 = vld [vmem:[%s11] sm:$0x1]
    %v132 = vperm.slane %v130, 0
    %v138 = vunpack.c.l.b16 %v126
    %v139 = vunpack.c.l.b16 %v127
    %v140 = vunpack.c.l.b16 %v128
    %v141 = vunpack.c.l.b16 %v129
    %v142 = vpack.c.b16 %v139, %v138
    %v143 = vpack.c.b16 %v141, %v140
    %vm146 = vcmask 261120
    %v148 = vsel %vm146, %v121, 0
    %150 = vmatpush.bf16.msra.mxu0 0
    %151 = vmatpush.bf16.msra.mxu0 0
    %152 = vmatpush.bf16.msra.mxu0 0
    %153 = vmatpush.bf16.msra.mxu0 0
    %154 = vmatpush.bf16.msra.mxu0 0
    %155 = vmatpush.bf16.msra.mxu0 0
    %156 = vmatpush.bf16.msra.mxu0 %v143
    %157 = vmatpush.bf16.msra.mxu0 %v142
    %158 = vmatmul.bf16.gmra.mxu0 %v148
    %v159 = vpop.f32.mrf.mxu0
    %v160 = vadd.f32 %v132, %v159
    %v161 = vpop.f32.mrf.mxu0
    %162 = vdwg.mxu0
    %v163 = vld [vmem:[#allocation10] sm:$0xf]
    %v164 = vld [vmem:[#allocation10 + $0x4] sm:$0xf]
    %v165 = vld [vmem:[#allocation10 + $0x8] sm:$0xf]
    %v166 = vld [vmem:[#allocation10 + $0xc] sm:$0xf]
    %v169 = vunpack.c.l.b16 %v122
    %v170 = vunpack.c.l.b16 %v123
    %v171 = vpack.c.b16 %v170, %v169
    %172 = vrot.lane.b32.xlu0 %v171, 96
    %v173 = vpop.permute.xlu0 %172
    %v178 = vunpack.c.l.b16 %v163
    %v179 = vunpack.c.l.b16 %v164
    %v180 = vunpack.c.l.b16 %v165
    %v181 = vunpack.c.l.b16 %v166
    %v182 = vpack.c.b16 %v179, %v178
    %v183 = vpack.c.b16 %v181, %v180
    %v187 = vsel %vm146, %v173, 0
    %189 = vmatpush.bf16.msra.mxu0 0
    %190 = vmatpush.bf16.msra.mxu0 0
    %191 = vmatpush.bf16.msra.mxu0 0
    %192 = vmatpush.bf16.msra.mxu0 0
    %193 = vmatpush.bf16.msra.mxu0 0
    %194 = vmatpush.bf16.msra.mxu0 0
    %195 = vmatpush.bf16.msra.mxu0 %v183
    %196 = vmatpush.bf16.msra.mxu0 %v182
    %197 = vmatmul.bf16.gmra.mxu0 %v187
    %v198 = vpop.f32.mrf.mxu0
    %v199 = vadd.f32 0.0, %v198
    %v200 = vpop.f32.mrf.mxu0
    %v201 = vadd.f32 0.0, %v200
    %202 = vdwg.mxu0
    %v203 = vld [vmem:[%s13] sm:$0x1]
    %v205 = vperm.slane %v203, 0
    %v207 = vadd.f32 %v199, %v205
    %v208 = vadd.f32 %v201, %v205
    %v210 = vrot.slane %v160, 1
    %v211 = vperm.slane %v160, 0
    %v212 = vperm.slane %v210, 0
    %v215 = vadd.f32 %v211, %v207
    %v216 = vadd.f32 %v212, %v208
    %v217 = vxor.u32 %v215, 2147483648
    %v218 = vxor.u32 %v216, 2147483648
    %v219 = vmul.f32 %v217, 1.442695
    %v220 = vpow.pop %v219
    %v221 = vmul.f32 %v218, 1.442695
    %v222 = vpow.pop %v221
    %v223 = vadd.f32 %v220, 1.0
    %v224 = vadd.f32 %v222, 1.0
    %v225 = vrcp.pop %v223
    %v226 = vmul.f32 %v223, %v225
    %v227 = vsub.f32 1.0, %v226
    %v228 = vmul.f32 %v225, %v227
    %v229 = vadd.f32 %v225, %v228
    %vm230 = vweird.f32 %v223
    %vm231 = vweird.f32 %v225
    %vm232 = vmor %vm230, %vm231
    %v233 = vsel %vm232, %v225, %v229
    %v234 = vand.u32 2147483647, %v223
    %vm235 = vcmp.eq.f32.partialorder %v234, 8.507059e+37
    %v236 = vand.u32 %v223, 2147483648
    %v237 = vor.u32 1.1754944e-38, %v236
    %v238 = vsel %vm235, %v237, %v233
    %v239 = vmul.f32 1.0, %v238
    %v240 = vrcp.pop %v224
    %v241 = vmul.f32 %v224, %v240
    %v242 = vsub.f32 1.0, %v241
    %v243 = vmul.f32 %v240, %v242
    %v244 = vadd.f32 %v240, %v243
    %vm245 = vweird.f32 %v224
    %vm246 = vweird.f32 %v240
    %vm247 = vmor %vm245, %vm246
    %v248 = vsel %vm247, %v240, %v244
    %v249 = vand.u32 2147483647, %v224
    %vm250 = vcmp.eq.f32.partialorder %v249, 8.507059e+37
    %v251 = vand.u32 %v224, 2147483648
    %v252 = vor.u32 1.1754944e-38, %v251
    %v253 = vsel %vm250, %v252, %v248
    %v254 = vmul.f32 1.0, %v253
    %v255 = vmul.f32 %v239, 1.442695
    %v256 = vpow.pop %v255
    %v257 = vmul.f32 %v254, 1.442695
    %v258 = vpow.pop %v257
    %v259 = vld [vmem:[#allocation2] sm:$0x3]
    %v260 = vsel %vm146, %v256, 0.0
    %v261 = vrot.slane %v260, 4
    %v262 = vadd.f32 %v260, %v261
    %v263 = vrot.slane %v262, 2
    %v264 = vadd.f32 %v262, %v263
    %v265 = vrot.slane %v264, 1
    %v266 = vadd.f32 %v264, %v265
    %v267 = vsel %vm146, %v258, 0.0
    %v268 = vrot.slane %v267, 4
    %v269 = vadd.f32 %v267, %v268
    %v270 = vrot.slane %v269, 2
    %v271 = vadd.f32 %v269, %v270
    %v272 = vrot.slane %v271, 1
    %v273 = vadd.f32 %v271, %v272
    %vm276 = vcmask 1041409
    %v277 = vsel %vm276, %v273, %v266
    %v279 = vadd.f32 %v259, %v277
    %vm280 = vcmask 254976
    %281 = vst.msk [vmem:[#allocation2] sm:$0x3] %vm280, %v279
    %v282 = vld [vmem:[#allocation3] sm:$0x3]
    %v283 = vmul.f32 %v256, %v124
    %v284 = vmul.f32 %v258, %v125
    %v285 = vsel %vm146, %v283, 0.0
    %v286 = vrot.slane %v285, 4
    %v287 = vadd.f32 %v285, %v286
    %v288 = vrot.slane %v287, 2
    %v289 = vadd.f32 %v287, %v288
    %v290 = vrot.slane %v289, 1
    %v291 = vadd.f32 %v289, %v290
    %v292 = vsel %vm146, %v284, 0.0
    %v293 = vrot.slane %v292, 4
    %v294 = vadd.f32 %v292, %v293
    %v295 = vrot.slane %v294, 2
    %v296 = vadd.f32 %v294, %v295
    %v297 = vrot.slane %v296, 1
    %v298 = vadd.f32 %v296, %v297
    %v301 = vsel %vm276, %v298, %v291
    %v303 = vadd.f32 %v282, %v301
    %304 = vst.msk [vmem:[#allocation3] sm:$0x3] %vm280, %v303
    // Predicated region
    $region78: #{sslstm_forward.7} parent=1 // pred_check
      %p305 = pneg %p114
    $region79: #{sslstm_forward.7} parent=1 // pred_check_branch
      %307 = sbr.rel (%p305) target = $region81
    $region80: #{sslstm_forward.7} parent=1 // pred_region
      %v308 = vld [vmem:[%s1] sm:$0x1]
      %v309 = vunpack.c.l.bf16 %v308
      %v310 = vld [vmem:[%s2] sm:$0x1]
      %v311 = vld [vmem:[%s4] sm:$0xf]
      %v312 = vld [vmem:[%s4 + $0x4] sm:$0xf]
      %v313 = vld [vmem:[%s4 + $0x8] sm:$0xf]
      %v314 = vld [vmem:[%s4 + $0xc] sm:$0xf]
      %v315 = vld [vmem:[%s5] sm:$0x1]
      %v317 = vperm.slane %v315, 0
      %v323 = vunpack.c.l.b16 %v311
      %v324 = vunpack.c.l.b16 %v312
      %v325 = vunpack.c.l.b16 %v313
      %v326 = vunpack.c.l.b16 %v314
      %v327 = vpack.c.b16 %v324, %v323
      %v328 = vpack.c.b16 %v326, %v325
      %331 = vmatpush.bf16.msra.mxu0 0
      %332 = vmatpush.bf16.msra.mxu0 0
      %333 = vmatpush.bf16.msra.mxu0 0
      %334 = vmatpush.bf16.msra.mxu0 0
      %335 = vmatpush.bf16.msra.mxu0 0
      %336 = vmatpush.bf16.msra.mxu0 0
      %337 = vmatpush.bf16.msra.mxu0 %v328
      %338 = vmatpush.bf16.msra.mxu0 %v327
      %339 = vmatmul.bf16.gmra.mxu0 %v148
      %v340 = vpop.f32.mrf.mxu0
      %v341 = vadd.f32 %v317, %v340
      %v342 = vpop.f32.mrf.mxu0
      %343 = vdwg.mxu0
      %v345 = vsel %vm146, %v310, 0
      %347 = vmatpush.bf16.msra.mxu0 0
      %348 = vmatpush.bf16.msra.mxu0 0
      %349 = vmatpush.bf16.msra.mxu0 0
      %350 = vmatpush.bf16.msra.mxu0 0
      %351 = vmatpush.bf16.msra.mxu0 0
      %352 = vmatpush.bf16.msra.mxu0 0
      %353 = vmatpush.bf16.msra.mxu0 %v328
      %354 = vmatpush.bf16.msra.mxu0 %v327
      %355 = vmatmul.bf16.gmra.mxu0 %v345
      %v356 = vpop.f32.mrf.mxu0
      %v357 = vadd.f32 0.0, %v356
      %v358 = vpop.f32.mrf.mxu0
      %359 = vdwg.mxu0
      %v360 = vadd.f32 %v341, %v357
      %v361 = vadd.f32 %v360, %v317
      %v362 = vxor.u32 %v361, 2147483648
      %v363 = vmul.f32 %v362, 1.442695
      %v364 = vpow.pop %v363
      %v365 = vadd.f32 %v364, 1.0
      %v366 = vrcp.pop %v365
      %v367 = vmul.f32 %v365, %v366
      %v368 = vsub.f32 1.0, %v367
      %v369 = vmul.f32 %v366, %v368
      %v370 = vadd.f32 %v366, %v369
      %vm371 = vweird.f32 %v365
      %vm372 = vweird.f32 %v366
      %vm373 = vmor %vm371, %vm372
      %v374 = vsel %vm373, %v366, %v370
      %v375 = vand.u32 2147483647, %v365
      %vm376 = vcmp.eq.f32.partialorder %v375, 8.507059e+37
      %v377 = vand.u32 %v365, 2147483648
      %v378 = vor.u32 1.1754944e-38, %v377
      %v379 = vsel %vm376, %v378, %v374
      %v380 = vmul.f32 1.0, %v379
      %v381 = vld [vmem:[#allocation4] sm:$0xf]
      %v382 = vld [vmem:[#allocation4 + $0x4] sm:$0xf]
      %v383 = vld [vmem:[#allocation4 + $0x8] sm:$0xf]
      %v384 = vld [vmem:[#allocation4 + $0xc] sm:$0xf]
      %v385 = vld [vmem:[%s7] sm:$0x1]
      %v387 = vperm.slane %v385, 0
      %v393 = vunpack.c.l.b16 %v381
      %v394 = vunpack.c.l.b16 %v382
      %v395 = vunpack.c.l.b16 %v383
      %v396 = vunpack.c.l.b16 %v384
      %v397 = vpack.c.b16 %v394, %v393
      %v398 = vpack.c.b16 %v396, %v395
      %401 = vmatpush.bf16.msra.mxu0 0
      %402 = vmatpush.bf16.msra.mxu0 0
      %403 = vmatpush.bf16.msra.mxu0 0
      %404 = vmatpush.bf16.msra.mxu0 0
      %405 = vmatpush.bf16.msra.mxu0 0
      %406 = vmatpush.bf16.msra.mxu0 0
      %407 = vmatpush.bf16.msra.mxu0 %v398
      %408 = vmatpush.bf16.msra.mxu0 %v397
      %409 = vmatmul.bf16.gmra.mxu0 %v148
      %v410 = vpop.f32.mrf.mxu0
      %v411 = vadd.f32 %v387, %v410
      %v412 = vpop.f32.mrf.mxu0
      %413 = vdwg.mxu0
      %v414 = vld [vmem:[#allocation7] sm:$0xf]
      %v415 = vld [vmem:[#allocation7 + $0x4] sm:$0xf]
      %v416 = vld [vmem:[#allocation7 + $0x8] sm:$0xf]
      %v417 = vld [vmem:[#allocation7 + $0xc] sm:$0xf]
      %v422 = vunpack.c.l.b16 %v414
      %v423 = vunpack.c.l.b16 %v415
      %v424 = vunpack.c.l.b16 %v416
      %v425 = vunpack.c.l.b16 %v417
      %v426 = vpack.c.b16 %v423, %v422
      %v427 = vpack.c.b16 %v425, %v424
      %430 = vmatpush.bf16.msra.mxu0 0
      %431 = vmatpush.bf16.msra.mxu0 0
      %432 = vmatpush.bf16.msra.mxu0 0
      %433 = vmatpush.bf16.msra.mxu0 0
      %434 = vmatpush.bf16.msra.mxu0 0
      %435 = vmatpush.bf16.msra.mxu0 0
      %436 = vmatpush.bf16.msra.mxu0 %v427
      %437 = vmatpush.bf16.msra.mxu0 %v426
      %438 = vmatmul.bf16.gmra.mxu0 %v345
      %v439 = vpop.f32.mrf.mxu0
      %v440 = vadd.f32 0.0, %v439
      %v441 = vpop.f32.mrf.mxu0
      %442 = vdwg.mxu0
      %v443 = vadd.f32 %v411, %v440
      %v444 = vld [vmem:[%s9] sm:$0x1]
      %v446 = vperm.slane %v444, 0
      %v448 = vadd.f32 %v443, %v446
      %v449 = vxor.u32 %v448, 2147483648
      %v450 = vmul.f32 %v449, 1.442695
      %v451 = vpow.pop %v450
      %v452 = vadd.f32 %v451, 1.0
      %v453 = vrcp.pop %v452
      %v454 = vmul.f32 %v452, %v453
      %v455 = vsub.f32 1.0, %v454
      %v456 = vmul.f32 %v453, %v455
      %v457 = vadd.f32 %v453, %v456
      %vm458 = vweird.f32 %v452
      %vm459 = vweird.f32 %v453
      %vm460 = vmor %vm458, %vm459
      %v461 = vsel %vm460, %v453, %v457
      %v462 = vand.u32 2147483647, %v452
      %vm463 = vcmp.eq.f32.partialorder %v462, 8.507059e+37
      %v464 = vand.u32 %v452, 2147483648
      %v465 = vor.u32 1.1754944e-38, %v464
      %v466 = vsel %vm463, %v465, %v461
      %v467 = vmul.f32 1.0, %v466
      %v468 = vmul.f32 %v380, 1.442695
      %v469 = vpow.pop %v468
      %v470 = vld [vmem:[#allocation2] sm:$0x3]
      %v471 = vadd.f32 %v470, %v469
      %v472 = vrcp.pop %v471
      %v473 = vld [vmem:[#allocation3] sm:$0x3]
      %v474 = vmul.f32 %v473, 0.125
      %v475 = vmul.f32 %v469, %v309
      %v476 = vadd.f32 %v474, %v475
      %v477 = vmul.f32 %v476, %v472
      %v478 = vpack.c.bf16 %v477, %v477
      %vm479 = vcmask 253952
      %480 = vst.msk [vmem:[#allocation12] sm:$0x1] %vm479, %v478
      %v481 = vtanh.pop %v309
      %v482 = vmul.f32 %v467, %v481
      %v483 = vpack.c.bf16 %v482, %v482
      %484 = vst.msk [vmem:[%s15] sm:$0x1] %vm479, %v483
    $region81: #{sslstm_forward.7} parent=1 // pred_fallthru
      _
    // Predicated region
    $region82: #{sslstm_forward.7} parent=1 // pred_check
      _
    $region83: #{sslstm_forward.7} parent=1 // pred_check_branch
      %486 = sbr.rel (0) target = $region85
    $region84: #{sslstm_forward.7} parent=1 // pred_region
      %488 = vsyncadd [#allocation6], 0
      %s490 = sshll.u32 [#allocation12], 4
      %s491 = int_to_ptr.vmem [resolvable:$true] %s490
      %s492 = sshll.u32 %s14, 4
      %s493 = int_to_ptr.hbm [resolvable:$true] %s492
      %495 = dma.vmem_to_hbm [thread:$0]  %s491, 16, %s493, [#allocation6]
    $region85: #{sslstm_forward.7} parent=1 // pred_fallthru
      _
    // Predicated region
    $region86: #{sslstm_forward.7} parent=1 // pred_check
      _
    $region87: #{sslstm_forward.7} parent=1 // pred_check_branch
      %497 = sbr.rel (0) target = $region89
    $region88: #{sslstm_forward.7} parent=1 // pred_region
      _
    $region89: #{sslstm_forward.7} parent=1 // pred_fallthru
      _
    // Predicated region
    $region90: #{sslstm_forward.7} parent=1 // pred_check
      _
    $region91: #{sslstm_forward.7} parent=1 // pred_check_branch
      %499 = sbr.rel (0) target = $region93
    $region92: #{sslstm_forward.7} parent=1 // pred_region
      %501 = dma.done [#allocation6], 16
    $region93: #{sslstm_forward.7} parent=1 // pred_fallthru
      _
    // Predicated region
    $region94: #{sslstm_forward.7} parent=1 // pred_check
      _
    $region95: #{sslstm_forward.7} parent=1 // pred_check_branch
      %503 = sbr.rel (0) target = $region97
    $region96: #{sslstm_forward.7} parent=1 // pred_region
      _
    $region97: #{sslstm_forward.7} parent=1 // pred_fallthru
      _
    %504 = vsyncpa [#allocation5], 1
    %505 = vsyncpa [#allocation8], 1
    %506 = vsyncpa [#allocation11], 1
    %507 = vsyncpa [#allocation6], 1

// kernel: sslstm_forward.6
$region0: #{sslstm_forward.6}
  #allocation0 [shape = 'u32[]', space=smem, size = 0x4, offset = 0x4, fixed_abs, tag = 'smem constant byte address 0x4 - core index']
  #allocation1 [shape = 'u32[72,128]{1,0:T(1,128)}', space=vmem, size = 0x9000, scoped, tag = 'internal scratch']
  %s0 = inlined_call_operand.vmem [shape: bf16[2,8,64], index: 0, kind: input, shape index: {}]
  %s1 = inlined_call_operand.vmem [shape: bf16[2,8,64], index: 1, kind: input, shape index: {}]
  %s2 = inlined_call_operand.vmem [shape: bf16[2,8,64], index: 2, kind: input, shape index: {}]
  %s3 = inlined_call_operand.vmem [shape: bf16[2,8,32], index: 3, kind: input, shape index: {}]
  %s4 = inlined_call_operand.vmem [shape: bf16[2,1,32], index: 4, kind: input, shape index: {}, may-alias: {4,5}]
  %s5 = inlined_call_operand.vmem [shape: bf16[2,1,32], index: 5, kind: input, shape index: {}, may-alias: {4,5}]
  %s6 = inlined_call_operand.vmem [shape: bf16[32,192], index: 6, kind: input, shape index: {}]
  %s7 = inlined_call_operand.vmem [shape: bf16[32,192], index: 7, kind: input, shape index: {}]
  %s8 = inlined_call_operand.vmem [shape: bf16[32,192], index: 8, kind: input, shape index: {}]
  %s9 = inlined_call_operand.vmem [shape: bf16[32,192], index: 9, kind: input, shape index: {}]
  %s10 = inlined_call_operand.vmem [shape: bf16[32,192], index: 10, kind: input, shape index: {}]
  %s11 = inlined_call_operand.vmem [shape: f32[1,192], index: 11, kind: input, shape index: {}]
  %s12 = inlined_call_operand.vmem [shape: bf16[2,8,64], index: 12, kind: output, shape index: {}]
  %s13 = sld [smem:[#allocation0]]
  $region81: #{sslstm_forward.6} parent=0
    _
  %s15 = ssub.s32 1, %s13
  %s16 = scalar_select 0, %s15, %s13
  loop: start=0, step=1, limit=4
  $region2: #{sslstm_forward.6} parent=0 // loop_pre_header
    _
  $region3: #{sslstm_forward.6} parent=0 // loop_header
    %s18 = sphi 0, %s22
    %p19 = scmp.ge.s32.totalorder %s18, 4
    %s25 = sphi 0, %s37
    %s26 = sphi 0, %s33
    %s27 = sphi 0, %s25
    %s28 = sphi 0, %s26
    %s29 = sphi 0, %s27
    %s30 = sphi 0, %s28
    %s42 = sphi 0, %s44
    %s45 = sphi 0, %s42
    %s46 = sphi 0, %s45
    %s62 = sphi 0, %s46
    %s70 = sphi 0, %s72
    %s73 = sphi 0, %s70
    %s74 = sphi 0, %s73
    %s90 = sphi 0, %s74
    %s98 = sphi 0, %s100
    %s101 = sphi 0, %s98
    %s102 = sphi 0, %s101
    %s118 = sphi 0, %s102
    %s126 = sphi 0, %s128
    %s129 = sphi 0, %s126
    %s130 = sphi 0, %s129
    %s146 = sphi 0, %s130
    %s152 = sphi 0, %s154
    %s155 = sphi 0, %s152
    %s156 = sphi 0, %s155
    %s172 = sphi 0, %s156
    %s178 = sphi 0, %s180
    %s181 = sphi 0, %s178
    %s182 = sphi 0, %s181
    %s198 = sphi 0, %s182
    %s202 = sphi 0, %s202
    %s204 = sphi 0, %s202
    %s205 = sphi 0, %s204
    %s219 = sphi 0, %s205
    %s223 = sphi 0, %s223
    %s225 = sphi 0, %s223
    %s226 = sphi 0, %s225
    %s240 = sphi 0, %s226
    %s244 = sphi 0, %s244
    %s246 = sphi 0, %s244
    %s247 = sphi 0, %s246
    %s261 = sphi 0, %s247
    %s265 = sphi 0, %s265
    %s267 = sphi 0, %s265
    %s268 = sphi 0, %s267
    %s282 = sphi 0, %s268
    %s286 = sphi 0, %s286
    %s288 = sphi 0, %s286
    %s289 = sphi 0, %s288
    %s303 = sphi 0, %s289
    %s307 = sphi 0, %s307
    %s309 = sphi 0, %s307
    %s310 = sphi 0, %s309
    %s324 = sphi 0, %s310
    %s332 = sphi 0, %s334
    %s335 = sphi 0, %s332
    %s336 = sphi 0, %s335
    %s352 = sphi 0, %s336
  $region4: #{sslstm_forward.6} parent=0 // loop_header_branch
    %21 = sbr.rel (%p19) target = $region8
  $region5: #{sslstm_forward.6} parent=0 // loop_body
    %s23 = ssub.s32 %s18, 1
    %s24 = ssub.s32 %s18, 2
    %s31 = sadd.s32 1, %s26
    %p32 = scmp.ge.s32.totalorder %s31, 1
    %s33 = scalar_select %p32, 0, %s31
    %s34 = sadd.s32 1, %s25
    %s35 = scalar_select %p32, %s34, %s25
    %p36 = scmp.ge.s32.totalorder %s35, 2
    %s37 = scalar_select %p36, 0, %s35
    %s38 = ssub.s32 %s25, %s37
    %s39 = ssub.s32 %s26, %s33
    %s40 = sor.u32 %s38, %s39
    %p41 = scmp.eq.s32.totalorder %s40, 0
    %s43 = sadd.s32 %s42, 1
    %s44 = scalar_select %p41, %s42, %s43
    %p47 = pneg %p41
    %p48 = scmp.eq.s32.totalorder %s18, 1
    %p49 = por %p47, %p48
    %p50 = scmp.ne.s32.totalorder %s42, %s45
    %p51 = scmp.eq.s32.totalorder %s18, 0
    %p52 = por %p50, %p51
    %p53 = scmp.ne.s32.totalorder %s42, %s45
    %p54 = scmp.eq.s32.totalorder %s23, 1
    %p55 = por %p53, %p54
    %p56 = scmp.ne.s32.totalorder %s45, %s46
    %p57 = scmp.eq.s32.totalorder %s23, 0
    %p58 = por %p56, %p57
    %p59 = scmp.ne.s32.totalorder %s45, %s46
    %p60 = scmp.eq.s32.totalorder %s24, 1
    %p61 = por %p59, %p60
    %p63 = scmp.ne.s32.totalorder %s46, %s62
    %p64 = scmp.eq.s32.totalorder %s24, 0
    %p65 = por %p63, %p64
    %s66 = ssub.s32 %s25, %s37
    %s67 = ssub.s32 %s26, %s33
    %s68 = sor.u32 %s66, %s67
    %p69 = scmp.eq.s32.totalorder %s68, 0
    %s71 = sadd.s32 %s70, 1
    %s72 = scalar_select %p69, %s70, %s71
    %p75 = pneg %p69
    %p76 = scmp.eq.s32.totalorder %s18, 1
    %p77 = por %p75, %p76
    %p78 = scmp.ne.s32.totalorder %s70, %s73
    %p79 = scmp.eq.s32.totalorder %s18, 0
    %p80 = por %p78, %p79
    %p81 = scmp.ne.s32.totalorder %s70, %s73
    %p82 = scmp.eq.s32.totalorder %s23, 1
    %p83 = por %p81, %p82
    %p84 = scmp.ne.s32.totalorder %s73, %s74
    %p85 = scmp.eq.s32.totalorder %s23, 0
    %p86 = por %p84, %p85
    %p87 = scmp.ne.s32.totalorder %s73, %s74
    %p88 = scmp.eq.s32.totalorder %s24, 1
    %p89 = por %p87, %p88
    %p91 = scmp.ne.s32.totalorder %s74, %s90
    %p92 = scmp.eq.s32.totalorder %s24, 0
    %p93 = por %p91, %p92
    %s94 = ssub.s32 %s25, %s37
    %s95 = ssub.s32 %s26, %s33
    %s96 = sor.u32 %s94, %s95
    %p97 = scmp.eq.s32.totalorder %s96, 0
    %s99 = sadd.s32 %s98, 1
    %s100 = scalar_select %p97, %s98, %s99
    %p103 = pneg %p97
    %p104 = scmp.eq.s32.totalorder %s18, 1
    %p105 = por %p103, %p104
    %p106 = scmp.ne.s32.totalorder %s98, %s101
    %p107 = scmp.eq.s32.totalorder %s18, 0
    %p108 = por %p106, %p107
    %p109 = scmp.ne.s32.totalorder %s98, %s101
    %p110 = scmp.eq.s32.totalorder %s23, 1
    %p111 = por %p109, %p110
    %p112 = scmp.ne.s32.totalorder %s101, %s102
    %p113 = scmp.eq.s32.totalorder %s23, 0
    %p114 = por %p112, %p113
    %p115 = scmp.ne.s32.totalorder %s101, %s102
    %p116 = scmp.eq.s32.totalorder %s24, 1
    %p117 = por %p115, %p116
    %p119 = scmp.ne.s32.totalorder %s102, %s118
    %p120 = scmp.eq.s32.totalorder %s24, 0
    %p121 = por %p119, %p120
    %s122 = ssub.s32 %s25, %s37
    %s123 = ssub.s32 %s26, %s33
    %s124 = sor.u32 %s122, %s123
    %p125 = scmp.eq.s32.totalorder %s124, 0
    %s127 = sadd.s32 %s126, 1
    %s128 = scalar_select %p125, %s126, %s127
    %p131 = pneg %p125
    %p132 = scmp.eq.s32.totalorder %s18, 1
    %p133 = por %p131, %p132
    %p134 = scmp.ne.s32.totalorder %s126, %s129
    %p135 = scmp.eq.s32.totalorder %s18, 0
    %p136 = por %p134, %p135
    %p137 = scmp.ne.s32.totalorder %s126, %s129
    %p138 = scmp.eq.s32.totalorder %s23, 1
    %p139 = por %p137, %p138
    %p140 = scmp.ne.s32.totalorder %s129, %s130
    %p141 = scmp.eq.s32.totalorder %s23, 0
    %p142 = por %p140, %p141
    %p143 = scmp.ne.s32.totalorder %s129, %s130
    %p144 = scmp.eq.s32.totalorder %s24, 1
    %p145 = por %p143, %p144
    %p147 = scmp.ne.s32.totalorder %s130, %s146
    %p148 = scmp.eq.s32.totalorder %s24, 0
    %p149 = por %p147, %p148
    %s150 = ssub.s32 %s25, %s37
    %p151 = scmp.eq.s32.totalorder %s150, 0
    %s153 = sadd.s32 %s152, 1
    %s154 = scalar_select %p151, %s152, %s153
    %p157 = pneg %p151
    %p158 = scmp.eq.s32.totalorder %s18, 1
    %p159 = por %p157, %p158
    %p160 = scmp.ne.s32.totalorder %s152, %s155
    %p161 = scmp.eq.s32.totalorder %s18, 0
    %p162 = por %p160, %p161
    %p163 = scmp.ne.s32.totalorder %s152, %s155
    %p164 = scmp.eq.s32.totalorder %s23, 1
    %p165 = por %p163, %p164
    %p166 = scmp.ne.s32.totalorder %s155, %s156
    %p167 = scmp.eq.s32.totalorder %s23, 0
    %p168 = por %p166, %p167
    %p169 = scmp.ne.s32.totalorder %s155, %s156
    %p170 = scmp.eq.s32.totalorder %s24, 1
    %p171 = por %p169, %p170
    %p173 = scmp.ne.s32.totalorder %s156, %s172
    %p174 = scmp.eq.s32.totalorder %s24, 0
    %p175 = por %p173, %p174
    %s176 = ssub.s32 %s25, %s37
    %p177 = scmp.eq.s32.totalorder %s176, 0
    %s179 = sadd.s32 %s178, 1
    %s180 = scalar_select %p177, %s178, %s179
    %p183 = pneg %p177
    %p184 = scmp.eq.s32.totalorder %s18, 1
    %p185 = por %p183, %p184
    %p186 = scmp.ne.s32.totalorder %s178, %s181
    %p187 = scmp.eq.s32.totalorder %s18, 0
    %p188 = por %p186, %p187
    %p189 = scmp.ne.s32.totalorder %s178, %s181
    %p190 = scmp.eq.s32.totalorder %s23, 1
    %p191 = por %p189, %p190
    %p192 = scmp.ne.s32.totalorder %s181, %s182
    %p193 = scmp.eq.s32.totalorder %s23, 0
    %p194 = por %p192, %p193
    %p195 = scmp.ne.s32.totalorder %s181, %s182
    %p196 = scmp.eq.s32.totalorder %s24, 1
    %p197 = por %p195, %p196
    %p199 = scmp.ne.s32.totalorder %s182, %s198
    %p200 = scmp.eq.s32.totalorder %s24, 0
    %p201 = por %p199, %p200
    %s203 = sadd.s32 %s202, 1
    %p206 = scmp.eq.s32.totalorder %s18, 1
    %p207 = scmp.ne.s32.totalorder %s202, %s204
    %p208 = scmp.eq.s32.totalorder %s18, 0
    %p209 = por %p207, %p208
    %p210 = scmp.ne.s32.totalorder %s202, %s204
    %p211 = scmp.eq.s32.totalorder %s23, 1
    %p212 = por %p210, %p211
    %p213 = scmp.ne.s32.totalorder %s204, %s205
    %p214 = scmp.eq.s32.totalorder %s23, 0
    %p215 = por %p213, %p214
    %p216 = scmp.ne.s32.totalorder %s204, %s205
    %p217 = scmp.eq.s32.totalorder %s24, 1
    %p218 = por %p216, %p217
    %p220 = scmp.ne.s32.totalorder %s205, %s219
    %p221 = scmp.eq.s32.totalorder %s24, 0
    %p222 = por %p220, %p221
    %s224 = sadd.s32 %s223, 1
    %p227 = scmp.eq.s32.totalorder %s18, 1
    %p228 = scmp.ne.s32.totalorder %s223, %s225
    %p229 = scmp.eq.s32.totalorder %s18, 0
    %p230 = por %p228, %p229
    %p231 = scmp.ne.s32.totalorder %s223, %s225
    %p232 = scmp.eq.s32.totalorder %s23, 1
    %p233 = por %p231, %p232
    %p234 = scmp.ne.s32.totalorder %s225, %s226
    %p235 = scmp.eq.s32.totalorder %s23, 0
    %p236 = por %p234, %p235
    %p237 = scmp.ne.s32.totalorder %s225, %s226
    %p238 = scmp.eq.s32.totalorder %s24, 1
    %p239 = por %p237, %p238
    %p241 = scmp.ne.s32.totalorder %s226, %s240
    %p242 = scmp.eq.s32.totalorder %s24, 0
    %p243 = por %p241, %p242
    %s245 = sadd.s32 %s244, 1
    %p248 = scmp.eq.s32.totalorder %s18, 1
    %p249 = scmp.ne.s32.totalorder %s244, %s246
    %p250 = scmp.eq.s32.totalorder %s18, 0
    %p251 = por %p249, %p250
    %p252 = scmp.ne.s32.totalorder %s244, %s246
    %p253 = scmp.eq.s32.totalorder %s23, 1
    %p254 = por %p252, %p253
    %p255 = scmp.ne.s32.totalorder %s246, %s247
    %p256 = scmp.eq.s32.totalorder %s23, 0
    %p257 = por %p255, %p256
    %p258 = scmp.ne.s32.totalorder %s246, %s247
    %p259 = scmp.eq.s32.totalorder %s24, 1
    %p260 = por %p258, %p259
    %p262 = scmp.ne.s32.totalorder %s247, %s261
    %p263 = scmp.eq.s32.totalorder %s24, 0
    %p264 = por %p262, %p263
    %s266 = sadd.s32 %s265, 1
    %p269 = scmp.eq.s32.totalorder %s18, 1
    %p270 = scmp.ne.s32.totalorder %s265, %s267
    %p271 = scmp.eq.s32.totalorder %s18, 0
    %p272 = por %p270, %p271
    %p273 = scmp.ne.s32.totalorder %s265, %s267
    %p274 = scmp.eq.s32.totalorder %s23, 1
    %p275 = por %p273, %p274
    %p276 = scmp.ne.s32.totalorder %s267, %s268
    %p277 = scmp.eq.s32.totalorder %s23, 0
    %p278 = por %p276, %p277
    %p279 = scmp.ne.s32.totalorder %s267, %s268
    %p280 = scmp.eq.s32.totalorder %s24, 1
    %p281 = por %p279, %p280
    %p283 = scmp.ne.s32.totalorder %s268, %s282
    %p284 = scmp.eq.s32.totalorder %s24, 0
    %p285 = por %p283, %p284
    %s287 = sadd.s32 %s286, 1
    %p290 = scmp.eq.s32.totalorder %s18, 1
    %p291 = scmp.ne.s32.totalorder %s286, %s288
    %p292 = scmp.eq.s32.totalorder %s18, 0
    %p293 = por %p291, %p292
    %p294 = scmp.ne.s32.totalorder %s286, %s288
    %p295 = scmp.eq.s32.totalorder %s23, 1
    %p296 = por %p294, %p295
    %p297 = scmp.ne.s32.totalorder %s288, %s289
    %p298 = scmp.eq.s32.totalorder %s23, 0
    %p299 = por %p297, %p298
    %p300 = scmp.ne.s32.totalorder %s288, %s289
    %p301 = scmp.eq.s32.totalorder %s24, 1
    %p302 = por %p300, %p301
    %p304 = scmp.ne.s32.totalorder %s289, %s303
    %p305 = scmp.eq.s32.totalorder %s24, 0
    %p306 = por %p304, %p305
    %s308 = sadd.s32 %s307, 1
    %p311 = scmp.eq.s32.totalorder %s18, 1
    %p312 = scmp.ne.s32.totalorder %s307, %s309
    %p313 = scmp.eq.s32.totalorder %s18, 0
    %p314 = por %p312, %p313
    %p315 = scmp.ne.s32.totalorder %s307, %s309
    %p316 = scmp.eq.s32.totalorder %s23, 1
    %p317 = por %p315, %p316
    %p318 = scmp.ne.s32.totalorder %s309, %s310
    %p319 = scmp.eq.s32.totalorder %s23, 0
    %p320 = por %p318, %p319
    %p321 = scmp.ne.s32.totalorder %s309, %s310
    %p322 = scmp.eq.s32.totalorder %s24, 1
    %p323 = por %p321, %p322
    %p325 = scmp.ne.s32.totalorder %s310, %s324
    %p326 = scmp.eq.s32.totalorder %s24, 0
    %p327 = por %p325, %p326
    %s328 = ssub.s32 %s25, %s37
    %s329 = ssub.s32 %s26, %s33
    %s330 = sor.u32 %s328, %s329
    %p331 = scmp.eq.s32.totalorder %s330, 0
    %s333 = sadd.s32 %s332, 1
    %s334 = scalar_select %p331, %s332, %s333
    %p337 = pneg %p331
    %p338 = scmp.eq.s32.totalorder %s18, 1
    %p339 = por %p337, %p338
    %p340 = scmp.ne.s32.totalorder %s332, %s335
    %p341 = scmp.eq.s32.totalorder %s18, 0
    %p342 = por %p340, %p341
    %p343 = scmp.ne.s32.totalorder %s332, %s335
    %p344 = scmp.eq.s32.totalorder %s23, 1
    %p345 = por %p343, %p344
    %p346 = scmp.ne.s32.totalorder %s335, %s336
    %p347 = scmp.eq.s32.totalorder %s23, 0
    %p348 = por %p346, %p347
    %p349 = scmp.ne.s32.totalorder %s335, %s336
    %p350 = scmp.eq.s32.totalorder %s24, 1
    %p351 = por %p349, %p350
    %p353 = scmp.ne.s32.totalorder %s336, %s352
    %p354 = scmp.eq.s32.totalorder %s24, 0
    %p355 = por %p353, %p354
    %p356 = scmp.le.s32.totalorder 1, %s18
    %p357 = scmp.lt.s32.totalorder %s18, 3
    %p358 = pnand %p356, %p357
    %p359 = pneg %p358
    // Predicated region
    $region9: #{sslstm_forward.6} parent=5 // pred_check
      _
    $region10: #{sslstm_forward.6} parent=5 // pred_check_branch
      %361 = sbr.rel (%p358) target = $region12
    $region11: #{sslstm_forward.6} parent=5 // pred_region
      %s362 = ssub.s32 %s18, 1
      // Predicated region
      $region13: #{sslstm_forward.6} parent=11 // pred_check
        %p363 = pneg %p215
      $region14: #{sslstm_forward.6} parent=11 // pred_check_branch
        %365 = sbr.rel (%p363) target = $region16
      $region15: #{sslstm_forward.6} parent=11 // pred_region
        _
      $region16: #{sslstm_forward.6} parent=11 // pred_fallthru
        _
      // Predicated region
      $region17: #{sslstm_forward.6} parent=11 // pred_check
        %p366 = pneg %p236
      $region18: #{sslstm_forward.6} parent=11 // pred_check_branch
        %368 = sbr.rel (%p366) target = $region20
      $region19: #{sslstm_forward.6} parent=11 // pred_region
        _
      $region20: #{sslstm_forward.6} parent=11 // pred_fallthru
        _
      // Predicated region
      $region21: #{sslstm_forward.6} parent=11 // pred_check
        %p369 = pneg %p257
      $region22: #{sslstm_forward.6} parent=11 // pred_check_branch
        %371 = sbr.rel (%p369) target = $region24
      $region23: #{sslstm_forward.6} parent=11 // pred_region
        _
      $region24: #{sslstm_forward.6} parent=11 // pred_fallthru
        _
      // Predicated region
      $region25: #{sslstm_forward.6} parent=11 // pred_check
        %p372 = pneg %p278
      $region26: #{sslstm_forward.6} parent=11 // pred_check_branch
        %374 = sbr.rel (%p372) target = $region28
      $region27: #{sslstm_forward.6} parent=11 // pred_region
        _
      $region28: #{sslstm_forward.6} parent=11 // pred_fallthru
        _
      // Predicated region
      $region29: #{sslstm_forward.6} parent=11 // pred_check
        %p375 = pneg %p299
      $region30: #{sslstm_forward.6} parent=11 // pred_check_branch
        %377 = sbr.rel (%p375) target = $region32
      $region31: #{sslstm_forward.6} parent=11 // pred_region
        _
      $region32: #{sslstm_forward.6} parent=11 // pred_fallthru
        _
      // Predicated region
      $region33: #{sslstm_forward.6} parent=11 // pred_check
        %p378 = pneg %p320
      $region34: #{sslstm_forward.6} parent=11 // pred_check_branch
        %380 = sbr.rel (%p378) target = $region36
      $region35: #{sslstm_forward.6} parent=11 // pred_region
        _
      $region36: #{sslstm_forward.6} parent=11 // pred_fallthru
        _
    $region12: #{sslstm_forward.6} parent=5 // pred_fallthru
      _
    %p381 = scmp.lt.s32.totalorder %s18, 2
    // Predicated region
    $region37: #{sslstm_forward.6} parent=5 // pred_check
      %p382 = pneg %p381
    $region38: #{sslstm_forward.6} parent=5 // pred_check_branch
      %384 = sbr.rel (%p382) target = $region40
    $region39: #{sslstm_forward.6} parent=5 // pred_region
      // Predicated region
      $region41: #{sslstm_forward.6} parent=39 // pred_check
        %p385 = pneg %p52
      $region42: #{sslstm_forward.6} parent=39 // pred_check_branch
        %387 = sbr.rel (%p385) target = $region44
      $region43: #{sslstm_forward.6} parent=39 // pred_region
        %p388 = scmp.lt.s32.totalorder %s25, 1
        %s389 = scalar_select %p388, %s25, 1
        %p390 = scmp.lt.s32.totalorder %s26, 0
        %s391 = scalar_select %p390, %s26, 0
        %s392 = sadd.s32 %s391, %s389
        %s393 = smul.addr %s392, 4
        %s394 = scalar_lea.vmem %s0, %s393
      $region44: #{sslstm_forward.6} parent=39 // pred_fallthru
        _
      // Predicated region
      $region45: #{sslstm_forward.6} parent=39 // pred_check
        %p395 = pneg %p80
      $region46: #{sslstm_forward.6} parent=39 // pred_check_branch
        %397 = sbr.rel (%p395) target = $region48
      $region47: #{sslstm_forward.6} parent=39 // pred_region
        %p398 = scmp.lt.s32.totalorder %s25, 1
        %s399 = scalar_select %p398, %s25, 1
        %p400 = scmp.lt.s32.totalorder %s26, 0
        %s401 = scalar_select %p400, %s26, 0
        %s402 = sadd.s32 %s401, %s399
        %s403 = smul.addr %s402, 4
        %s404 = scalar_lea.vmem %s1, %s403
      $region48: #{sslstm_forward.6} parent=39 // pred_fallthru
        _
      // Predicated region
      $region49: #{sslstm_forward.6} parent=39 // pred_check
        %p405 = pneg %p108
      $region50: #{sslstm_forward.6} parent=39 // pred_check_branch
        %407 = sbr.rel (%p405) target = $region52
      $region51: #{sslstm_forward.6} parent=39 // pred_region
        %p408 = scmp.lt.s32.totalorder %s25, 1
        %s409 = scalar_select %p408, %s25, 1
        %p410 = scmp.lt.s32.totalorder %s26, 0
        %s411 = scalar_select %p410, %s26, 0
        %s412 = sadd.s32 %s411, %s409
        %s413 = smul.addr %s412, 4
        %s414 = scalar_lea.vmem %s2, %s413
      $region52: #{sslstm_forward.6} parent=39 // pred_fallthru
        _
      // Predicated region
      $region53: #{sslstm_forward.6} parent=39 // pred_check
        %p415 = pneg %p136
      $region54: #{sslstm_forward.6} parent=39 // pred_check_branch
        %417 = sbr.rel (%p415) target = $region56
      $region55: #{sslstm_forward.6} parent=39 // pred_region
        %p418 = scmp.lt.s32.totalorder %s25, 1
        %s419 = scalar_select %p418, %s25, 1
        %p420 = scmp.lt.s32.totalorder %s26, 0
        %s421 = scalar_select %p420, %s26, 0
        %s422 = sadd.s32 %s421, %s419
        %s423 = smul.addr %s422, 4
        %s424 = scalar_lea.vmem %s3, %s423
      $region56: #{sslstm_forward.6} parent=39 // pred_fallthru
        _
      // Predicated region
      $region57: #{sslstm_forward.6} parent=39 // pred_check
        %p425 = pneg %p162
      $region58: #{sslstm_forward.6} parent=39 // pred_check_branch
        %427 = sbr.rel (%p425) target = $region60
      $region59: #{sslstm_forward.6} parent=39 // pred_region
        %p428 = scmp.lt.s32.totalorder %s25, 1
        %s429 = scalar_select %p428, %s25, 1
        %s430 = scalar_lea.vmem %s4, %s429
      $region60: #{sslstm_forward.6} parent=39 // pred_fallthru
        _
      // Predicated region
      $region61: #{sslstm_forward.6} parent=39 // pred_check
        %p431 = pneg %p188
      $region62: #{sslstm_forward.6} parent=39 // pred_check_branch
        %433 = sbr.rel (%p431) target = $region64
      $region63: #{sslstm_forward.6} parent=39 // pred_region
        %p434 = scmp.lt.s32.totalorder %s25, 1
        %s435 = scalar_select %p434, %s25, 1
        %s436 = scalar_lea.vmem %s5, %s435
      $region64: #{sslstm_forward.6} parent=39 // pred_fallthru
        _
    $region40: #{sslstm_forward.6} parent=5 // pred_fallthru
      _
    %p437 = scmp.le.s32.totalorder 1, %s18
    %p438 = scmp.lt.s32.totalorder %s18, 3
    %p439 = pnand %p437, %p438
    %p440 = pneg %p439
    // Predicated region
    $region65: #{sslstm_forward.6} parent=5 // pred_check
      _
    $region66: #{sslstm_forward.6} parent=5 // pred_check_branch
      %442 = sbr.rel (%p439) target = $region68
    $region67: #{sslstm_forward.6} parent=5 // pred_region
      %s443 = ssub.s32 %s18, 1
      %p444 = scmp.lt.s32.totalorder %s27, 1
      %s445 = scalar_select %p444, %s27, 1
      %p446 = scmp.lt.s32.totalorder %s28, 0
      %s447 = scalar_select %p446, %s28, 0
      %s448 = sadd.s32 %s447, %s445
      %s449 = smul.addr %s448, 4
      %s450 = scalar_lea.vmem %s0, %s449
      %p451 = pneg %p58
      %p452 = pneg %p55
      %p453 = scmp.lt.s32.totalorder %s27, 1
      %s454 = scalar_select %p453, %s27, 1
      %p455 = scmp.lt.s32.totalorder %s28, 0
      %s456 = scalar_select %p455, %s28, 0
      %s457 = sadd.s32 %s456, %s454
      %s458 = smul.addr %s457, 4
      %s459 = scalar_lea.vmem %s1, %s458
      %p460 = pneg %p86
      %p461 = pneg %p83
      %p462 = scmp.lt.s32.totalorder %s27, 1
      %s463 = scalar_select %p462, %s27, 1
      %p464 = scmp.lt.s32.totalorder %s28, 0
      %s465 = scalar_select %p464, %s28, 0
      %s466 = sadd.s32 %s465, %s463
      %s467 = smul.addr %s466, 4
      %s468 = scalar_lea.vmem %s2, %s467
      %p469 = pneg %p114
      %p470 = pneg %p111
      %p471 = scmp.lt.s32.totalorder %s27, 1
      %s472 = scalar_select %p471, %s27, 1
      %p473 = scmp.lt.s32.totalorder %s28, 0
      %s474 = scalar_select %p473, %s28, 0
      %s475 = sadd.s32 %s474, %s472
      %s476 = smul.addr %s475, 4
      %s477 = scalar_lea.vmem %s3, %s476
      %p478 = pneg %p142
      %p479 = pneg %p139
      %p480 = scmp.lt.s32.totalorder %s27, 1
      %s481 = scalar_select %p480, %s27, 1
      %s482 = scalar_lea.vmem %s4, %s481
      %p483 = pneg %p168
      %p484 = pneg %p165
      %p485 = scmp.lt.s32.totalorder %s27, 1
      %s486 = scalar_select %p485, %s27, 1
      %s487 = scalar_lea.vmem %s5, %s486
      %p488 = pneg %p194
      %p489 = pneg %p191
      %p490 = pneg %p215
      %p491 = pneg %p212
      %p492 = pneg %p236
      %p493 = pneg %p233
      %p494 = pneg %p257
      %p495 = pneg %p254
      %p496 = pneg %p278
      %p497 = pneg %p275
      %p498 = pneg %p299
      %p499 = pneg %p296
      %p500 = pneg %p320
      %p501 = pneg %p317
      %p502 = pneg %p348
      %p503 = pneg %p345
      %p504 = scmp.lt.s32.totalorder %s27, 1
      %s505 = scalar_select %p504, %s27, 1
      %p506 = scmp.lt.s32.totalorder %s28, 0
      %s507 = scalar_select %p506, %s28, 0
      %s508 = sadd.s32 %s507, %s505
      %s509 = smul.addr %s508, 4
      %s510 = scalar_lea.vmem %s12, %s509
      %p511 = scmp.lt.s32.totalorder %s27, 1
      %s512 = scalar_select %p511, %s27, 1
      %p513 = scmp.lt.s32.totalorder %s28, 0
      %s514 = scalar_select %p513, %s28, 0
      %s515 = sadd.s32 %s514, %s512
      %s516 = smul.addr %s515, 4
      %s517 = scalar_lea.vmem %s0, %s516
      %p518 = scmp.lt.s32.totalorder %s27, 1
      %s519 = scalar_select %p518, %s27, 1
      %p520 = scmp.lt.s32.totalorder %s28, 0
      %s521 = scalar_select %p520, %s28, 0
      %s522 = sadd.s32 %s521, %s519
      %s523 = smul.addr %s522, 4
      %s524 = scalar_lea.vmem %s1, %s523
      %p525 = scmp.lt.s32.totalorder %s27, 1
      %s526 = scalar_select %p525, %s27, 1
      %p527 = scmp.lt.s32.totalorder %s28, 0
      %s528 = scalar_select %p527, %s28, 0
      %s529 = sadd.s32 %s528, %s526
      %s530 = smul.addr %s529, 4
      %s531 = scalar_lea.vmem %s2, %s530
      %p532 = scmp.lt.s32.totalorder %s27, 1
      %s533 = scalar_select %p532, %s27, 1
      %p534 = scmp.lt.s32.totalorder %s28, 0
      %s535 = scalar_select %p534, %s28, 0
      %s536 = sadd.s32 %s535, %s533
      %s537 = smul.addr %s536, 4
      %s538 = scalar_lea.vmem %s3, %s537
      %p539 = scmp.lt.s32.totalorder %s27, 1
      %s540 = scalar_select %p539, %s27, 1
      %s541 = scalar_lea.vmem %s4, %s540
      %p542 = scmp.lt.s32.totalorder %s27, 1
      %s543 = scalar_select %p542, %s27, 1
      %s544 = scalar_lea.vmem %s5, %s543
      %p545 = scmp.lt.s32.totalorder %s27, 1
      %s546 = scalar_select %p545, %s27, 1
      %p547 = scmp.lt.s32.totalorder %s28, 0
      %s548 = scalar_select %p547, %s28, 0
      %s549 = sadd.s32 %s548, %s546
      %s550 = smul.addr %s549, 4
      %s551 = scalar_lea.vmem %s12, %s550
      %v553 = vld [vmem:[%s517] sm:$0xf]
      %v554 = vld [vmem:[%s524] sm:$0xf]
      %v555 = vld [vmem:[%s531] sm:$0xf]
      %v556 = vld [vmem:[%s538] sm:$0xf]
      %v557 = vld [vmem:[%s6] sm:$0xff]
      %v558 = vld [vmem:[%s6 + $0x8] sm:$0xff]
      %v559 = vld [vmem:[%s6 + $0x10] sm:$0xff]
      %v560 = vld [vmem:[%s6 + $0x18] sm:$0xff]
      %v561 = vld [vmem:[%s7] sm:$0xff]
      %v562 = vld [vmem:[%s7 + $0x8] sm:$0xff]
      %v563 = vld [vmem:[%s7 + $0x10] sm:$0xff]
      %v564 = vld [vmem:[%s7 + $0x18] sm:$0xff]
      %v566 = vunpack.c.l.b16 %v554
      %v567 = vpack.c.b16 %v566, %v566
      %568 = vrot.lane.b32.xlu0 %v567, 96
      %v569 = vpop.permute.xlu0 %568
      %v574 = vunpack.c.l.b16 %v561
      %v575 = vunpack.c.h.b16 %v561
      %v576 = vunpack.c.l.b16 %v562
      %v577 = vunpack.c.h.b16 %v562
      %v578 = vunpack.c.l.b16 %v563
      %v579 = vunpack.c.h.b16 %v563
      %v580 = vunpack.c.l.b16 %v564
      %v581 = vunpack.c.h.b16 %v564
      %v582 = vpack.c.b16 %v576, %v574
      %v583 = vpack.c.b16 %v577, %v575
      %v584 = vpack.c.b16 %v580, %v578
      %v585 = vpack.c.b16 %v581, %v579
      %vm590 = vcmask 261120
      %v592 = vsel %vm590, %v569, 0
      %594 = vmatpush.bf16.msra.mxu0 0
      %595 = vmatpush.bf16.msra.mxu0 0
      %596 = vmatpush.bf16.msra.mxu0 0
      %597 = vmatpush.bf16.msra.mxu0 0
      %598 = vmatpush.bf16.msra.mxu0 0
      %599 = vmatpush.bf16.msra.mxu0 0
      %600 = vmatpush.bf16.msra.mxu0 %v584
      %601 = vmatpush.bf16.msra.mxu0 %v582
      %602 = vmatmul.bf16.gmra.mxu0 %v592
      %v603 = vpop.f32.mrf.mxu0
      %v604 = vadd.f32 0.0, %v603
      %v605 = vpop.f32.mrf.mxu0
      %606 = vdwg.mxu0
      %607 = vmatpush.bf16.msra.mxu0 0
      %608 = vmatpush.bf16.msra.mxu0 0
      %609 = vmatpush.bf16.msra.mxu0 0
      %610 = vmatpush.bf16.msra.mxu0 0
      %611 = vmatpush.bf16.msra.mxu0 0
      %612 = vmatpush.bf16.msra.mxu0 0
      %613 = vmatpush.bf16.msra.mxu0 %v585
      %614 = vmatpush.bf16.msra.mxu0 %v583
      %615 = vmatmul.bf16.gmra.mxu0 %v592
      %v616 = vpop.f32.mrf.mxu0
      %v617 = vadd.f32 0.0, %v616
      %v618 = vpop.f32.mrf.mxu0
      %619 = vdwg.mxu0
      %v621 = vunpack.c.l.b16 %v553
      %v622 = vpack.c.b16 %v621, %v621
      %623 = vrot.lane.b32.xlu0 %v622, 96
      %v624 = vpop.permute.xlu0 %623
      %v629 = vunpack.c.l.b16 %v557
      %v630 = vunpack.c.h.b16 %v557
      %v631 = vunpack.c.l.b16 %v558
      %v632 = vunpack.c.h.b16 %v558
      %v633 = vunpack.c.l.b16 %v559
      %v634 = vunpack.c.h.b16 %v559
      %v635 = vunpack.c.l.b16 %v560
      %v636 = vunpack.c.h.b16 %v560
      %v637 = vpack.c.b16 %v631, %v629
      %v638 = vpack.c.b16 %v632, %v630
      %v639 = vpack.c.b16 %v635, %v633
      %v640 = vpack.c.b16 %v636, %v634
      %v646 = vsel %vm590, %v624, 0
      %648 = vmatpush.bf16.msra.mxu0 0
      %649 = vmatpush.bf16.msra.mxu0 0
      %650 = vmatpush.bf16.msra.mxu0 0
      %651 = vmatpush.bf16.msra.mxu0 0
      %652 = vmatpush.bf16.msra.mxu0 0
      %653 = vmatpush.bf16.msra.mxu0 0
      %654 = vmatpush.bf16.msra.mxu0 %v639
      %655 = vmatpush.bf16.msra.mxu0 %v637
      %656 = vmatmul.bf16.gmra.mxu0 %v646
      %v657 = vpop.f32.mrf.mxu0
      %v658 = vadd.f32 %v604, %v657
      %v659 = vpop.f32.mrf.mxu0
      %660 = vdwg.mxu0
      %661 = vmatpush.bf16.msra.mxu0 0
      %662 = vmatpush.bf16.msra.mxu0 0
      %663 = vmatpush.bf16.msra.mxu0 0
      %664 = vmatpush.bf16.msra.mxu0 0
      %665 = vmatpush.bf16.msra.mxu0 0
      %666 = vmatpush.bf16.msra.mxu0 0
      %667 = vmatpush.bf16.msra.mxu0 %v640
      %668 = vmatpush.bf16.msra.mxu0 %v638
      %669 = vmatmul.bf16.gmra.mxu0 %v646
      %v670 = vpop.f32.mrf.mxu0
      %v671 = vadd.f32 %v617, %v670
      %v672 = vpop.f32.mrf.mxu0
      %673 = vdwg.mxu0
      %v674 = vld [vmem:[%s8] sm:$0xff]
      %v675 = vld [vmem:[%s8 + $0x8] sm:$0xff]
      %v676 = vld [vmem:[%s8 + $0x10] sm:$0xff]
      %v677 = vld [vmem:[%s8 + $0x18] sm:$0xff]
      %v679 = vunpack.c.l.b16 %v555
      %v680 = vpack.c.b16 %v679, %v679
      %681 = vrot.lane.b32.xlu0 %v680, 96
      %v682 = vpop.permute.xlu0 %681
      %v687 = vunpack.c.l.b16 %v674
      %v688 = vunpack.c.h.b16 %v674
      %v689 = vunpack.c.l.b16 %v675
      %v690 = vunpack.c.h.b16 %v675
      %v691 = vunpack.c.l.b16 %v676
      %v692 = vunpack.c.h.b16 %v676
      %v693 = vunpack.c.l.b16 %v677
      %v694 = vunpack.c.h.b16 %v677
      %v695 = vpack.c.b16 %v689, %v687
      %v696 = vpack.c.b16 %v690, %v688
      %v697 = vpack.c.b16 %v693, %v691
      %v698 = vpack.c.b16 %v694, %v692
      %v704 = vsel %vm590, %v682, 0
      %706 = vmatpush.bf16.msra.mxu0 0
      %707 = vmatpush.bf16.msra.mxu0 0
      %708 = vmatpush.bf16.msra.mxu0 0
      %709 = vmatpush.bf16.msra.mxu0 0
      %710 = vmatpush.bf16.msra.mxu0 0
      %711 = vmatpush.bf16.msra.mxu0 0
      %712 = vmatpush.bf16.msra.mxu0 %v697
      %713 = vmatpush.bf16.msra.mxu0 %v695
      %714 = vmatmul.bf16.gmra.mxu0 %v704
      %v715 = vpop.f32.mrf.mxu0
      %v716 = vadd.f32 0.0, %v715
      %v717 = vpop.f32.mrf.mxu0
      %718 = vdwg.mxu0
      %719 = vmatpush.bf16.msra.mxu0 0
      %720 = vmatpush.bf16.msra.mxu0 0
      %721 = vmatpush.bf16.msra.mxu0 0
      %722 = vmatpush.bf16.msra.mxu0 0
      %723 = vmatpush.bf16.msra.mxu0 0
      %724 = vmatpush.bf16.msra.mxu0 0
      %725 = vmatpush.bf16.msra.mxu0 %v698
      %726 = vmatpush.bf16.msra.mxu0 %v696
      %727 = vmatmul.bf16.gmra.mxu0 %v704
      %v728 = vpop.f32.mrf.mxu0
      %v729 = vadd.f32 0.0, %v728
      %v730 = vpop.f32.mrf.mxu0
      %731 = vdwg.mxu0
      %v732 = vadd.f32 %v658, %v716
      %v733 = vadd.f32 %v671, %v729
      %v734 = vld [vmem:[%s9] sm:$0xff]
      %v735 = vld [vmem:[%s9 + $0x8] sm:$0xff]
      %v736 = vld [vmem:[%s9 + $0x10] sm:$0xff]
      %v737 = vld [vmem:[%s9 + $0x18] sm:$0xff]
      %v742 = vunpack.c.l.b16 %v734
      %v743 = vunpack.c.h.b16 %v734
      %v744 = vunpack.c.l.b16 %v735
      %v745 = vunpack.c.h.b16 %v735
      %v746 = vunpack.c.l.b16 %v736
      %v747 = vunpack.c.h.b16 %v736
      %v748 = vunpack.c.l.b16 %v737
      %v749 = vunpack.c.h.b16 %v737
      %v750 = vpack.c.b16 %v744, %v742
      %v751 = vpack.c.b16 %v745, %v743
      %v752 = vpack.c.b16 %v748, %v746
      %v753 = vpack.c.b16 %v749, %v747
      %v759 = vsel %vm590, %v556, 0
      %761 = vmatpush.bf16.msra.mxu0 0
      %762 = vmatpush.bf16.msra.mxu0 0
      %763 = vmatpush.bf16.msra.mxu0 0
      %764 = vmatpush.bf16.msra.mxu0 0
      %765 = vmatpush.bf16.msra.mxu0 0
      %766 = vmatpush.bf16.msra.mxu0 0
      %767 = vmatpush.bf16.msra.mxu0 %v752
      %768 = vmatpush.bf16.msra.mxu0 %v750
      %769 = vmatmul.bf16.gmra.mxu0 %v759
      %v770 = vpop.f32.mrf.mxu0
      %v771 = vadd.f32 0.0, %v770
      %v772 = vpop.f32.mrf.mxu0
      %773 = vdwg.mxu0
      %774 = vmatpush.bf16.msra.mxu0 0
      %775 = vmatpush.bf16.msra.mxu0 0
      %776 = vmatpush.bf16.msra.mxu0 0
      %777 = vmatpush.bf16.msra.mxu0 0
      %778 = vmatpush.bf16.msra.mxu0 0
      %779 = vmatpush.bf16.msra.mxu0 0
      %780 = vmatpush.bf16.msra.mxu0 %v753
      %781 = vmatpush.bf16.msra.mxu0 %v751
      %782 = vmatmul.bf16.gmra.mxu0 %v759
      %v783 = vpop.f32.mrf.mxu0
      %v784 = vadd.f32 0.0, %v783
      %v785 = vpop.f32.mrf.mxu0
      %786 = vdwg.mxu0
      %v787 = vadd.f32 %v732, %v771
      %v788 = vadd.f32 %v733, %v784
      %v789 = vld [vmem:[%s541] sm:$0x1]
      %v790 = vld [vmem:[%s10] sm:$0xff]
      %v791 = vld [vmem:[%s10 + $0x8] sm:$0xff]
      %v792 = vld [vmem:[%s10 + $0x10] sm:$0xff]
      %v793 = vld [vmem:[%s10 + $0x18] sm:$0xff]
      %v798 = vunpack.c.l.b16 %v790
      %v799 = vunpack.c.h.b16 %v790
      %v800 = vunpack.c.l.b16 %v791
      %v801 = vunpack.c.h.b16 %v791
      %v802 = vunpack.c.l.b16 %v792
      %v803 = vunpack.c.h.b16 %v792
      %v804 = vunpack.c.l.b16 %v793
      %v805 = vunpack.c.h.b16 %v793
      %v806 = vpack.c.b16 %v800, %v798
      %v807 = vpack.c.b16 %v801, %v799
      %v808 = vpack.c.b16 %v804, %v802
      %v809 = vpack.c.b16 %v805, %v803
      %v815 = vsel %vm590, %v789, 0
      %817 = vmatpush.bf16.msra.mxu0 0
      %818 = vmatpush.bf16.msra.mxu0 0
      %819 = vmatpush.bf16.msra.mxu0 0
      %820 = vmatpush.bf16.msra.mxu0 0
      %821 = vmatpush.bf16.msra.mxu0 0
      %822 = vmatpush.bf16.msra.mxu0 0
      %823 = vmatpush.bf16.msra.mxu0 %v808
      %824 = vmatpush.bf16.msra.mxu0 %v806
      %825 = vmatmul.bf16.gmra.mxu0 %v815
      %v826 = vpop.f32.mrf.mxu0
      %v827 = vadd.f32 0.0, %v826
      %v828 = vpop.f32.mrf.mxu0
      %829 = vdwg.mxu0
      %830 = vmatpush.bf16.msra.mxu0 0
      %831 = vmatpush.bf16.msra.mxu0 0
      %832 = vmatpush.bf16.msra.mxu0 0
      %833 = vmatpush.bf16.msra.mxu0 0
      %834 = vmatpush.bf16.msra.mxu0 0
      %835 = vmatpush.bf16.msra.mxu0 0
      %836 = vmatpush.bf16.msra.mxu0 %v809
      %837 = vmatpush.bf16.msra.mxu0 %v807
      %838 = vmatmul.bf16.gmra.mxu0 %v815
      %v839 = vpop.f32.mrf.mxu0
      %v840 = vadd.f32 0.0, %v839
      %v841 = vpop.f32.mrf.mxu0
      %842 = vdwg.mxu0
      %v843 = vperm.slane %v827, 0
      %v844 = vperm.slane %v840, 0
      %v845 = vadd.f32 %v787, %v843
      %v846 = vadd.f32 %v788, %v844
      %v847 = vld [vmem:[%s11] sm:$0x3]
      %v849 = vperm.slane %v847, 0
      %v850 = vperm.slane %v847, 1
      %v853 = vadd.f32 %v845, %v849
      %v854 = vadd.f32 %v846, %v850
      %v855 = vxor.u32 %v853, 2147483648
      %v856 = vxor.u32 %v854, 2147483648
      %v857 = vmul.f32 %v855, 1.442695
      %v858 = vpow.pop %v857
      %v859 = vmul.f32 %v856, 1.442695
      %v860 = vpow.pop %v859
      %v861 = vadd.f32 %v858, 1.0
      %v862 = vadd.f32 %v860, 1.0
      %v863 = vrcp.pop %v861
      %v864 = vmul.f32 %v861, %v863
      %v865 = vsub.f32 1.0, %v864
      %v866 = vmul.f32 %v863, %v865
      %v867 = vadd.f32 %v863, %v866
      %vm868 = vweird.f32 %v861
      %vm869 = vweird.f32 %v863
      %vm870 = vmor %vm868, %vm869
      %v871 = vsel %vm870, %v863, %v867
      %v872 = vand.u32 2147483647, %v861
      %vm873 = vcmp.eq.f32.partialorder %v872, 8.507059e+37
      %v874 = vand.u32 %v861, 2147483648
      %v875 = vor.u32 1.1754944e-38, %v874
      %v876 = vsel %vm873, %v875, %v871
      %v877 = vmul.f32 1.0, %v876
      %v878 = vrcp.pop %v862
      %v879 = vmul.f32 %v862, %v878
      %v880 = vsub.f32 1.0, %v879
      %v881 = vmul.f32 %v878, %v880
      %v882 = vadd.f32 %v878, %v881
      %vm883 = vweird.f32 %v862
      %vm884 = vweird.f32 %v878
      %vm885 = vmor %vm883, %vm884
      %v886 = vsel %vm885, %v878, %v882
      %v887 = vand.u32 2147483647, %v862
      %vm888 = vcmp.eq.f32.partialorder %v887, 8.507059e+37
      %v889 = vand.u32 %v862, 2147483648
      %v890 = vor.u32 1.1754944e-38, %v889
      %v891 = vsel %vm888, %v890, %v886
      %v892 = vmul.f32 1.0, %v891
      %v893 = vmul.f32 %v877, 1.442695
      %v894 = vpow.pop %v893
      %v895 = vmul.f32 %v892, 1.442695
      %v896 = vpow.pop %v895
      %898 = vrot.lane.b32.xlu0 %v894, 96
      %v899 = vpop.permute.xlu0 %898
      %v901 = vadd.f32 %v894, %v899
      %902 = vrot.lane.b32.xlu0 %v894, 64
      %v903 = vpop.permute.xlu0 %902
      %v905 = vadd.f32 %v901, %v903
      %906 = vrot.lane.b32.xlu0 %v894, 32
      %v907 = vpop.permute.xlu0 %906
      %v909 = vadd.f32 %v905, %v907
      %v910 = vadd.f32 %v909, %v896
      %v911 = vrcp.pop %v910
      %v912 = vunpack.c.l.bf16 %v554
      %v913 = vmul.f32 %v894, %v912
      %v914 = vunpack.c.l.bf16 %v555
      %916 = vrot.lane.b32.xlu0 %v914, 32
      %v917 = vpop.permute.xlu0 %916
      %v919 = vmul.f32 %v894, %v917
      %921 = vrot.lane.b32.xlu0 %v919, 96
      %v922 = vpop.permute.xlu0 %921
      %v924 = vadd.f32 %v913, %v922
      %v925 = vunpack.c.l.bf16 %v556
      %927 = vrot.lane.b32.xlu0 %v925, 64
      %v928 = vpop.permute.xlu0 %927
      %v930 = vmul.f32 %v894, %v928
      %932 = vrot.lane.b32.xlu0 %v930, 64
      %v933 = vpop.permute.xlu0 %932
      %v935 = vadd.f32 %v924, %v933
      %v936 = vld [vmem:[%s544] sm:$0x1]
      %v937 = vunpack.c.l.bf16 %v936
      %v938 = vperm.slane %v937, 0
      %940 = vrot.lane.b32.xlu0 %v938, 96
      %v941 = vpop.permute.xlu0 %940
      %v943 = vmul.f32 %v894, %v941
      %945 = vrot.lane.b32.xlu0 %v943, 32
      %v946 = vpop.permute.xlu0 %945
      %v948 = vadd.f32 %v935, %v946
      %v949 = vunpack.c.l.bf16 %v553
      %v950 = vmul.f32 %v896, %v949
      %v951 = vadd.f32 %v948, %v950
      %v952 = vmul.f32 %v951, %v911
      %v953 = vtanh.pop %v952
      %955 = vrot.lane.b32.xlu0 %v953, 32
      %v956 = vpop.permute.xlu0 %955
      %v958 = vmul.f32 %v892, %v956
      %v959 = vsel %vm590, %v952, %v958
      %v960 = vpack.c.bf16 %v959, %v959
      %vm961 = vcmask 519168
      %962 = vst.msk [vmem:[%s551] sm:$0xf] %vm961, %v960
      %p963 = scmp.lt.s32.totalorder %s27, 1
      %s964 = scalar_select %p963, %s27, 1
      %p965 = scmp.lt.s32.totalorder %s28, 0
      %s966 = scalar_select %p965, %s28, 0
      %s967 = sadd.s32 %s966, %s964
      %s968 = smul.addr %s967, 4
      %s969 = scalar_lea.vmem %s12, %s968
      // Predicated region
      $region69: #{sslstm_forward.6} parent=67 // pred_check
        %p970 = pneg %p345
      $region70: #{sslstm_forward.6} parent=67 // pred_check_branch
        %972 = sbr.rel (%p970) target = $region72
      $region71: #{sslstm_forward.6} parent=67 // pred_region
        _
      $region72: #{sslstm_forward.6} parent=67 // pred_fallthru
        _
    $region68: #{sslstm_forward.6} parent=5 // pred_fallthru
      _
    %p973 = scmp.le.s32.totalorder 2, %s18
    // Predicated region
    $region73: #{sslstm_forward.6} parent=5 // pred_check
      %p974 = pneg %p973
    $region74: #{sslstm_forward.6} parent=5 // pred_check_branch
      %976 = sbr.rel (%p974) target = $region76
    $region75: #{sslstm_forward.6} parent=5 // pred_region
      %s977 = ssub.s32 %s18, 2
      // Predicated region
      $region77: #{sslstm_forward.6} parent=75 // pred_check
        %p978 = pneg %p351
      $region78: #{sslstm_forward.6} parent=75 // pred_check_branch
        %980 = sbr.rel (%p978) target = $region80
      $region79: #{sslstm_forward.6} parent=75 // pred_region
        %p981 = scmp.lt.s32.totalorder %s29, 1
        %s982 = scalar_select %p981, %s29, 1
        %p983 = scmp.lt.s32.totalorder %s30, 0
        %s984 = scalar_select %p983, %s30, 0
        %s985 = sadd.s32 %s984, %s982
        %s986 = smul.addr %s985, 4
        %s987 = scalar_lea.vmem %s12, %s986
      $region80: #{sslstm_forward.6} parent=75 // pred_fallthru
        _
    $region76: #{sslstm_forward.6} parent=5 // pred_fallthru
      _
  $region6: #{sslstm_forward.6} parent=0 // loop_footer
    %s22 = sadd.s32 1, %s18
  $region7: #{sslstm_forward.6} parent=0 // loop_footer_branch
    %17 = sbr.rel target = $region3
  $region8: #{sslstm_forward.6} parent=0 // loop_exit
    _

// kernel: sslstm_forward.9
$region0: #{sslstm_forward.9}
  #allocation0 [shape = 'u32[]', space=smem, size = 0x4, offset = 0x4, fixed_abs, tag = 'smem constant byte address 0x4 - core index']
  #allocation1 [shape = 'u32[72,128]{1,0:T(1,128)}', space=vmem, size = 0x9000, scoped, tag = 'internal scratch']
  %s0 = inlined_call_operand.vmem [shape: bf16[40,32], index: 0, kind: input, shape index: {}]
  %s1 = inlined_call_operand.vmem [shape: bf16[32,64], index: 1, kind: input, shape index: {}]
  %s2 = inlined_call_operand.vmem [shape: f32[1,64], index: 2, kind: input, shape index: {}]
  %s3 = inlined_call_operand.vmem [shape: bf16[64,32], index: 3, kind: input, shape index: {}]
  %s4 = inlined_call_operand.vmem [shape: f32[1,32], index: 4, kind: input, shape index: {}]
  %s5 = inlined_call_operand.vmem [shape: f32[40,32], index: 5, kind: output, shape index: {}]
  %s6 = sld [smem:[#allocation0]]
  $region30: #{sslstm_forward.9} parent=0
    _
  %s8 = ssub.s32 1, %s6
  %s9 = scalar_select 0, %s8, %s6
  // Predicated region
  $region2: #{sslstm_forward.9} parent=0 // pred_check
    _
  $region3: #{sslstm_forward.9} parent=0 // pred_check_branch
    %11 = sbr.rel (0) target = $region5
  $region4: #{sslstm_forward.9} parent=0 // pred_region
    _
  $region5: #{sslstm_forward.9} parent=0 // pred_fallthru
    _
  // Predicated region
  $region6: #{sslstm_forward.9} parent=0 // pred_check
    _
  $region7: #{sslstm_forward.9} parent=0 // pred_check_branch
    %13 = sbr.rel (0) target = $region9
  $region8: #{sslstm_forward.9} parent=0 // pred_region
    _
  $region9: #{sslstm_forward.9} parent=0 // pred_fallthru
    _
  // Predicated region
  $region10: #{sslstm_forward.9} parent=0 // pred_check
    _
  $region11: #{sslstm_forward.9} parent=0 // pred_check_branch
    %15 = sbr.rel (0) target = $region13
  $region12: #{sslstm_forward.9} parent=0 // pred_region
    _
  $region13: #{sslstm_forward.9} parent=0 // pred_fallthru
    _
  // Predicated region
  $region14: #{sslstm_forward.9} parent=0 // pred_check
    _
  $region15: #{sslstm_forward.9} parent=0 // pred_check_branch
    %17 = sbr.rel (0) target = $region17
  $region16: #{sslstm_forward.9} parent=0 // pred_region
    _
  $region17: #{sslstm_forward.9} parent=0 // pred_fallthru
    _
  // Predicated region
  $region18: #{sslstm_forward.9} parent=0 // pred_check
    _
  $region19: #{sslstm_forward.9} parent=0 // pred_check_branch
    %19 = sbr.rel (0) target = $region21
  $region20: #{sslstm_forward.9} parent=0 // pred_region
    _
  $region21: #{sslstm_forward.9} parent=0 // pred_fallthru
    _
  %v21 = vld [vmem:[%s0] sm:$0xf]
  %v22 = vld [vmem:[%s0 + $0x4] sm:$0xf]
  %v23 = vld [vmem:[%s0 + $0x8] sm:$0xf]
  %v24 = vld [vmem:[%s0 + $0xc] sm:$0xf]
  %v25 = vld [vmem:[%s0 + $0x10] sm:$0xf]
  %v26 = vld [vmem:[%s1] sm:$0xf]
  %v27 = vld [vmem:[%s1 + $0x4] sm:$0xf]
  %v28 = vld [vmem:[%s1 + $0x8] sm:$0xf]
  %v29 = vld [vmem:[%s1 + $0xc] sm:$0xf]
  %v30 = vld [vmem:[%s2] sm:$0x1]
  %v32 = vperm.slane %v30, 0
  %v39 = vunpack.c.l.b16 %v21
  %v40 = vunpack.c.l.b16 %v22
  %v41 = vunpack.c.l.b16 %v23
  %v42 = vunpack.c.l.b16 %v24
  %v43 = vunpack.c.l.b16 %v25
  %v44 = vpack.c.b16 %v40, %v39
  %v45 = vpack.c.b16 %v42, %v41
  %v46 = vpack.c.b16 %v43, %v43
  %v51 = vunpack.c.l.b16 %v26
  %v52 = vunpack.c.l.b16 %v27
  %v53 = vunpack.c.l.b16 %v28
  %v54 = vunpack.c.l.b16 %v29
  %v55 = vpack.c.b16 %v52, %v51
  %v56 = vpack.c.b16 %v54, %v53
  %vm59 = vcmask 261120
  %v61 = vsel %vm59, %v44, 0
  %v64 = vsel %vm59, %v45, 0
  %v67 = vsel %vm59, %v46, 0
  %69 = vmatpush.bf16.msra.mxu0 0
  %70 = vmatpush.bf16.msra.mxu0 0
  %71 = vmatpush.bf16.msra.mxu0 0
  %72 = vmatpush.bf16.msra.mxu0 0
  %73 = vmatpush.bf16.msra.mxu0 0
  %74 = vmatpush.bf16.msra.mxu0 0
  %75 = vmatpush.bf16.msra.mxu0 %v56
  %76 = vmatpush.bf16.msra.mxu0 %v55
  %77 = vmatmul.bf16.gmra.mxu0 %v61
  %v78 = vpop.f32.mrf.mxu0
  %v79 = vadd.f32 %v32, %v78
  %v80 = vpop.f32.mrf.mxu0
  %v81 = vadd.f32 %v32, %v80
  %82 = vmatmul.bf16.gmra.mxu0 %v64
  %v83 = vpop.f32.mrf.mxu0
  %v84 = vadd.f32 %v32, %v83
  %v85 = vpop.f32.mrf.mxu0
  %v86 = vadd.f32 %v32, %v85
  %87 = vmatmul.bf16.gmra.mxu0 %v67
  %v88 = vpop.f32.mrf.mxu0
  %v89 = vadd.f32 %v32, %v88
  %v90 = vpop.f32.mrf.mxu0
  %91 = vdwg.mxu0
  %v92 = vtanh.pop %v79
  %v93 = vtanh.pop %v81
  %v94 = vtanh.pop %v84
  %v95 = vtanh.pop %v86
  %v96 = vtanh.pop %v89
  %v97 = vpack.c.bf16 %v93, %v92
  %v98 = vpack.c.bf16 %v95, %v94
  %v99 = vpack.c.bf16 %v96, %v96
  %v100 = vld [vmem:[%s3] sm:$0xf]
  %v101 = vld [vmem:[%s3 + $0x4] sm:$0xf]
  %v102 = vld [vmem:[%s3 + $0x8] sm:$0xf]
  %v103 = vld [vmem:[%s3 + $0xc] sm:$0xf]
  %v104 = vld [vmem:[%s3 + $0x10] sm:$0xf]
  %v105 = vld [vmem:[%s3 + $0x14] sm:$0xf]
  %v106 = vld [vmem:[%s3 + $0x18] sm:$0xf]
  %v107 = vld [vmem:[%s3 + $0x1c] sm:$0xf]
  %v108 = vld [vmem:[%s4] sm:$0x1]
  %v110 = vperm.slane %v108, 0
  %v120 = vunpack.c.l.b16 %v100
  %v121 = vunpack.c.l.b16 %v101
  %v122 = vunpack.c.l.b16 %v102
  %v123 = vunpack.c.l.b16 %v103
  %v124 = vunpack.c.l.b16 %v104
  %v125 = vunpack.c.l.b16 %v105
  %v126 = vunpack.c.l.b16 %v106
  %v127 = vunpack.c.l.b16 %v107
  %v128 = vpack.c.b16 %v121, %v120
  %v129 = vpack.c.b16 %v123, %v122
  %v130 = vpack.c.b16 %v125, %v124
  %v131 = vpack.c.b16 %v127, %v126
  %vm136 = vcmask 523264
  %v138 = vsel %vm136, %v97, 0
  %v141 = vsel %vm136, %v98, 0
  %v144 = vsel %vm136, %v99, 0
  %146 = vmatpush.bf16.msra.mxu0 0
  %147 = vmatpush.bf16.msra.mxu0 0
  %148 = vmatpush.bf16.msra.mxu0 0
  %149 = vmatpush.bf16.msra.mxu0 0
  %150 = vmatpush.bf16.msra.mxu0 %v131
  %151 = vmatpush.bf16.msra.mxu0 %v130
  %152 = vmatpush.bf16.msra.mxu0 %v129
  %153 = vmatpush.bf16.msra.mxu0 %v128
  %154 = vmatmul.bf16.gmra.mxu0 %v138
  %v155 = vpop.f32.mrf.mxu0
  %v156 = vadd.f32 %v110, %v155
  %v157 = vpop.f32.mrf.mxu0
  %v158 = vadd.f32 %v110, %v157
  %159 = vmatmul.bf16.gmra.mxu0 %v141
  %v160 = vpop.f32.mrf.mxu0
  %v161 = vadd.f32 %v110, %v160
  %v162 = vpop.f32.mrf.mxu0
  %v163 = vadd.f32 %v110, %v162
  %164 = vmatmul.bf16.gmra.mxu0 %v144
  %v165 = vpop.f32.mrf.mxu0
  %v166 = vadd.f32 %v110, %v165
  %v167 = vpop.f32.mrf.mxu0
  %168 = vdwg.mxu0
  %169 = vst.msk [vmem:[%s5] sm:$0xff] %vm59, %v156
  %170 = vst.msk [vmem:[%s5 + $0x8] sm:$0xff] %vm59, %v158
  %171 = vst.msk [vmem:[%s5 + $0x10] sm:$0xff] %vm59, %v161
  %172 = vst.msk [vmem:[%s5 + $0x18] sm:$0xff] %vm59, %v163
  %173 = vst.msk [vmem:[%s5 + $0x20] sm:$0xff] %vm59, %v166
  // Predicated region
  $region22: #{sslstm_forward.9} parent=0 // pred_check
    _
  $region23: #{sslstm_forward.9} parent=0 // pred_check_branch
    %175 = sbr.rel (0) target = $region25
  $region24: #{sslstm_forward.9} parent=0 // pred_region
    _
  $region25: #{sslstm_forward.9} parent=0 // pred_fallthru
    _
  // Predicated region
  $region26: #{sslstm_forward.9} parent=0 // pred_check
    _
  $region27: #{sslstm_forward.9} parent=0 // pred_check_branch
    %177 = sbr.rel (0) target = $region29
  $region28: #{sslstm_forward.9} parent=0 // pred_region
    _
  $region29: #{sslstm_forward.9} parent=0 // pred_fallthru
    _

</llo_original>
